<compile_context>
chip_gen: v7x
topology: tpu7x:2x2x1
jax: 0.10.0
libtpu: 0.0.40
codegen_flags: <defaults>
</compile_context>

<pallas_src>
import functools

import jax
import jax.numpy as jnp
from jax.experimental import pallas as pl
from jax.experimental.pallas import tpu as pltpu


def tlayer_kernel(w_ref, x_ref, out_ref, *, n, k, c_out, c_in):
    """w_ref: (2*C_out, k*k) SMEM; x_ref: (bb, 3*N*N); out_ref: (bb, C_out*N*N)."""
    p = k // 2
    nn = n * n
    kk = k * k
    bb = x_ref.shape[0]
    f32 = jnp.float32

    def flat_roll(v, s):
        # y[:, m] = v[:, (m - s) mod nn]   (jnp.roll semantics, static shift)
        s = s % nn
        if s == 0:
            return v
        return jnp.concatenate([v[:, nn - s:], v[:, :nn - s]], axis=1)

    # Column index j of the flat position m = i*n + j (hoisted; lanes only).
    col = jax.lax.broadcasted_iota(jnp.int32, (bb, nn), 1) % n
    wrap = {b: (col >= n - b) if b > 0 else (col < -b)
            for b in range(-p, p + 1) if b != 0}

    # Hoist all weight scalars (SMEM reads) out of the loops.
    w0s = [[w_ref[o, t] for t in range(kk)] for o in range(c_out)]
    w1s = [[w_ref[c_out + o, t] for t in range(kk)] for o in range(c_out)]

    acc = [jnp.zeros((bb, nn), f32) for _ in range(c_out)]
    for c in range(c_in):
        # Lane-aligned channel slice (offset c*nn is a multiple of 128 for N=16).
        xc = x_ref[:, c * nn:(c + 1) * nn].astype(f32)            # (bb, nn)

        # Column-circular shifts: zcol[b][:, i*n+j] = xc[:, i*n + (j+b) mod n].
        zcol = {0: xc}
        for b in range(-p, p + 1):
            if b == 0:
                continue
            main = flat_roll(xc, -b)
            alt = flat_roll(xc, -b + n) if b > 0 else flat_roll(xc, -b - n)
            zcol[b] = jnp.where(wrap[b], alt, main)

        # All k*k periodic taps; a row shift is a plain flat roll by a*n.
        # taps[(a+p)*k + (b+p)][:, i*n+j] = xc[:, ((i+a)%n)*n + (j+b)%n]
        taps = []
        for a in range(-p, p + 1):
            for b in range(-p, p + 1):
                taps.append(zcol[b] if a == 0 else flat_roll(zcol[b], -a * n))

        # Shared conv W0 / W1 as VPU broadcast-FMA, elementwise product,
        # accumulated over the input channels.
        for o in range(c_out):
            a0 = w0s[o][0] * taps[0]
            a1 = w1s[o][0] * taps[0]
            for t in range(1, kk):
                a0 = a0 + w0s[o][t] * taps[t]
                a1 = a1 + w1s[o][t] * taps[t]
            acc[o] = acc[o] + a0 * a1

    for o in range(c_out):
        out_ref[:, o * nn:(o + 1) * nn] = acc[o].astype(out_ref.dtype)


def tlayer_forward(x, w0, w1, *, batch_block=8):
    """x: (B, 3, N, N) f32; w0, w1: (C_out, 1, k, k). Returns (B, C_out, N, N)."""
    B, c_in, N, _ = x.shape
    assert c_in == 3, "TLayer operates on 3 input channels"
    C_out, _, k, _ = w0.shape
    assert k % 2 == 1 and k // 2 < N, "odd kernel smaller than the lattice"
    nn = N * N
    kk = k * k

    bb = batch_block
    grid = pl.cdiv(B, bb)
    Bp = grid * bb

    xr = x.reshape(B, c_in * nn)                      # free reshape (no HBM pass)
    if Bp != B:
        xr = jnp.pad(xr, ((0, Bp - B), (0, 0)))       # only if B % bb != 0

    # Fused weights: rows [0:C_out] = W0, rows [C_out:2*C_out] = W1, taps row-major.
    wcat = jnp.concatenate([w0.reshape(C_out, kk), w1.reshape(C_out, kk)], axis=0)
    wcat = wcat.astype(jnp.float32)

    kernel = functools.partial(tlayer_kernel, n=N, k=k, c_out=C_out, c_in=c_in)

    yflat = pl.pallas_call(
        kernel,
        out_shape=jax.ShapeDtypeStruct((Bp, C_out * nn), jnp.float32),
        grid_spec=pltpu.PrefetchScalarGridSpec(
            num_scalar_prefetch=1,                    # wcat -> SMEM, read as scalars
            grid=(grid,),
            in_specs=[pl.BlockSpec((bb, c_in * nn), lambda ib, w: (ib, 0))],
            out_specs=pl.BlockSpec((bb, C_out * nn), lambda ib, w: (ib, 0)),
        ),
        compiler_params=pltpu.CompilerParams(dimension_semantics=("parallel",)),
    )(wcat, xr)

    # Free reshape back to NCHW; the row slice only materializes if B was padded.
    return yflat[:B].reshape(B, C_out, N, N)


def tlayer_reference(x, w0, w1):
    """Pure-JAX reference (lax.conv, NCHW) for verification."""
    pad = w0.shape[-1] // 2
    xp = jnp.pad(x, ((0, 0), (0, 0), (pad, pad), (pad, pad)), mode='wrap')
    acc = 0.0
    for c in range(3):
        xc = xp[:, c:c + 1]
        a = jax.lax.conv_general_dilated(
            xc, w0, (1, 1), 'VALID', dimension_numbers=('NCHW', 'OIHW', 'NCHW'))
        b = jax.lax.conv_general_dilated(
            xc, w1, (1, 1), 'VALID', dimension_numbers=('NCHW', 'OIHW', 'NCHW'))
        acc = acc + a * b
    return acc


if __name__ == "__main__":
    key = jax.random.PRNGKey(0)
    B, N = 8, 16
    C_out, k = 8, 3
    kx, k0, k1 = jax.random.split(key, 3)
    x = jax.random.normal(kx, (B, 3, N, N), dtype=jnp.float32)

    # deterministic init (shapes from nn.Conv2d(1, C_out, k, bias=False))
    fan_in = 1 * k * k
    bound = 1.0 / (fan_in ** 0.5)
    w0 = jax.random.uniform(k0, (C_out, 1, k, k), jnp.float32, -bound, bound)
    w1 = jax.random.uniform(k1, (C_out, 1, k, k), jnp.float32, -bound, bound)

    out = tlayer_forward(x, w0, w1)
    out = jax.block_until_ready(out)

    ref = tlayer_reference(x, w0, w1)
    assert out.shape == (B, C_out, N, N)
    assert jnp.allclose(out, ref, rtol=1e-4, atol=1e-4), \
        f"max err {float(jnp.max(jnp.abs(out - ref)))}"
    print("KERNEL_OK")
</pallas_src>

<mosaic_0001>
module attributes {stable_mosaic.version = 11 : i64} {
  func.func @tlayer_kernel(%arg0: i32, %arg1: memref<16x9xf32, #tpu.memory_space<smem>>, %arg2: memref<8x768xf32, #tpu.memory_space<vmem>>, %arg3: memref<8x2048xf32, #tpu.memory_space<vmem>>) attributes {dimension_semantics = [#tpu.dimension_semantics<parallel>], iteration_bounds = array<i64: 1>, scalar_prefetch = 1 : i64, scratch_operands = 0 : i64, tpu.core_type = #tpu.core_type<tc>, window_params = [{transform_indices = @transform_0, window_bounds = array<i64: 8, 768>}, {transform_indices = @transform_1, window_bounds = array<i64: 8, 2048>}]} {
    %0 = tpu.iota {dimensions = array<i32: 1>} : vector<8x256xi32>
    %c16_i32 = arith.constant 16 : i32
    %c0_i32 = arith.constant 0 : i32
    %1 = arith.cmpi eq, %c16_i32, %c0_i32 : i32
    %c1_i32 = arith.constant 1 : i32
    %2 = arith.select %1, %c1_i32, %c16_i32 : i32
    %3 = vector.broadcast %2 : i32 to vector<8x256xi32>
    %4 = arith.remsi %0, %3 : vector<8x256xi32>
    %c0_i32_0 = arith.constant 0 : i32
    %5 = vector.broadcast %c0_i32_0 : i32 to vector<8x256xi32>
    %6 = arith.cmpi ne, %4, %5 : vector<8x256xi32>
    %c0_i32_1 = arith.constant 0 : i32
    %7 = vector.broadcast %c0_i32_1 : i32 to vector<8x256xi32>
    %8 = arith.cmpi slt, %4, %7 : vector<8x256xi32>
    %c0_i32_2 = arith.constant 0 : i32
    %9 = arith.cmpi slt, %2, %c0_i32_2 : i32
    %10 = vector.broadcast %9 : i1 to vector<8x256xi1>
    %11 = vector.broadcast %10 : vector<8x256xi1> to vector<8x256xi1>
    %12 = arith.xori %8, %11 : vector<8x256xi1>
    %13 = arith.andi %12, %6 : vector<8x256xi1>
    %14 = vector.broadcast %2 : i32 to vector<8x256xi32>
    %15 = arith.addi %4, %14 : vector<8x256xi32>
    %16 = arith.select %13, %15, %4 : vector<8x256xi1>, vector<8x256xi32>
    %c1_i32_3 = arith.constant 1 : i32
    %17 = vector.broadcast %c1_i32_3 : i32 to vector<8x256xi32>
    %18 = arith.cmpi slt, %16, %17 : vector<8x256xi32>
    %c15_i32 = arith.constant 15 : i32
    %19 = vector.broadcast %c15_i32 : i32 to vector<8x256xi32>
    %20 = arith.cmpi sge, %16, %19 : vector<8x256xi32>
    %c0 = arith.constant 0 : index
    %c0_4 = arith.constant 0 : index
    %21 = memref.load %arg1[%c0, %c0_4] : memref<16x9xf32, #tpu.memory_space<smem>>
    %c0_5 = arith.constant 0 : index
    %c1 = arith.constant 1 : index
    %22 = memref.load %arg1[%c0_5, %c1] : memref<16x9xf32, #tpu.memory_space<smem>>
    %c0_6 = arith.constant 0 : index
    %c2 = arith.constant 2 : index
    %23 = memref.load %arg1[%c0_6, %c2] : memref<16x9xf32, #tpu.memory_space<smem>>
    %c0_7 = arith.constant 0 : index
    %c3 = arith.constant 3 : index
    %24 = memref.load %arg1[%c0_7, %c3] : memref<16x9xf32, #tpu.memory_space<smem>>
    %c0_8 = arith.constant 0 : index
    %c4 = arith.constant 4 : index
    %25 = memref.load %arg1[%c0_8, %c4] : memref<16x9xf32, #tpu.memory_space<smem>>
    %c0_9 = arith.constant 0 : index
    %c5 = arith.constant 5 : index
    %26 = memref.load %arg1[%c0_9, %c5] : memref<16x9xf32, #tpu.memory_space<smem>>
    %c0_10 = arith.constant 0 : index
    %c6 = arith.constant 6 : index
    %27 = memref.load %arg1[%c0_10, %c6] : memref<16x9xf32, #tpu.memory_space<smem>>
    %c0_11 = arith.constant 0 : index
    %c7 = arith.constant 7 : index
    %28 = memref.load %arg1[%c0_11, %c7] : memref<16x9xf32, #tpu.memory_space<smem>>
    %c0_12 = arith.constant 0 : index
    %c8 = arith.constant 8 : index
    %29 = memref.load %arg1[%c0_12, %c8] : memref<16x9xf32, #tpu.memory_space<smem>>
    %c1_13 = arith.constant 1 : index
    %c0_14 = arith.constant 0 : index
    %30 = memref.load %arg1[%c1_13, %c0_14] : memref<16x9xf32, #tpu.memory_space<smem>>
    %c1_15 = arith.constant 1 : index
    %c1_16 = arith.constant 1 : index
    %31 = memref.load %arg1[%c1_15, %c1_16] : memref<16x9xf32, #tpu.memory_space<smem>>
    %c1_17 = arith.constant 1 : index
    %c2_18 = arith.constant 2 : index
    %32 = memref.load %arg1[%c1_17, %c2_18] : memref<16x9xf32, #tpu.memory_space<smem>>
    %c1_19 = arith.constant 1 : index
    %c3_20 = arith.constant 3 : index
    %33 = memref.load %arg1[%c1_19, %c3_20] : memref<16x9xf32, #tpu.memory_space<smem>>
    %c1_21 = arith.constant 1 : index
    %c4_22 = arith.constant 4 : index
    %34 = memref.load %arg1[%c1_21, %c4_22] : memref<16x9xf32, #tpu.memory_space<smem>>
    %c1_23 = arith.constant 1 : index
    %c5_24 = arith.constant 5 : index
    %35 = memref.load %arg1[%c1_23, %c5_24] : memref<16x9xf32, #tpu.memory_space<smem>>
    %c1_25 = arith.constant 1 : index
    %c6_26 = arith.constant 6 : index
    %36 = memref.load %arg1[%c1_25, %c6_26] : memref<16x9xf32, #tpu.memory_space<smem>>
    %c1_27 = arith.constant 1 : index
    %c7_28 = arith.constant 7 : index
    %37 = memref.load %arg1[%c1_27, %c7_28] : memref<16x9xf32, #tpu.memory_space<smem>>
    %c1_29 = arith.constant 1 : index
    %c8_30 = arith.constant 8 : index
    %38 = memref.load %arg1[%c1_29, %c8_30] : memref<16x9xf32, #tpu.memory_space<smem>>
    %c2_31 = arith.constant 2 : index
    %c0_32 = arith.constant 0 : index
    %39 = memref.load %arg1[%c2_31, %c0_32] : memref<16x9xf32, #tpu.memory_space<smem>>
    %c2_33 = arith.constant 2 : index
    %c1_34 = arith.constant 1 : index
    %40 = memref.load %arg1[%c2_33, %c1_34] : memref<16x9xf32, #tpu.memory_space<smem>>
    %c2_35 = arith.constant 2 : index
    %c2_36 = arith.constant 2 : index
    %41 = memref.load %arg1[%c2_35, %c2_36] : memref<16x9xf32, #tpu.memory_space<smem>>
    %c2_37 = arith.constant 2 : index
    %c3_38 = arith.constant 3 : index
    %42 = memref.load %arg1[%c2_37, %c3_38] : memref<16x9xf32, #tpu.memory_space<smem>>
    %c2_39 = arith.constant 2 : index
    %c4_40 = arith.constant 4 : index
    %43 = memref.load %arg1[%c2_39, %c4_40] : memref<16x9xf32, #tpu.memory_space<smem>>
    %c2_41 = arith.constant 2 : index
    %c5_42 = arith.constant 5 : index
    %44 = memref.load %arg1[%c2_41, %c5_42] : memref<16x9xf32, #tpu.memory_space<smem>>
    %c2_43 = arith.constant 2 : index
    %c6_44 = arith.constant 6 : index
    %45 = memref.load %arg1[%c2_43, %c6_44] : memref<16x9xf32, #tpu.memory_space<smem>>
    %c2_45 = arith.constant 2 : index
    %c7_46 = arith.constant 7 : index
    %46 = memref.load %arg1[%c2_45, %c7_46] : memref<16x9xf32, #tpu.memory_space<smem>>
    %c2_47 = arith.constant 2 : index
    %c8_48 = arith.constant 8 : index
    %47 = memref.load %arg1[%c2_47, %c8_48] : memref<16x9xf32, #tpu.memory_space<smem>>
    %c3_49 = arith.constant 3 : index
    %c0_50 = arith.constant 0 : index
    %48 = memref.load %arg1[%c3_49, %c0_50] : memref<16x9xf32, #tpu.memory_space<smem>>
    %c3_51 = arith.constant 3 : index
    %c1_52 = arith.constant 1 : index
    %49 = memref.load %arg1[%c3_51, %c1_52] : memref<16x9xf32, #tpu.memory_space<smem>>
    %c3_53 = arith.constant 3 : index
    %c2_54 = arith.constant 2 : index
    %50 = memref.load %arg1[%c3_53, %c2_54] : memref<16x9xf32, #tpu.memory_space<smem>>
    %c3_55 = arith.constant 3 : index
    %c3_56 = arith.constant 3 : index
    %51 = memref.load %arg1[%c3_55, %c3_56] : memref<16x9xf32, #tpu.memory_space<smem>>
    %c3_57 = arith.constant 3 : index
    %c4_58 = arith.constant 4 : index
    %52 = memref.load %arg1[%c3_57, %c4_58] : memref<16x9xf32, #tpu.memory_space<smem>>
    %c3_59 = arith.constant 3 : index
    %c5_60 = arith.constant 5 : index
    %53 = memref.load %arg1[%c3_59, %c5_60] : memref<16x9xf32, #tpu.memory_space<smem>>
    %c3_61 = arith.constant 3 : index
    %c6_62 = arith.constant 6 : index
    %54 = memref.load %arg1[%c3_61, %c6_62] : memref<16x9xf32, #tpu.memory_space<smem>>
    %c3_63 = arith.constant 3 : index
    %c7_64 = arith.constant 7 : index
    %55 = memref.load %arg1[%c3_63, %c7_64] : memref<16x9xf32, #tpu.memory_space<smem>>
    %c3_65 = arith.constant 3 : index
    %c8_66 = arith.constant 8 : index
    %56 = memref.load %arg1[%c3_65, %c8_66] : memref<16x9xf32, #tpu.memory_space<smem>>
    %c4_67 = arith.constant 4 : index
    %c0_68 = arith.constant 0 : index
    %57 = memref.load %arg1[%c4_67, %c0_68] : memref<16x9xf32, #tpu.memory_space<smem>>
    %c4_69 = arith.constant 4 : index
    %c1_70 = arith.constant 1 : index
    %58 = memref.load %arg1[%c4_69, %c1_70] : memref<16x9xf32, #tpu.memory_space<smem>>
    %c4_71 = arith.constant 4 : index
    %c2_72 = arith.constant 2 : index
    %59 = memref.load %arg1[%c4_71, %c2_72] : memref<16x9xf32, #tpu.memory_space<smem>>
    %c4_73 = arith.constant 4 : index
    %c3_74 = arith.constant 3 : index
    %60 = memref.load %arg1[%c4_73, %c3_74] : memref<16x9xf32, #tpu.memory_space<smem>>
    %c4_75 = arith.constant 4 : index
    %c4_76 = arith.constant 4 : index
    %61 = memref.load %arg1[%c4_75, %c4_76] : memref<16x9xf32, #tpu.memory_space<smem>>
    %c4_77 = arith.constant 4 : index
    %c5_78 = arith.constant 5 : index
    %62 = memref.load %arg1[%c4_77, %c5_78] : memref<16x9xf32, #tpu.memory_space<smem>>
    %c4_79 = arith.constant 4 : index
    %c6_80 = arith.constant 6 : index
    %63 = memref.load %arg1[%c4_79, %c6_80] : memref<16x9xf32, #tpu.memory_space<smem>>
    %c4_81 = arith.constant 4 : index
    %c7_82 = arith.constant 7 : index
    %64 = memref.load %arg1[%c4_81, %c7_82] : memref<16x9xf32, #tpu.memory_space<smem>>
    %c4_83 = arith.constant 4 : index
    %c8_84 = arith.constant 8 : index
    %65 = memref.load %arg1[%c4_83, %c8_84] : memref<16x9xf32, #tpu.memory_space<smem>>
    %c5_85 = arith.constant 5 : index
    %c0_86 = arith.constant 0 : index
    %66 = memref.load %arg1[%c5_85, %c0_86] : memref<16x9xf32, #tpu.memory_space<smem>>
    %c5_87 = arith.constant 5 : index
    %c1_88 = arith.constant 1 : index
    %67 = memref.load %arg1[%c5_87, %c1_88] : memref<16x9xf32, #tpu.memory_space<smem>>
    %c5_89 = arith.constant 5 : index
    %c2_90 = arith.constant 2 : index
    %68 = memref.load %arg1[%c5_89, %c2_90] : memref<16x9xf32, #tpu.memory_space<smem>>
    %c5_91 = arith.constant 5 : index
    %c3_92 = arith.constant 3 : index
    %69 = memref.load %arg1[%c5_91, %c3_92] : memref<16x9xf32, #tpu.memory_space<smem>>
    %c5_93 = arith.constant 5 : index
    %c4_94 = arith.constant 4 : index
    %70 = memref.load %arg1[%c5_93, %c4_94] : memref<16x9xf32, #tpu.memory_space<smem>>
    %c5_95 = arith.constant 5 : index
    %c5_96 = arith.constant 5 : index
    %71 = memref.load %arg1[%c5_95, %c5_96] : memref<16x9xf32, #tpu.memory_space<smem>>
    %c5_97 = arith.constant 5 : index
    %c6_98 = arith.constant 6 : index
    %72 = memref.load %arg1[%c5_97, %c6_98] : memref<16x9xf32, #tpu.memory_space<smem>>
    %c5_99 = arith.constant 5 : index
    %c7_100 = arith.constant 7 : index
    %73 = memref.load %arg1[%c5_99, %c7_100] : memref<16x9xf32, #tpu.memory_space<smem>>
    %c5_101 = arith.constant 5 : index
    %c8_102 = arith.constant 8 : index
    %74 = memref.load %arg1[%c5_101, %c8_102] : memref<16x9xf32, #tpu.memory_space<smem>>
    %c6_103 = arith.constant 6 : index
    %c0_104 = arith.constant 0 : index
    %75 = memref.load %arg1[%c6_103, %c0_104] : memref<16x9xf32, #tpu.memory_space<smem>>
    %c6_105 = arith.constant 6 : index
    %c1_106 = arith.constant 1 : index
    %76 = memref.load %arg1[%c6_105, %c1_106] : memref<16x9xf32, #tpu.memory_space<smem>>
    %c6_107 = arith.constant 6 : index
    %c2_108 = arith.constant 2 : index
    %77 = memref.load %arg1[%c6_107, %c2_108] : memref<16x9xf32, #tpu.memory_space<smem>>
    %c6_109 = arith.constant 6 : index
    %c3_110 = arith.constant 3 : index
    %78 = memref.load %arg1[%c6_109, %c3_110] : memref<16x9xf32, #tpu.memory_space<smem>>
    %c6_111 = arith.constant 6 : index
    %c4_112 = arith.constant 4 : index
    %79 = memref.load %arg1[%c6_111, %c4_112] : memref<16x9xf32, #tpu.memory_space<smem>>
    %c6_113 = arith.constant 6 : index
    %c5_114 = arith.constant 5 : index
    %80 = memref.load %arg1[%c6_113, %c5_114] : memref<16x9xf32, #tpu.memory_space<smem>>
    %c6_115 = arith.constant 6 : index
    %c6_116 = arith.constant 6 : index
    %81 = memref.load %arg1[%c6_115, %c6_116] : memref<16x9xf32, #tpu.memory_space<smem>>
    %c6_117 = arith.constant 6 : index
    %c7_118 = arith.constant 7 : index
    %82 = memref.load %arg1[%c6_117, %c7_118] : memref<16x9xf32, #tpu.memory_space<smem>>
    %c6_119 = arith.constant 6 : index
    %c8_120 = arith.constant 8 : index
    %83 = memref.load %arg1[%c6_119, %c8_120] : memref<16x9xf32, #tpu.memory_space<smem>>
    %c7_121 = arith.constant 7 : index
    %c0_122 = arith.constant 0 : index
    %84 = memref.load %arg1[%c7_121, %c0_122] : memref<16x9xf32, #tpu.memory_space<smem>>
    %c7_123 = arith.constant 7 : index
    %c1_124 = arith.constant 1 : index
    %85 = memref.load %arg1[%c7_123, %c1_124] : memref<16x9xf32, #tpu.memory_space<smem>>
    %c7_125 = arith.constant 7 : index
    %c2_126 = arith.constant 2 : index
    %86 = memref.load %arg1[%c7_125, %c2_126] : memref<16x9xf32, #tpu.memory_space<smem>>
    %c7_127 = arith.constant 7 : index
    %c3_128 = arith.constant 3 : index
    %87 = memref.load %arg1[%c7_127, %c3_128] : memref<16x9xf32, #tpu.memory_space<smem>>
    %c7_129 = arith.constant 7 : index
    %c4_130 = arith.constant 4 : index
    %88 = memref.load %arg1[%c7_129, %c4_130] : memref<16x9xf32, #tpu.memory_space<smem>>
    %c7_131 = arith.constant 7 : index
    %c5_132 = arith.constant 5 : index
    %89 = memref.load %arg1[%c7_131, %c5_132] : memref<16x9xf32, #tpu.memory_space<smem>>
    %c7_133 = arith.constant 7 : index
    %c6_134 = arith.constant 6 : index
    %90 = memref.load %arg1[%c7_133, %c6_134] : memref<16x9xf32, #tpu.memory_space<smem>>
    %c7_135 = arith.constant 7 : index
    %c7_136 = arith.constant 7 : index
    %91 = memref.load %arg1[%c7_135, %c7_136] : memref<16x9xf32, #tpu.memory_space<smem>>
    %c7_137 = arith.constant 7 : index
    %c8_138 = arith.constant 8 : index
    %92 = memref.load %arg1[%c7_137, %c8_138] : memref<16x9xf32, #tpu.memory_space<smem>>
    %c8_139 = arith.constant 8 : index
    %c0_140 = arith.constant 0 : index
    %93 = memref.load %arg1[%c8_139, %c0_140] : memref<16x9xf32, #tpu.memory_space<smem>>
    %c8_141 = arith.constant 8 : index
    %c1_142 = arith.constant 1 : index
    %94 = memref.load %arg1[%c8_141, %c1_142] : memref<16x9xf32, #tpu.memory_space<smem>>
    %c8_143 = arith.constant 8 : index
    %c2_144 = arith.constant 2 : index
    %95 = memref.load %arg1[%c8_143, %c2_144] : memref<16x9xf32, #tpu.memory_space<smem>>
    %c8_145 = arith.constant 8 : index
    %c3_146 = arith.constant 3 : index
    %96 = memref.load %arg1[%c8_145, %c3_146] : memref<16x9xf32, #tpu.memory_space<smem>>
    %c8_147 = arith.constant 8 : index
    %c4_148 = arith.constant 4 : index
    %97 = memref.load %arg1[%c8_147, %c4_148] : memref<16x9xf32, #tpu.memory_space<smem>>
    %c8_149 = arith.constant 8 : index
    %c5_150 = arith.constant 5 : index
    %98 = memref.load %arg1[%c8_149, %c5_150] : memref<16x9xf32, #tpu.memory_space<smem>>
    %c8_151 = arith.constant 8 : index
    %c6_152 = arith.constant 6 : index
    %99 = memref.load %arg1[%c8_151, %c6_152] : memref<16x9xf32, #tpu.memory_space<smem>>
    %c8_153 = arith.constant 8 : index
    %c7_154 = arith.constant 7 : index
    %100 = memref.load %arg1[%c8_153, %c7_154] : memref<16x9xf32, #tpu.memory_space<smem>>
    %c8_155 = arith.constant 8 : index
    %c8_156 = arith.constant 8 : index
    %101 = memref.load %arg1[%c8_155, %c8_156] : memref<16x9xf32, #tpu.memory_space<smem>>
    %c9 = arith.constant 9 : index
    %c0_157 = arith.constant 0 : index
    %102 = memref.load %arg1[%c9, %c0_157] : memref<16x9xf32, #tpu.memory_space<smem>>
    %c9_158 = arith.constant 9 : index
    %c1_159 = arith.constant 1 : index
    %103 = memref.load %arg1[%c9_158, %c1_159] : memref<16x9xf32, #tpu.memory_space<smem>>
    %c9_160 = arith.constant 9 : index
    %c2_161 = arith.constant 2 : index
    %104 = memref.load %arg1[%c9_160, %c2_161] : memref<16x9xf32, #tpu.memory_space<smem>>
    %c9_162 = arith.constant 9 : index
    %c3_163 = arith.constant 3 : index
    %105 = memref.load %arg1[%c9_162, %c3_163] : memref<16x9xf32, #tpu.memory_space<smem>>
    %c9_164 = arith.constant 9 : index
    %c4_165 = arith.constant 4 : index
    %106 = memref.load %arg1[%c9_164, %c4_165] : memref<16x9xf32, #tpu.memory_space<smem>>
    %c9_166 = arith.constant 9 : index
    %c5_167 = arith.constant 5 : index
    %107 = memref.load %arg1[%c9_166, %c5_167] : memref<16x9xf32, #tpu.memory_space<smem>>
    %c9_168 = arith.constant 9 : index
    %c6_169 = arith.constant 6 : index
    %108 = memref.load %arg1[%c9_168, %c6_169] : memref<16x9xf32, #tpu.memory_space<smem>>
    %c9_170 = arith.constant 9 : index
    %c7_171 = arith.constant 7 : index
    %109 = memref.load %arg1[%c9_170, %c7_171] : memref<16x9xf32, #tpu.memory_space<smem>>
    %c9_172 = arith.constant 9 : index
    %c8_173 = arith.constant 8 : index
    %110 = memref.load %arg1[%c9_172, %c8_173] : memref<16x9xf32, #tpu.memory_space<smem>>
    %c10 = arith.constant 10 : index
    %c0_174 = arith.constant 0 : index
    %111 = memref.load %arg1[%c10, %c0_174] : memref<16x9xf32, #tpu.memory_space<smem>>
    %c10_175 = arith.constant 10 : index
    %c1_176 = arith.constant 1 : index
    %112 = memref.load %arg1[%c10_175, %c1_176] : memref<16x9xf32, #tpu.memory_space<smem>>
    %c10_177 = arith.constant 10 : index
    %c2_178 = arith.constant 2 : index
    %113 = memref.load %arg1[%c10_177, %c2_178] : memref<16x9xf32, #tpu.memory_space<smem>>
    %c10_179 = arith.constant 10 : index
    %c3_180 = arith.constant 3 : index
    %114 = memref.load %arg1[%c10_179, %c3_180] : memref<16x9xf32, #tpu.memory_space<smem>>
    %c10_181 = arith.constant 10 : index
    %c4_182 = arith.constant 4 : index
    %115 = memref.load %arg1[%c10_181, %c4_182] : memref<16x9xf32, #tpu.memory_space<smem>>
    %c10_183 = arith.constant 10 : index
    %c5_184 = arith.constant 5 : index
    %116 = memref.load %arg1[%c10_183, %c5_184] : memref<16x9xf32, #tpu.memory_space<smem>>
    %c10_185 = arith.constant 10 : index
    %c6_186 = arith.constant 6 : index
    %117 = memref.load %arg1[%c10_185, %c6_186] : memref<16x9xf32, #tpu.memory_space<smem>>
    %c10_187 = arith.constant 10 : index
    %c7_188 = arith.constant 7 : index
    %118 = memref.load %arg1[%c10_187, %c7_188] : memref<16x9xf32, #tpu.memory_space<smem>>
    %c10_189 = arith.constant 10 : index
    %c8_190 = arith.constant 8 : index
    %119 = memref.load %arg1[%c10_189, %c8_190] : memref<16x9xf32, #tpu.memory_space<smem>>
    %c11 = arith.constant 11 : index
    %c0_191 = arith.constant 0 : index
    %120 = memref.load %arg1[%c11, %c0_191] : memref<16x9xf32, #tpu.memory_space<smem>>
    %c11_192 = arith.constant 11 : index
    %c1_193 = arith.constant 1 : index
    %121 = memref.load %arg1[%c11_192, %c1_193] : memref<16x9xf32, #tpu.memory_space<smem>>
    %c11_194 = arith.constant 11 : index
    %c2_195 = arith.constant 2 : index
    %122 = memref.load %arg1[%c11_194, %c2_195] : memref<16x9xf32, #tpu.memory_space<smem>>
    %c11_196 = arith.constant 11 : index
    %c3_197 = arith.constant 3 : index
    %123 = memref.load %arg1[%c11_196, %c3_197] : memref<16x9xf32, #tpu.memory_space<smem>>
    %c11_198 = arith.constant 11 : index
    %c4_199 = arith.constant 4 : index
    %124 = memref.load %arg1[%c11_198, %c4_199] : memref<16x9xf32, #tpu.memory_space<smem>>
    %c11_200 = arith.constant 11 : index
    %c5_201 = arith.constant 5 : index
    %125 = memref.load %arg1[%c11_200, %c5_201] : memref<16x9xf32, #tpu.memory_space<smem>>
    %c11_202 = arith.constant 11 : index
    %c6_203 = arith.constant 6 : index
    %126 = memref.load %arg1[%c11_202, %c6_203] : memref<16x9xf32, #tpu.memory_space<smem>>
    %c11_204 = arith.constant 11 : index
    %c7_205 = arith.constant 7 : index
    %127 = memref.load %arg1[%c11_204, %c7_205] : memref<16x9xf32, #tpu.memory_space<smem>>
    %c11_206 = arith.constant 11 : index
    %c8_207 = arith.constant 8 : index
    %128 = memref.load %arg1[%c11_206, %c8_207] : memref<16x9xf32, #tpu.memory_space<smem>>
    %c12 = arith.constant 12 : index
    %c0_208 = arith.constant 0 : index
    %129 = memref.load %arg1[%c12, %c0_208] : memref<16x9xf32, #tpu.memory_space<smem>>
    %c12_209 = arith.constant 12 : index
    %c1_210 = arith.constant 1 : index
    %130 = memref.load %arg1[%c12_209, %c1_210] : memref<16x9xf32, #tpu.memory_space<smem>>
    %c12_211 = arith.constant 12 : index
    %c2_212 = arith.constant 2 : index
    %131 = memref.load %arg1[%c12_211, %c2_212] : memref<16x9xf32, #tpu.memory_space<smem>>
    %c12_213 = arith.constant 12 : index
    %c3_214 = arith.constant 3 : index
    %132 = memref.load %arg1[%c12_213, %c3_214] : memref<16x9xf32, #tpu.memory_space<smem>>
    %c12_215 = arith.constant 12 : index
    %c4_216 = arith.constant 4 : index
    %133 = memref.load %arg1[%c12_215, %c4_216] : memref<16x9xf32, #tpu.memory_space<smem>>
    %c12_217 = arith.constant 12 : index
    %c5_218 = arith.constant 5 : index
    %134 = memref.load %arg1[%c12_217, %c5_218] : memref<16x9xf32, #tpu.memory_space<smem>>
    %c12_219 = arith.constant 12 : index
    %c6_220 = arith.constant 6 : index
    %135 = memref.load %arg1[%c12_219, %c6_220] : memref<16x9xf32, #tpu.memory_space<smem>>
    %c12_221 = arith.constant 12 : index
    %c7_222 = arith.constant 7 : index
    %136 = memref.load %arg1[%c12_221, %c7_222] : memref<16x9xf32, #tpu.memory_space<smem>>
    %c12_223 = arith.constant 12 : index
    %c8_224 = arith.constant 8 : index
    %137 = memref.load %arg1[%c12_223, %c8_224] : memref<16x9xf32, #tpu.memory_space<smem>>
    %c13 = arith.constant 13 : index
    %c0_225 = arith.constant 0 : index
    %138 = memref.load %arg1[%c13, %c0_225] : memref<16x9xf32, #tpu.memory_space<smem>>
    %c13_226 = arith.constant 13 : index
    %c1_227 = arith.constant 1 : index
    %139 = memref.load %arg1[%c13_226, %c1_227] : memref<16x9xf32, #tpu.memory_space<smem>>
    %c13_228 = arith.constant 13 : index
    %c2_229 = arith.constant 2 : index
    %140 = memref.load %arg1[%c13_228, %c2_229] : memref<16x9xf32, #tpu.memory_space<smem>>
    %c13_230 = arith.constant 13 : index
    %c3_231 = arith.constant 3 : index
    %141 = memref.load %arg1[%c13_230, %c3_231] : memref<16x9xf32, #tpu.memory_space<smem>>
    %c13_232 = arith.constant 13 : index
    %c4_233 = arith.constant 4 : index
    %142 = memref.load %arg1[%c13_232, %c4_233] : memref<16x9xf32, #tpu.memory_space<smem>>
    %c13_234 = arith.constant 13 : index
    %c5_235 = arith.constant 5 : index
    %143 = memref.load %arg1[%c13_234, %c5_235] : memref<16x9xf32, #tpu.memory_space<smem>>
    %c13_236 = arith.constant 13 : index
    %c6_237 = arith.constant 6 : index
    %144 = memref.load %arg1[%c13_236, %c6_237] : memref<16x9xf32, #tpu.memory_space<smem>>
    %c13_238 = arith.constant 13 : index
    %c7_239 = arith.constant 7 : index
    %145 = memref.load %arg1[%c13_238, %c7_239] : memref<16x9xf32, #tpu.memory_space<smem>>
    %c13_240 = arith.constant 13 : index
    %c8_241 = arith.constant 8 : index
    %146 = memref.load %arg1[%c13_240, %c8_241] : memref<16x9xf32, #tpu.memory_space<smem>>
    %c14 = arith.constant 14 : index
    %c0_242 = arith.constant 0 : index
    %147 = memref.load %arg1[%c14, %c0_242] : memref<16x9xf32, #tpu.memory_space<smem>>
    %c14_243 = arith.constant 14 : index
    %c1_244 = arith.constant 1 : index
    %148 = memref.load %arg1[%c14_243, %c1_244] : memref<16x9xf32, #tpu.memory_space<smem>>
    %c14_245 = arith.constant 14 : index
    %c2_246 = arith.constant 2 : index
    %149 = memref.load %arg1[%c14_245, %c2_246] : memref<16x9xf32, #tpu.memory_space<smem>>
    %c14_247 = arith.constant 14 : index
    %c3_248 = arith.constant 3 : index
    %150 = memref.load %arg1[%c14_247, %c3_248] : memref<16x9xf32, #tpu.memory_space<smem>>
    %c14_249 = arith.constant 14 : index
    %c4_250 = arith.constant 4 : index
    %151 = memref.load %arg1[%c14_249, %c4_250] : memref<16x9xf32, #tpu.memory_space<smem>>
    %c14_251 = arith.constant 14 : index
    %c5_252 = arith.constant 5 : index
    %152 = memref.load %arg1[%c14_251, %c5_252] : memref<16x9xf32, #tpu.memory_space<smem>>
    %c14_253 = arith.constant 14 : index
    %c6_254 = arith.constant 6 : index
    %153 = memref.load %arg1[%c14_253, %c6_254] : memref<16x9xf32, #tpu.memory_space<smem>>
    %c14_255 = arith.constant 14 : index
    %c7_256 = arith.constant 7 : index
    %154 = memref.load %arg1[%c14_255, %c7_256] : memref<16x9xf32, #tpu.memory_space<smem>>
    %c14_257 = arith.constant 14 : index
    %c8_258 = arith.constant 8 : index
    %155 = memref.load %arg1[%c14_257, %c8_258] : memref<16x9xf32, #tpu.memory_space<smem>>
    %c15 = arith.constant 15 : index
    %c0_259 = arith.constant 0 : index
    %156 = memref.load %arg1[%c15, %c0_259] : memref<16x9xf32, #tpu.memory_space<smem>>
    %c15_260 = arith.constant 15 : index
    %c1_261 = arith.constant 1 : index
    %157 = memref.load %arg1[%c15_260, %c1_261] : memref<16x9xf32, #tpu.memory_space<smem>>
    %c15_262 = arith.constant 15 : index
    %c2_263 = arith.constant 2 : index
    %158 = memref.load %arg1[%c15_262, %c2_263] : memref<16x9xf32, #tpu.memory_space<smem>>
    %c15_264 = arith.constant 15 : index
    %c3_265 = arith.constant 3 : index
    %159 = memref.load %arg1[%c15_264, %c3_265] : memref<16x9xf32, #tpu.memory_space<smem>>
    %c15_266 = arith.constant 15 : index
    %c4_267 = arith.constant 4 : index
    %160 = memref.load %arg1[%c15_266, %c4_267] : memref<16x9xf32, #tpu.memory_space<smem>>
    %c15_268 = arith.constant 15 : index
    %c5_269 = arith.constant 5 : index
    %161 = memref.load %arg1[%c15_268, %c5_269] : memref<16x9xf32, #tpu.memory_space<smem>>
    %c15_270 = arith.constant 15 : index
    %c6_271 = arith.constant 6 : index
    %162 = memref.load %arg1[%c15_270, %c6_271] : memref<16x9xf32, #tpu.memory_space<smem>>
    %c15_272 = arith.constant 15 : index
    %c7_273 = arith.constant 7 : index
    %163 = memref.load %arg1[%c15_272, %c7_273] : memref<16x9xf32, #tpu.memory_space<smem>>
    %c15_274 = arith.constant 15 : index
    %c8_275 = arith.constant 8 : index
    %164 = memref.load %arg1[%c15_274, %c8_275] : memref<16x9xf32, #tpu.memory_space<smem>>
    %cst = arith.constant 0.000000e+00 : f32
    %165 = vector.broadcast %cst : f32 to vector<8x256xf32>
    %cst_276 = arith.constant 0.000000e+00 : f32
    %166 = vector.broadcast %cst_276 : f32 to vector<8x256xf32>
    %cst_277 = arith.constant 0.000000e+00 : f32
    %167 = vector.broadcast %cst_277 : f32 to vector<8x256xf32>
    %cst_278 = arith.constant 0.000000e+00 : f32
    %168 = vector.broadcast %cst_278 : f32 to vector<8x256xf32>
    %cst_279 = arith.constant 0.000000e+00 : f32
    %169 = vector.broadcast %cst_279 : f32 to vector<8x256xf32>
    %cst_280 = arith.constant 0.000000e+00 : f32
    %170 = vector.broadcast %cst_280 : f32 to vector<8x256xf32>
    %cst_281 = arith.constant 0.000000e+00 : f32
    %171 = vector.broadcast %cst_281 : f32 to vector<8x256xf32>
    %cst_282 = arith.constant 0.000000e+00 : f32
    %172 = vector.broadcast %cst_282 : f32 to vector<8x256xf32>
    %c0_283 = arith.constant 0 : index
    %c0_284 = arith.constant 0 : index
    %173 = vector.load %arg2[%c0_283, %c0_284] : memref<8x768xf32, #tpu.memory_space<vmem>>, vector<8x256xf32>
    %174 = vector.extract_strided_slice %173 {offsets = [0, 255], sizes = [8, 1], strides = [1, 1]} : vector<8x256xf32> to vector<8x1xf32>
    %175 = vector.extract_strided_slice %173 {offsets = [0, 0], sizes = [8, 255], strides = [1, 1]} : vector<8x256xf32> to vector<8x255xf32>
    %176 = tpu.concatenate %174, %175 in 1 : vector<8x1xf32>, vector<8x255xf32> -> vector<8x256xf32>
    %177 = vector.extract_strided_slice %173 {offsets = [0, 15], sizes = [8, 241], strides = [1, 1]} : vector<8x256xf32> to vector<8x241xf32>
    %178 = vector.extract_strided_slice %173 {offsets = [0, 0], sizes = [8, 15], strides = [1, 1]} : vector<8x256xf32> to vector<8x15xf32>
    %179 = tpu.concatenate %177, %178 in 1 : vector<8x241xf32>, vector<8x15xf32> -> vector<8x256xf32>
    %180 = arith.select %18, %179, %176 : vector<8x256xi1>, vector<8x256xf32>
    %181 = vector.extract_strided_slice %173 {offsets = [0, 1], sizes = [8, 255], strides = [1, 1]} : vector<8x256xf32> to vector<8x255xf32>
    %182 = vector.extract_strided_slice %173 {offsets = [0, 0], sizes = [8, 1], strides = [1, 1]} : vector<8x256xf32> to vector<8x1xf32>
    %183 = tpu.concatenate %181, %182 in 1 : vector<8x255xf32>, vector<8x1xf32> -> vector<8x256xf32>
    %184 = vector.extract_strided_slice %173 {offsets = [0, 241], sizes = [8, 15], strides = [1, 1]} : vector<8x256xf32> to vector<8x15xf32>
    %185 = vector.extract_strided_slice %173 {offsets = [0, 0], sizes = [8, 241], strides = [1, 1]} : vector<8x256xf32> to vector<8x241xf32>
    %186 = tpu.concatenate %184, %185 in 1 : vector<8x15xf32>, vector<8x241xf32> -> vector<8x256xf32>
    %187 = arith.select %20, %186, %183 : vector<8x256xi1>, vector<8x256xf32>
    %188 = vector.extract_strided_slice %180 {offsets = [0, 240], sizes = [8, 16], strides = [1, 1]} : vector<8x256xf32> to vector<8x16xf32>
    %189 = vector.extract_strided_slice %180 {offsets = [0, 0], sizes = [8, 240], strides = [1, 1]} : vector<8x256xf32> to vector<8x240xf32>
    %190 = tpu.concatenate %188, %189 in 1 : vector<8x16xf32>, vector<8x240xf32> -> vector<8x256xf32>
    %191 = vector.extract_strided_slice %173 {offsets = [0, 240], sizes = [8, 16], strides = [1, 1]} : vector<8x256xf32> to vector<8x16xf32>
    %192 = vector.extract_strided_slice %173 {offsets = [0, 0], sizes = [8, 240], strides = [1, 1]} : vector<8x256xf32> to vector<8x240xf32>
    %193 = tpu.concatenate %191, %192 in 1 : vector<8x16xf32>, vector<8x240xf32> -> vector<8x256xf32>
    %194 = vector.extract_strided_slice %187 {offsets = [0, 240], sizes = [8, 16], strides = [1, 1]} : vector<8x256xf32> to vector<8x16xf32>
    %195 = vector.extract_strided_slice %187 {offsets = [0, 0], sizes = [8, 240], strides = [1, 1]} : vector<8x256xf32> to vector<8x240xf32>
    %196 = tpu.concatenate %194, %195 in 1 : vector<8x16xf32>, vector<8x240xf32> -> vector<8x256xf32>
    %197 = vector.extract_strided_slice %180 {offsets = [0, 16], sizes = [8, 240], strides = [1, 1]} : vector<8x256xf32> to vector<8x240xf32>
    %198 = vector.extract_strided_slice %180 {offsets = [0, 0], sizes = [8, 16], strides = [1, 1]} : vector<8x256xf32> to vector<8x16xf32>
    %199 = tpu.concatenate %197, %198 in 1 : vector<8x240xf32>, vector<8x16xf32> -> vector<8x256xf32>
    %200 = vector.extract_strided_slice %173 {offsets = [0, 16], sizes = [8, 240], strides = [1, 1]} : vector<8x256xf32> to vector<8x240xf32>
    %201 = vector.extract_strided_slice %173 {offsets = [0, 0], sizes = [8, 16], strides = [1, 1]} : vector<8x256xf32> to vector<8x16xf32>
    %202 = tpu.concatenate %200, %201 in 1 : vector<8x240xf32>, vector<8x16xf32> -> vector<8x256xf32>
    %203 = vector.extract_strided_slice %187 {offsets = [0, 16], sizes = [8, 240], strides = [1, 1]} : vector<8x256xf32> to vector<8x240xf32>
    %204 = vector.extract_strided_slice %187 {offsets = [0, 0], sizes = [8, 16], strides = [1, 1]} : vector<8x256xf32> to vector<8x16xf32>
    %205 = tpu.concatenate %203, %204 in 1 : vector<8x240xf32>, vector<8x16xf32> -> vector<8x256xf32>
    %206 = vector.broadcast %21 : f32 to vector<8x256xf32>
    %207 = arith.mulf %206, %190 : vector<8x256xf32>
    %208 = vector.broadcast %93 : f32 to vector<8x256xf32>
    %209 = arith.mulf %208, %190 : vector<8x256xf32>
    %210 = vector.broadcast %22 : f32 to vector<8x256xf32>
    %211 = arith.mulf %210, %193 : vector<8x256xf32>
    %212 = arith.addf %207, %211 : vector<8x256xf32>
    %213 = vector.broadcast %94 : f32 to vector<8x256xf32>
    %214 = arith.mulf %213, %193 : vector<8x256xf32>
    %215 = arith.addf %209, %214 : vector<8x256xf32>
    %216 = vector.broadcast %23 : f32 to vector<8x256xf32>
    %217 = arith.mulf %216, %196 : vector<8x256xf32>
    %218 = arith.addf %212, %217 : vector<8x256xf32>
    %219 = vector.broadcast %95 : f32 to vector<8x256xf32>
    %220 = arith.mulf %219, %196 : vector<8x256xf32>
    %221 = arith.addf %215, %220 : vector<8x256xf32>
    %222 = vector.broadcast %24 : f32 to vector<8x256xf32>
    %223 = arith.mulf %222, %180 : vector<8x256xf32>
    %224 = arith.addf %218, %223 : vector<8x256xf32>
    %225 = vector.broadcast %96 : f32 to vector<8x256xf32>
    %226 = arith.mulf %225, %180 : vector<8x256xf32>
    %227 = arith.addf %221, %226 : vector<8x256xf32>
    %228 = vector.broadcast %25 : f32 to vector<8x256xf32>
    %229 = arith.mulf %228, %173 : vector<8x256xf32>
    %230 = arith.addf %224, %229 : vector<8x256xf32>
    %231 = vector.broadcast %97 : f32 to vector<8x256xf32>
    %232 = arith.mulf %231, %173 : vector<8x256xf32>
    %233 = arith.addf %227, %232 : vector<8x256xf32>
    %234 = vector.broadcast %26 : f32 to vector<8x256xf32>
    %235 = arith.mulf %234, %187 : vector<8x256xf32>
    %236 = arith.addf %230, %235 : vector<8x256xf32>
    %237 = vector.broadcast %98 : f32 to vector<8x256xf32>
    %238 = arith.mulf %237, %187 : vector<8x256xf32>
    %239 = arith.addf %233, %238 : vector<8x256xf32>
    %240 = vector.broadcast %27 : f32 to vector<8x256xf32>
    %241 = arith.mulf %240, %199 : vector<8x256xf32>
    %242 = arith.addf %236, %241 : vector<8x256xf32>
    %243 = vector.broadcast %99 : f32 to vector<8x256xf32>
    %244 = arith.mulf %243, %199 : vector<8x256xf32>
    %245 = arith.addf %239, %244 : vector<8x256xf32>
    %246 = vector.broadcast %28 : f32 to vector<8x256xf32>
    %247 = arith.mulf %246, %202 : vector<8x256xf32>
    %248 = arith.addf %242, %247 : vector<8x256xf32>
    %249 = vector.broadcast %100 : f32 to vector<8x256xf32>
    %250 = arith.mulf %249, %202 : vector<8x256xf32>
    %251 = arith.addf %245, %250 : vector<8x256xf32>
    %252 = vector.broadcast %29 : f32 to vector<8x256xf32>
    %253 = arith.mulf %252, %205 : vector<8x256xf32>
    %254 = arith.addf %248, %253 : vector<8x256xf32>
    %255 = vector.broadcast %101 : f32 to vector<8x256xf32>
    %256 = arith.mulf %255, %205 : vector<8x256xf32>
    %257 = arith.addf %251, %256 : vector<8x256xf32>
    %258 = arith.mulf %254, %257 : vector<8x256xf32>
    %259 = arith.addf %165, %258 : vector<8x256xf32>
    %260 = vector.broadcast %30 : f32 to vector<8x256xf32>
    %261 = arith.mulf %260, %190 : vector<8x256xf32>
    %262 = vector.broadcast %102 : f32 to vector<8x256xf32>
    %263 = arith.mulf %262, %190 : vector<8x256xf32>
    %264 = vector.broadcast %31 : f32 to vector<8x256xf32>
    %265 = arith.mulf %264, %193 : vector<8x256xf32>
    %266 = arith.addf %261, %265 : vector<8x256xf32>
    %267 = vector.broadcast %103 : f32 to vector<8x256xf32>
    %268 = arith.mulf %267, %193 : vector<8x256xf32>
    %269 = arith.addf %263, %268 : vector<8x256xf32>
    %270 = vector.broadcast %32 : f32 to vector<8x256xf32>
    %271 = arith.mulf %270, %196 : vector<8x256xf32>
    %272 = arith.addf %266, %271 : vector<8x256xf32>
    %273 = vector.broadcast %104 : f32 to vector<8x256xf32>
    %274 = arith.mulf %273, %196 : vector<8x256xf32>
    %275 = arith.addf %269, %274 : vector<8x256xf32>
    %276 = vector.broadcast %33 : f32 to vector<8x256xf32>
    %277 = arith.mulf %276, %180 : vector<8x256xf32>
    %278 = arith.addf %272, %277 : vector<8x256xf32>
    %279 = vector.broadcast %105 : f32 to vector<8x256xf32>
    %280 = arith.mulf %279, %180 : vector<8x256xf32>
    %281 = arith.addf %275, %280 : vector<8x256xf32>
    %282 = vector.broadcast %34 : f32 to vector<8x256xf32>
    %283 = arith.mulf %282, %173 : vector<8x256xf32>
    %284 = arith.addf %278, %283 : vector<8x256xf32>
    %285 = vector.broadcast %106 : f32 to vector<8x256xf32>
    %286 = arith.mulf %285, %173 : vector<8x256xf32>
    %287 = arith.addf %281, %286 : vector<8x256xf32>
    %288 = vector.broadcast %35 : f32 to vector<8x256xf32>
    %289 = arith.mulf %288, %187 : vector<8x256xf32>
    %290 = arith.addf %284, %289 : vector<8x256xf32>
    %291 = vector.broadcast %107 : f32 to vector<8x256xf32>
    %292 = arith.mulf %291, %187 : vector<8x256xf32>
    %293 = arith.addf %287, %292 : vector<8x256xf32>
    %294 = vector.broadcast %36 : f32 to vector<8x256xf32>
    %295 = arith.mulf %294, %199 : vector<8x256xf32>
    %296 = arith.addf %290, %295 : vector<8x256xf32>
    %297 = vector.broadcast %108 : f32 to vector<8x256xf32>
    %298 = arith.mulf %297, %199 : vector<8x256xf32>
    %299 = arith.addf %293, %298 : vector<8x256xf32>
    %300 = vector.broadcast %37 : f32 to vector<8x256xf32>
    %301 = arith.mulf %300, %202 : vector<8x256xf32>
    %302 = arith.addf %296, %301 : vector<8x256xf32>
    %303 = vector.broadcast %109 : f32 to vector<8x256xf32>
    %304 = arith.mulf %303, %202 : vector<8x256xf32>
    %305 = arith.addf %299, %304 : vector<8x256xf32>
    %306 = vector.broadcast %38 : f32 to vector<8x256xf32>
    %307 = arith.mulf %306, %205 : vector<8x256xf32>
    %308 = arith.addf %302, %307 : vector<8x256xf32>
    %309 = vector.broadcast %110 : f32 to vector<8x256xf32>
    %310 = arith.mulf %309, %205 : vector<8x256xf32>
    %311 = arith.addf %305, %310 : vector<8x256xf32>
    %312 = arith.mulf %308, %311 : vector<8x256xf32>
    %313 = arith.addf %166, %312 : vector<8x256xf32>
    %314 = vector.broadcast %39 : f32 to vector<8x256xf32>
    %315 = arith.mulf %314, %190 : vector<8x256xf32>
    %316 = vector.broadcast %111 : f32 to vector<8x256xf32>
    %317 = arith.mulf %316, %190 : vector<8x256xf32>
    %318 = vector.broadcast %40 : f32 to vector<8x256xf32>
    %319 = arith.mulf %318, %193 : vector<8x256xf32>
    %320 = arith.addf %315, %319 : vector<8x256xf32>
    %321 = vector.broadcast %112 : f32 to vector<8x256xf32>
    %322 = arith.mulf %321, %193 : vector<8x256xf32>
    %323 = arith.addf %317, %322 : vector<8x256xf32>
    %324 = vector.broadcast %41 : f32 to vector<8x256xf32>
    %325 = arith.mulf %324, %196 : vector<8x256xf32>
    %326 = arith.addf %320, %325 : vector<8x256xf32>
    %327 = vector.broadcast %113 : f32 to vector<8x256xf32>
    %328 = arith.mulf %327, %196 : vector<8x256xf32>
    %329 = arith.addf %323, %328 : vector<8x256xf32>
    %330 = vector.broadcast %42 : f32 to vector<8x256xf32>
    %331 = arith.mulf %330, %180 : vector<8x256xf32>
    %332 = arith.addf %326, %331 : vector<8x256xf32>
    %333 = vector.broadcast %114 : f32 to vector<8x256xf32>
    %334 = arith.mulf %333, %180 : vector<8x256xf32>
    %335 = arith.addf %329, %334 : vector<8x256xf32>
    %336 = vector.broadcast %43 : f32 to vector<8x256xf32>
    %337 = arith.mulf %336, %173 : vector<8x256xf32>
    %338 = arith.addf %332, %337 : vector<8x256xf32>
    %339 = vector.broadcast %115 : f32 to vector<8x256xf32>
    %340 = arith.mulf %339, %173 : vector<8x256xf32>
    %341 = arith.addf %335, %340 : vector<8x256xf32>
    %342 = vector.broadcast %44 : f32 to vector<8x256xf32>
    %343 = arith.mulf %342, %187 : vector<8x256xf32>
    %344 = arith.addf %338, %343 : vector<8x256xf32>
    %345 = vector.broadcast %116 : f32 to vector<8x256xf32>
    %346 = arith.mulf %345, %187 : vector<8x256xf32>
    %347 = arith.addf %341, %346 : vector<8x256xf32>
    %348 = vector.broadcast %45 : f32 to vector<8x256xf32>
    %349 = arith.mulf %348, %199 : vector<8x256xf32>
    %350 = arith.addf %344, %349 : vector<8x256xf32>
    %351 = vector.broadcast %117 : f32 to vector<8x256xf32>
    %352 = arith.mulf %351, %199 : vector<8x256xf32>
    %353 = arith.addf %347, %352 : vector<8x256xf32>
    %354 = vector.broadcast %46 : f32 to vector<8x256xf32>
    %355 = arith.mulf %354, %202 : vector<8x256xf32>
    %356 = arith.addf %350, %355 : vector<8x256xf32>
    %357 = vector.broadcast %118 : f32 to vector<8x256xf32>
    %358 = arith.mulf %357, %202 : vector<8x256xf32>
    %359 = arith.addf %353, %358 : vector<8x256xf32>
    %360 = vector.broadcast %47 : f32 to vector<8x256xf32>
    %361 = arith.mulf %360, %205 : vector<8x256xf32>
    %362 = arith.addf %356, %361 : vector<8x256xf32>
    %363 = vector.broadcast %119 : f32 to vector<8x256xf32>
    %364 = arith.mulf %363, %205 : vector<8x256xf32>
    %365 = arith.addf %359, %364 : vector<8x256xf32>
    %366 = arith.mulf %362, %365 : vector<8x256xf32>
    %367 = arith.addf %167, %366 : vector<8x256xf32>
    %368 = vector.broadcast %48 : f32 to vector<8x256xf32>
    %369 = arith.mulf %368, %190 : vector<8x256xf32>
    %370 = vector.broadcast %120 : f32 to vector<8x256xf32>
    %371 = arith.mulf %370, %190 : vector<8x256xf32>
    %372 = vector.broadcast %49 : f32 to vector<8x256xf32>
    %373 = arith.mulf %372, %193 : vector<8x256xf32>
    %374 = arith.addf %369, %373 : vector<8x256xf32>
    %375 = vector.broadcast %121 : f32 to vector<8x256xf32>
    %376 = arith.mulf %375, %193 : vector<8x256xf32>
    %377 = arith.addf %371, %376 : vector<8x256xf32>
    %378 = vector.broadcast %50 : f32 to vector<8x256xf32>
    %379 = arith.mulf %378, %196 : vector<8x256xf32>
    %380 = arith.addf %374, %379 : vector<8x256xf32>
    %381 = vector.broadcast %122 : f32 to vector<8x256xf32>
    %382 = arith.mulf %381, %196 : vector<8x256xf32>
    %383 = arith.addf %377, %382 : vector<8x256xf32>
    %384 = vector.broadcast %51 : f32 to vector<8x256xf32>
    %385 = arith.mulf %384, %180 : vector<8x256xf32>
    %386 = arith.addf %380, %385 : vector<8x256xf32>
    %387 = vector.broadcast %123 : f32 to vector<8x256xf32>
    %388 = arith.mulf %387, %180 : vector<8x256xf32>
    %389 = arith.addf %383, %388 : vector<8x256xf32>
    %390 = vector.broadcast %52 : f32 to vector<8x256xf32>
    %391 = arith.mulf %390, %173 : vector<8x256xf32>
    %392 = arith.addf %386, %391 : vector<8x256xf32>
    %393 = vector.broadcast %124 : f32 to vector<8x256xf32>
    %394 = arith.mulf %393, %173 : vector<8x256xf32>
    %395 = arith.addf %389, %394 : vector<8x256xf32>
    %396 = vector.broadcast %53 : f32 to vector<8x256xf32>
    %397 = arith.mulf %396, %187 : vector<8x256xf32>
    %398 = arith.addf %392, %397 : vector<8x256xf32>
    %399 = vector.broadcast %125 : f32 to vector<8x256xf32>
    %400 = arith.mulf %399, %187 : vector<8x256xf32>
    %401 = arith.addf %395, %400 : vector<8x256xf32>
    %402 = vector.broadcast %54 : f32 to vector<8x256xf32>
    %403 = arith.mulf %402, %199 : vector<8x256xf32>
    %404 = arith.addf %398, %403 : vector<8x256xf32>
    %405 = vector.broadcast %126 : f32 to vector<8x256xf32>
    %406 = arith.mulf %405, %199 : vector<8x256xf32>
    %407 = arith.addf %401, %406 : vector<8x256xf32>
    %408 = vector.broadcast %55 : f32 to vector<8x256xf32>
    %409 = arith.mulf %408, %202 : vector<8x256xf32>
    %410 = arith.addf %404, %409 : vector<8x256xf32>
    %411 = vector.broadcast %127 : f32 to vector<8x256xf32>
    %412 = arith.mulf %411, %202 : vector<8x256xf32>
    %413 = arith.addf %407, %412 : vector<8x256xf32>
    %414 = vector.broadcast %56 : f32 to vector<8x256xf32>
    %415 = arith.mulf %414, %205 : vector<8x256xf32>
    %416 = arith.addf %410, %415 : vector<8x256xf32>
    %417 = vector.broadcast %128 : f32 to vector<8x256xf32>
    %418 = arith.mulf %417, %205 : vector<8x256xf32>
    %419 = arith.addf %413, %418 : vector<8x256xf32>
    %420 = arith.mulf %416, %419 : vector<8x256xf32>
    %421 = arith.addf %168, %420 : vector<8x256xf32>
    %422 = vector.broadcast %57 : f32 to vector<8x256xf32>
    %423 = arith.mulf %422, %190 : vector<8x256xf32>
    %424 = vector.broadcast %129 : f32 to vector<8x256xf32>
    %425 = arith.mulf %424, %190 : vector<8x256xf32>
    %426 = vector.broadcast %58 : f32 to vector<8x256xf32>
    %427 = arith.mulf %426, %193 : vector<8x256xf32>
    %428 = arith.addf %423, %427 : vector<8x256xf32>
    %429 = vector.broadcast %130 : f32 to vector<8x256xf32>
    %430 = arith.mulf %429, %193 : vector<8x256xf32>
    %431 = arith.addf %425, %430 : vector<8x256xf32>
    %432 = vector.broadcast %59 : f32 to vector<8x256xf32>
    %433 = arith.mulf %432, %196 : vector<8x256xf32>
    %434 = arith.addf %428, %433 : vector<8x256xf32>
    %435 = vector.broadcast %131 : f32 to vector<8x256xf32>
    %436 = arith.mulf %435, %196 : vector<8x256xf32>
    %437 = arith.addf %431, %436 : vector<8x256xf32>
    %438 = vector.broadcast %60 : f32 to vector<8x256xf32>
    %439 = arith.mulf %438, %180 : vector<8x256xf32>
    %440 = arith.addf %434, %439 : vector<8x256xf32>
    %441 = vector.broadcast %132 : f32 to vector<8x256xf32>
    %442 = arith.mulf %441, %180 : vector<8x256xf32>
    %443 = arith.addf %437, %442 : vector<8x256xf32>
    %444 = vector.broadcast %61 : f32 to vector<8x256xf32>
    %445 = arith.mulf %444, %173 : vector<8x256xf32>
    %446 = arith.addf %440, %445 : vector<8x256xf32>
    %447 = vector.broadcast %133 : f32 to vector<8x256xf32>
    %448 = arith.mulf %447, %173 : vector<8x256xf32>
    %449 = arith.addf %443, %448 : vector<8x256xf32>
    %450 = vector.broadcast %62 : f32 to vector<8x256xf32>
    %451 = arith.mulf %450, %187 : vector<8x256xf32>
    %452 = arith.addf %446, %451 : vector<8x256xf32>
    %453 = vector.broadcast %134 : f32 to vector<8x256xf32>
    %454 = arith.mulf %453, %187 : vector<8x256xf32>
    %455 = arith.addf %449, %454 : vector<8x256xf32>
    %456 = vector.broadcast %63 : f32 to vector<8x256xf32>
    %457 = arith.mulf %456, %199 : vector<8x256xf32>
    %458 = arith.addf %452, %457 : vector<8x256xf32>
    %459 = vector.broadcast %135 : f32 to vector<8x256xf32>
    %460 = arith.mulf %459, %199 : vector<8x256xf32>
    %461 = arith.addf %455, %460 : vector<8x256xf32>
    %462 = vector.broadcast %64 : f32 to vector<8x256xf32>
    %463 = arith.mulf %462, %202 : vector<8x256xf32>
    %464 = arith.addf %458, %463 : vector<8x256xf32>
    %465 = vector.broadcast %136 : f32 to vector<8x256xf32>
    %466 = arith.mulf %465, %202 : vector<8x256xf32>
    %467 = arith.addf %461, %466 : vector<8x256xf32>
    %468 = vector.broadcast %65 : f32 to vector<8x256xf32>
    %469 = arith.mulf %468, %205 : vector<8x256xf32>
    %470 = arith.addf %464, %469 : vector<8x256xf32>
    %471 = vector.broadcast %137 : f32 to vector<8x256xf32>
    %472 = arith.mulf %471, %205 : vector<8x256xf32>
    %473 = arith.addf %467, %472 : vector<8x256xf32>
    %474 = arith.mulf %470, %473 : vector<8x256xf32>
    %475 = arith.addf %169, %474 : vector<8x256xf32>
    %476 = vector.broadcast %66 : f32 to vector<8x256xf32>
    %477 = arith.mulf %476, %190 : vector<8x256xf32>
    %478 = vector.broadcast %138 : f32 to vector<8x256xf32>
    %479 = arith.mulf %478, %190 : vector<8x256xf32>
    %480 = vector.broadcast %67 : f32 to vector<8x256xf32>
    %481 = arith.mulf %480, %193 : vector<8x256xf32>
    %482 = arith.addf %477, %481 : vector<8x256xf32>
    %483 = vector.broadcast %139 : f32 to vector<8x256xf32>
    %484 = arith.mulf %483, %193 : vector<8x256xf32>
    %485 = arith.addf %479, %484 : vector<8x256xf32>
    %486 = vector.broadcast %68 : f32 to vector<8x256xf32>
    %487 = arith.mulf %486, %196 : vector<8x256xf32>
    %488 = arith.addf %482, %487 : vector<8x256xf32>
    %489 = vector.broadcast %140 : f32 to vector<8x256xf32>
    %490 = arith.mulf %489, %196 : vector<8x256xf32>
    %491 = arith.addf %485, %490 : vector<8x256xf32>
    %492 = vector.broadcast %69 : f32 to vector<8x256xf32>
    %493 = arith.mulf %492, %180 : vector<8x256xf32>
    %494 = arith.addf %488, %493 : vector<8x256xf32>
    %495 = vector.broadcast %141 : f32 to vector<8x256xf32>
    %496 = arith.mulf %495, %180 : vector<8x256xf32>
    %497 = arith.addf %491, %496 : vector<8x256xf32>
    %498 = vector.broadcast %70 : f32 to vector<8x256xf32>
    %499 = arith.mulf %498, %173 : vector<8x256xf32>
    %500 = arith.addf %494, %499 : vector<8x256xf32>
    %501 = vector.broadcast %142 : f32 to vector<8x256xf32>
    %502 = arith.mulf %501, %173 : vector<8x256xf32>
    %503 = arith.addf %497, %502 : vector<8x256xf32>
    %504 = vector.broadcast %71 : f32 to vector<8x256xf32>
    %505 = arith.mulf %504, %187 : vector<8x256xf32>
    %506 = arith.addf %500, %505 : vector<8x256xf32>
    %507 = vector.broadcast %143 : f32 to vector<8x256xf32>
    %508 = arith.mulf %507, %187 : vector<8x256xf32>
    %509 = arith.addf %503, %508 : vector<8x256xf32>
    %510 = vector.broadcast %72 : f32 to vector<8x256xf32>
    %511 = arith.mulf %510, %199 : vector<8x256xf32>
    %512 = arith.addf %506, %511 : vector<8x256xf32>
    %513 = vector.broadcast %144 : f32 to vector<8x256xf32>
    %514 = arith.mulf %513, %199 : vector<8x256xf32>
    %515 = arith.addf %509, %514 : vector<8x256xf32>
    %516 = vector.broadcast %73 : f32 to vector<8x256xf32>
    %517 = arith.mulf %516, %202 : vector<8x256xf32>
    %518 = arith.addf %512, %517 : vector<8x256xf32>
    %519 = vector.broadcast %145 : f32 to vector<8x256xf32>
    %520 = arith.mulf %519, %202 : vector<8x256xf32>
    %521 = arith.addf %515, %520 : vector<8x256xf32>
    %522 = vector.broadcast %74 : f32 to vector<8x256xf32>
    %523 = arith.mulf %522, %205 : vector<8x256xf32>
    %524 = arith.addf %518, %523 : vector<8x256xf32>
    %525 = vector.broadcast %146 : f32 to vector<8x256xf32>
    %526 = arith.mulf %525, %205 : vector<8x256xf32>
    %527 = arith.addf %521, %526 : vector<8x256xf32>
    %528 = arith.mulf %524, %527 : vector<8x256xf32>
    %529 = arith.addf %170, %528 : vector<8x256xf32>
    %530 = vector.broadcast %75 : f32 to vector<8x256xf32>
    %531 = arith.mulf %530, %190 : vector<8x256xf32>
    %532 = vector.broadcast %147 : f32 to vector<8x256xf32>
    %533 = arith.mulf %532, %190 : vector<8x256xf32>
    %534 = vector.broadcast %76 : f32 to vector<8x256xf32>
    %535 = arith.mulf %534, %193 : vector<8x256xf32>
    %536 = arith.addf %531, %535 : vector<8x256xf32>
    %537 = vector.broadcast %148 : f32 to vector<8x256xf32>
    %538 = arith.mulf %537, %193 : vector<8x256xf32>
    %539 = arith.addf %533, %538 : vector<8x256xf32>
    %540 = vector.broadcast %77 : f32 to vector<8x256xf32>
    %541 = arith.mulf %540, %196 : vector<8x256xf32>
    %542 = arith.addf %536, %541 : vector<8x256xf32>
    %543 = vector.broadcast %149 : f32 to vector<8x256xf32>
    %544 = arith.mulf %543, %196 : vector<8x256xf32>
    %545 = arith.addf %539, %544 : vector<8x256xf32>
    %546 = vector.broadcast %78 : f32 to vector<8x256xf32>
    %547 = arith.mulf %546, %180 : vector<8x256xf32>
    %548 = arith.addf %542, %547 : vector<8x256xf32>
    %549 = vector.broadcast %150 : f32 to vector<8x256xf32>
    %550 = arith.mulf %549, %180 : vector<8x256xf32>
    %551 = arith.addf %545, %550 : vector<8x256xf32>
    %552 = vector.broadcast %79 : f32 to vector<8x256xf32>
    %553 = arith.mulf %552, %173 : vector<8x256xf32>
    %554 = arith.addf %548, %553 : vector<8x256xf32>
    %555 = vector.broadcast %151 : f32 to vector<8x256xf32>
    %556 = arith.mulf %555, %173 : vector<8x256xf32>
    %557 = arith.addf %551, %556 : vector<8x256xf32>
    %558 = vector.broadcast %80 : f32 to vector<8x256xf32>
    %559 = arith.mulf %558, %187 : vector<8x256xf32>
    %560 = arith.addf %554, %559 : vector<8x256xf32>
    %561 = vector.broadcast %152 : f32 to vector<8x256xf32>
    %562 = arith.mulf %561, %187 : vector<8x256xf32>
    %563 = arith.addf %557, %562 : vector<8x256xf32>
    %564 = vector.broadcast %81 : f32 to vector<8x256xf32>
    %565 = arith.mulf %564, %199 : vector<8x256xf32>
    %566 = arith.addf %560, %565 : vector<8x256xf32>
    %567 = vector.broadcast %153 : f32 to vector<8x256xf32>
    %568 = arith.mulf %567, %199 : vector<8x256xf32>
    %569 = arith.addf %563, %568 : vector<8x256xf32>
    %570 = vector.broadcast %82 : f32 to vector<8x256xf32>
    %571 = arith.mulf %570, %202 : vector<8x256xf32>
    %572 = arith.addf %566, %571 : vector<8x256xf32>
    %573 = vector.broadcast %154 : f32 to vector<8x256xf32>
    %574 = arith.mulf %573, %202 : vector<8x256xf32>
    %575 = arith.addf %569, %574 : vector<8x256xf32>
    %576 = vector.broadcast %83 : f32 to vector<8x256xf32>
    %577 = arith.mulf %576, %205 : vector<8x256xf32>
    %578 = arith.addf %572, %577 : vector<8x256xf32>
    %579 = vector.broadcast %155 : f32 to vector<8x256xf32>
    %580 = arith.mulf %579, %205 : vector<8x256xf32>
    %581 = arith.addf %575, %580 : vector<8x256xf32>
    %582 = arith.mulf %578, %581 : vector<8x256xf32>
    %583 = arith.addf %171, %582 : vector<8x256xf32>
    %584 = vector.broadcast %84 : f32 to vector<8x256xf32>
    %585 = arith.mulf %584, %190 : vector<8x256xf32>
    %586 = vector.broadcast %156 : f32 to vector<8x256xf32>
    %587 = arith.mulf %586, %190 : vector<8x256xf32>
    %588 = vector.broadcast %85 : f32 to vector<8x256xf32>
    %589 = arith.mulf %588, %193 : vector<8x256xf32>
    %590 = arith.addf %585, %589 : vector<8x256xf32>
    %591 = vector.broadcast %157 : f32 to vector<8x256xf32>
    %592 = arith.mulf %591, %193 : vector<8x256xf32>
    %593 = arith.addf %587, %592 : vector<8x256xf32>
    %594 = vector.broadcast %86 : f32 to vector<8x256xf32>
    %595 = arith.mulf %594, %196 : vector<8x256xf32>
    %596 = arith.addf %590, %595 : vector<8x256xf32>
    %597 = vector.broadcast %158 : f32 to vector<8x256xf32>
    %598 = arith.mulf %597, %196 : vector<8x256xf32>
    %599 = arith.addf %593, %598 : vector<8x256xf32>
    %600 = vector.broadcast %87 : f32 to vector<8x256xf32>
    %601 = arith.mulf %600, %180 : vector<8x256xf32>
    %602 = arith.addf %596, %601 : vector<8x256xf32>
    %603 = vector.broadcast %159 : f32 to vector<8x256xf32>
    %604 = arith.mulf %603, %180 : vector<8x256xf32>
    %605 = arith.addf %599, %604 : vector<8x256xf32>
    %606 = vector.broadcast %88 : f32 to vector<8x256xf32>
    %607 = arith.mulf %606, %173 : vector<8x256xf32>
    %608 = arith.addf %602, %607 : vector<8x256xf32>
    %609 = vector.broadcast %160 : f32 to vector<8x256xf32>
    %610 = arith.mulf %609, %173 : vector<8x256xf32>
    %611 = arith.addf %605, %610 : vector<8x256xf32>
    %612 = vector.broadcast %89 : f32 to vector<8x256xf32>
    %613 = arith.mulf %612, %187 : vector<8x256xf32>
    %614 = arith.addf %608, %613 : vector<8x256xf32>
    %615 = vector.broadcast %161 : f32 to vector<8x256xf32>
    %616 = arith.mulf %615, %187 : vector<8x256xf32>
    %617 = arith.addf %611, %616 : vector<8x256xf32>
    %618 = vector.broadcast %90 : f32 to vector<8x256xf32>
    %619 = arith.mulf %618, %199 : vector<8x256xf32>
    %620 = arith.addf %614, %619 : vector<8x256xf32>
    %621 = vector.broadcast %162 : f32 to vector<8x256xf32>
    %622 = arith.mulf %621, %199 : vector<8x256xf32>
    %623 = arith.addf %617, %622 : vector<8x256xf32>
    %624 = vector.broadcast %91 : f32 to vector<8x256xf32>
    %625 = arith.mulf %624, %202 : vector<8x256xf32>
    %626 = arith.addf %620, %625 : vector<8x256xf32>
    %627 = vector.broadcast %163 : f32 to vector<8x256xf32>
    %628 = arith.mulf %627, %202 : vector<8x256xf32>
    %629 = arith.addf %623, %628 : vector<8x256xf32>
    %630 = vector.broadcast %92 : f32 to vector<8x256xf32>
    %631 = arith.mulf %630, %205 : vector<8x256xf32>
    %632 = arith.addf %626, %631 : vector<8x256xf32>
    %633 = vector.broadcast %164 : f32 to vector<8x256xf32>
    %634 = arith.mulf %633, %205 : vector<8x256xf32>
    %635 = arith.addf %629, %634 : vector<8x256xf32>
    %636 = arith.mulf %632, %635 : vector<8x256xf32>
    %637 = arith.addf %172, %636 : vector<8x256xf32>
    %c0_285 = arith.constant 0 : index
    %c256 = arith.constant 256 : index
    %638 = vector.load %arg2[%c0_285, %c256] : memref<8x768xf32, #tpu.memory_space<vmem>>, vector<8x256xf32>
    %639 = vector.extract_strided_slice %638 {offsets = [0, 255], sizes = [8, 1], strides = [1, 1]} : vector<8x256xf32> to vector<8x1xf32>
    %640 = vector.extract_strided_slice %638 {offsets = [0, 0], sizes = [8, 255], strides = [1, 1]} : vector<8x256xf32> to vector<8x255xf32>
    %641 = tpu.concatenate %639, %640 in 1 : vector<8x1xf32>, vector<8x255xf32> -> vector<8x256xf32>
    %642 = vector.extract_strided_slice %638 {offsets = [0, 15], sizes = [8, 241], strides = [1, 1]} : vector<8x256xf32> to vector<8x241xf32>
    %643 = vector.extract_strided_slice %638 {offsets = [0, 0], sizes = [8, 15], strides = [1, 1]} : vector<8x256xf32> to vector<8x15xf32>
    %644 = tpu.concatenate %642, %643 in 1 : vector<8x241xf32>, vector<8x15xf32> -> vector<8x256xf32>
    %645 = arith.select %18, %644, %641 : vector<8x256xi1>, vector<8x256xf32>
    %646 = vector.extract_strided_slice %638 {offsets = [0, 1], sizes = [8, 255], strides = [1, 1]} : vector<8x256xf32> to vector<8x255xf32>
    %647 = vector.extract_strided_slice %638 {offsets = [0, 0], sizes = [8, 1], strides = [1, 1]} : vector<8x256xf32> to vector<8x1xf32>
    %648 = tpu.concatenate %646, %647 in 1 : vector<8x255xf32>, vector<8x1xf32> -> vector<8x256xf32>
    %649 = vector.extract_strided_slice %638 {offsets = [0, 241], sizes = [8, 15], strides = [1, 1]} : vector<8x256xf32> to vector<8x15xf32>
    %650 = vector.extract_strided_slice %638 {offsets = [0, 0], sizes = [8, 241], strides = [1, 1]} : vector<8x256xf32> to vector<8x241xf32>
    %651 = tpu.concatenate %649, %650 in 1 : vector<8x15xf32>, vector<8x241xf32> -> vector<8x256xf32>
    %652 = arith.select %20, %651, %648 : vector<8x256xi1>, vector<8x256xf32>
    %653 = vector.extract_strided_slice %645 {offsets = [0, 240], sizes = [8, 16], strides = [1, 1]} : vector<8x256xf32> to vector<8x16xf32>
    %654 = vector.extract_strided_slice %645 {offsets = [0, 0], sizes = [8, 240], strides = [1, 1]} : vector<8x256xf32> to vector<8x240xf32>
    %655 = tpu.concatenate %653, %654 in 1 : vector<8x16xf32>, vector<8x240xf32> -> vector<8x256xf32>
    %656 = vector.extract_strided_slice %638 {offsets = [0, 240], sizes = [8, 16], strides = [1, 1]} : vector<8x256xf32> to vector<8x16xf32>
    %657 = vector.extract_strided_slice %638 {offsets = [0, 0], sizes = [8, 240], strides = [1, 1]} : vector<8x256xf32> to vector<8x240xf32>
    %658 = tpu.concatenate %656, %657 in 1 : vector<8x16xf32>, vector<8x240xf32> -> vector<8x256xf32>
    %659 = vector.extract_strided_slice %652 {offsets = [0, 240], sizes = [8, 16], strides = [1, 1]} : vector<8x256xf32> to vector<8x16xf32>
    %660 = vector.extract_strided_slice %652 {offsets = [0, 0], sizes = [8, 240], strides = [1, 1]} : vector<8x256xf32> to vector<8x240xf32>
    %661 = tpu.concatenate %659, %660 in 1 : vector<8x16xf32>, vector<8x240xf32> -> vector<8x256xf32>
    %662 = vector.extract_strided_slice %645 {offsets = [0, 16], sizes = [8, 240], strides = [1, 1]} : vector<8x256xf32> to vector<8x240xf32>
    %663 = vector.extract_strided_slice %645 {offsets = [0, 0], sizes = [8, 16], strides = [1, 1]} : vector<8x256xf32> to vector<8x16xf32>
    %664 = tpu.concatenate %662, %663 in 1 : vector<8x240xf32>, vector<8x16xf32> -> vector<8x256xf32>
    %665 = vector.extract_strided_slice %638 {offsets = [0, 16], sizes = [8, 240], strides = [1, 1]} : vector<8x256xf32> to vector<8x240xf32>
    %666 = vector.extract_strided_slice %638 {offsets = [0, 0], sizes = [8, 16], strides = [1, 1]} : vector<8x256xf32> to vector<8x16xf32>
    %667 = tpu.concatenate %665, %666 in 1 : vector<8x240xf32>, vector<8x16xf32> -> vector<8x256xf32>
    %668 = vector.extract_strided_slice %652 {offsets = [0, 16], sizes = [8, 240], strides = [1, 1]} : vector<8x256xf32> to vector<8x240xf32>
    %669 = vector.extract_strided_slice %652 {offsets = [0, 0], sizes = [8, 16], strides = [1, 1]} : vector<8x256xf32> to vector<8x16xf32>
    %670 = tpu.concatenate %668, %669 in 1 : vector<8x240xf32>, vector<8x16xf32> -> vector<8x256xf32>
    %671 = vector.broadcast %21 : f32 to vector<8x256xf32>
    %672 = arith.mulf %671, %655 : vector<8x256xf32>
    %673 = vector.broadcast %93 : f32 to vector<8x256xf32>
    %674 = arith.mulf %673, %655 : vector<8x256xf32>
    %675 = vector.broadcast %22 : f32 to vector<8x256xf32>
    %676 = arith.mulf %675, %658 : vector<8x256xf32>
    %677 = arith.addf %672, %676 : vector<8x256xf32>
    %678 = vector.broadcast %94 : f32 to vector<8x256xf32>
    %679 = arith.mulf %678, %658 : vector<8x256xf32>
    %680 = arith.addf %674, %679 : vector<8x256xf32>
    %681 = vector.broadcast %23 : f32 to vector<8x256xf32>
    %682 = arith.mulf %681, %661 : vector<8x256xf32>
    %683 = arith.addf %677, %682 : vector<8x256xf32>
    %684 = vector.broadcast %95 : f32 to vector<8x256xf32>
    %685 = arith.mulf %684, %661 : vector<8x256xf32>
    %686 = arith.addf %680, %685 : vector<8x256xf32>
    %687 = vector.broadcast %24 : f32 to vector<8x256xf32>
    %688 = arith.mulf %687, %645 : vector<8x256xf32>
    %689 = arith.addf %683, %688 : vector<8x256xf32>
    %690 = vector.broadcast %96 : f32 to vector<8x256xf32>
    %691 = arith.mulf %690, %645 : vector<8x256xf32>
    %692 = arith.addf %686, %691 : vector<8x256xf32>
    %693 = vector.broadcast %25 : f32 to vector<8x256xf32>
    %694 = arith.mulf %693, %638 : vector<8x256xf32>
    %695 = arith.addf %689, %694 : vector<8x256xf32>
    %696 = vector.broadcast %97 : f32 to vector<8x256xf32>
    %697 = arith.mulf %696, %638 : vector<8x256xf32>
    %698 = arith.addf %692, %697 : vector<8x256xf32>
    %699 = vector.broadcast %26 : f32 to vector<8x256xf32>
    %700 = arith.mulf %699, %652 : vector<8x256xf32>
    %701 = arith.addf %695, %700 : vector<8x256xf32>
    %702 = vector.broadcast %98 : f32 to vector<8x256xf32>
    %703 = arith.mulf %702, %652 : vector<8x256xf32>
    %704 = arith.addf %698, %703 : vector<8x256xf32>
    %705 = vector.broadcast %27 : f32 to vector<8x256xf32>
    %706 = arith.mulf %705, %664 : vector<8x256xf32>
    %707 = arith.addf %701, %706 : vector<8x256xf32>
    %708 = vector.broadcast %99 : f32 to vector<8x256xf32>
    %709 = arith.mulf %708, %664 : vector<8x256xf32>
    %710 = arith.addf %704, %709 : vector<8x256xf32>
    %711 = vector.broadcast %28 : f32 to vector<8x256xf32>
    %712 = arith.mulf %711, %667 : vector<8x256xf32>
    %713 = arith.addf %707, %712 : vector<8x256xf32>
    %714 = vector.broadcast %100 : f32 to vector<8x256xf32>
    %715 = arith.mulf %714, %667 : vector<8x256xf32>
    %716 = arith.addf %710, %715 : vector<8x256xf32>
    %717 = vector.broadcast %29 : f32 to vector<8x256xf32>
    %718 = arith.mulf %717, %670 : vector<8x256xf32>
    %719 = arith.addf %713, %718 : vector<8x256xf32>
    %720 = vector.broadcast %101 : f32 to vector<8x256xf32>
    %721 = arith.mulf %720, %670 : vector<8x256xf32>
    %722 = arith.addf %716, %721 : vector<8x256xf32>
    %723 = arith.mulf %719, %722 : vector<8x256xf32>
    %724 = arith.addf %259, %723 : vector<8x256xf32>
    %725 = vector.broadcast %30 : f32 to vector<8x256xf32>
    %726 = arith.mulf %725, %655 : vector<8x256xf32>
    %727 = vector.broadcast %102 : f32 to vector<8x256xf32>
    %728 = arith.mulf %727, %655 : vector<8x256xf32>
    %729 = vector.broadcast %31 : f32 to vector<8x256xf32>
    %730 = arith.mulf %729, %658 : vector<8x256xf32>
    %731 = arith.addf %726, %730 : vector<8x256xf32>
    %732 = vector.broadcast %103 : f32 to vector<8x256xf32>
    %733 = arith.mulf %732, %658 : vector<8x256xf32>
    %734 = arith.addf %728, %733 : vector<8x256xf32>
    %735 = vector.broadcast %32 : f32 to vector<8x256xf32>
    %736 = arith.mulf %735, %661 : vector<8x256xf32>
    %737 = arith.addf %731, %736 : vector<8x256xf32>
    %738 = vector.broadcast %104 : f32 to vector<8x256xf32>
    %739 = arith.mulf %738, %661 : vector<8x256xf32>
    %740 = arith.addf %734, %739 : vector<8x256xf32>
    %741 = vector.broadcast %33 : f32 to vector<8x256xf32>
    %742 = arith.mulf %741, %645 : vector<8x256xf32>
    %743 = arith.addf %737, %742 : vector<8x256xf32>
    %744 = vector.broadcast %105 : f32 to vector<8x256xf32>
    %745 = arith.mulf %744, %645 : vector<8x256xf32>
    %746 = arith.addf %740, %745 : vector<8x256xf32>
    %747 = vector.broadcast %34 : f32 to vector<8x256xf32>
    %748 = arith.mulf %747, %638 : vector<8x256xf32>
    %749 = arith.addf %743, %748 : vector<8x256xf32>
    %750 = vector.broadcast %106 : f32 to vector<8x256xf32>
    %751 = arith.mulf %750, %638 : vector<8x256xf32>
    %752 = arith.addf %746, %751 : vector<8x256xf32>
    %753 = vector.broadcast %35 : f32 to vector<8x256xf32>
    %754 = arith.mulf %753, %652 : vector<8x256xf32>
    %755 = arith.addf %749, %754 : vector<8x256xf32>
    %756 = vector.broadcast %107 : f32 to vector<8x256xf32>
    %757 = arith.mulf %756, %652 : vector<8x256xf32>
    %758 = arith.addf %752, %757 : vector<8x256xf32>
    %759 = vector.broadcast %36 : f32 to vector<8x256xf32>
    %760 = arith.mulf %759, %664 : vector<8x256xf32>
    %761 = arith.addf %755, %760 : vector<8x256xf32>
    %762 = vector.broadcast %108 : f32 to vector<8x256xf32>
    %763 = arith.mulf %762, %664 : vector<8x256xf32>
    %764 = arith.addf %758, %763 : vector<8x256xf32>
    %765 = vector.broadcast %37 : f32 to vector<8x256xf32>
    %766 = arith.mulf %765, %667 : vector<8x256xf32>
    %767 = arith.addf %761, %766 : vector<8x256xf32>
    %768 = vector.broadcast %109 : f32 to vector<8x256xf32>
    %769 = arith.mulf %768, %667 : vector<8x256xf32>
    %770 = arith.addf %764, %769 : vector<8x256xf32>
    %771 = vector.broadcast %38 : f32 to vector<8x256xf32>
    %772 = arith.mulf %771, %670 : vector<8x256xf32>
    %773 = arith.addf %767, %772 : vector<8x256xf32>
    %774 = vector.broadcast %110 : f32 to vector<8x256xf32>
    %775 = arith.mulf %774, %670 : vector<8x256xf32>
    %776 = arith.addf %770, %775 : vector<8x256xf32>
    %777 = arith.mulf %773, %776 : vector<8x256xf32>
    %778 = arith.addf %313, %777 : vector<8x256xf32>
    %779 = vector.broadcast %39 : f32 to vector<8x256xf32>
    %780 = arith.mulf %779, %655 : vector<8x256xf32>
    %781 = vector.broadcast %111 : f32 to vector<8x256xf32>
    %782 = arith.mulf %781, %655 : vector<8x256xf32>
    %783 = vector.broadcast %40 : f32 to vector<8x256xf32>
    %784 = arith.mulf %783, %658 : vector<8x256xf32>
    %785 = arith.addf %780, %784 : vector<8x256xf32>
    %786 = vector.broadcast %112 : f32 to vector<8x256xf32>
    %787 = arith.mulf %786, %658 : vector<8x256xf32>
    %788 = arith.addf %782, %787 : vector<8x256xf32>
    %789 = vector.broadcast %41 : f32 to vector<8x256xf32>
    %790 = arith.mulf %789, %661 : vector<8x256xf32>
    %791 = arith.addf %785, %790 : vector<8x256xf32>
    %792 = vector.broadcast %113 : f32 to vector<8x256xf32>
    %793 = arith.mulf %792, %661 : vector<8x256xf32>
    %794 = arith.addf %788, %793 : vector<8x256xf32>
    %795 = vector.broadcast %42 : f32 to vector<8x256xf32>
    %796 = arith.mulf %795, %645 : vector<8x256xf32>
    %797 = arith.addf %791, %796 : vector<8x256xf32>
    %798 = vector.broadcast %114 : f32 to vector<8x256xf32>
    %799 = arith.mulf %798, %645 : vector<8x256xf32>
    %800 = arith.addf %794, %799 : vector<8x256xf32>
    %801 = vector.broadcast %43 : f32 to vector<8x256xf32>
    %802 = arith.mulf %801, %638 : vector<8x256xf32>
    %803 = arith.addf %797, %802 : vector<8x256xf32>
    %804 = vector.broadcast %115 : f32 to vector<8x256xf32>
    %805 = arith.mulf %804, %638 : vector<8x256xf32>
    %806 = arith.addf %800, %805 : vector<8x256xf32>
    %807 = vector.broadcast %44 : f32 to vector<8x256xf32>
    %808 = arith.mulf %807, %652 : vector<8x256xf32>
    %809 = arith.addf %803, %808 : vector<8x256xf32>
    %810 = vector.broadcast %116 : f32 to vector<8x256xf32>
    %811 = arith.mulf %810, %652 : vector<8x256xf32>
    %812 = arith.addf %806, %811 : vector<8x256xf32>
    %813 = vector.broadcast %45 : f32 to vector<8x256xf32>
    %814 = arith.mulf %813, %664 : vector<8x256xf32>
    %815 = arith.addf %809, %814 : vector<8x256xf32>
    %816 = vector.broadcast %117 : f32 to vector<8x256xf32>
    %817 = arith.mulf %816, %664 : vector<8x256xf32>
    %818 = arith.addf %812, %817 : vector<8x256xf32>
    %819 = vector.broadcast %46 : f32 to vector<8x256xf32>
    %820 = arith.mulf %819, %667 : vector<8x256xf32>
    %821 = arith.addf %815, %820 : vector<8x256xf32>
    %822 = vector.broadcast %118 : f32 to vector<8x256xf32>
    %823 = arith.mulf %822, %667 : vector<8x256xf32>
    %824 = arith.addf %818, %823 : vector<8x256xf32>
    %825 = vector.broadcast %47 : f32 to vector<8x256xf32>
    %826 = arith.mulf %825, %670 : vector<8x256xf32>
    %827 = arith.addf %821, %826 : vector<8x256xf32>
    %828 = vector.broadcast %119 : f32 to vector<8x256xf32>
    %829 = arith.mulf %828, %670 : vector<8x256xf32>
    %830 = arith.addf %824, %829 : vector<8x256xf32>
    %831 = arith.mulf %827, %830 : vector<8x256xf32>
    %832 = arith.addf %367, %831 : vector<8x256xf32>
    %833 = vector.broadcast %48 : f32 to vector<8x256xf32>
    %834 = arith.mulf %833, %655 : vector<8x256xf32>
    %835 = vector.broadcast %120 : f32 to vector<8x256xf32>
    %836 = arith.mulf %835, %655 : vector<8x256xf32>
    %837 = vector.broadcast %49 : f32 to vector<8x256xf32>
    %838 = arith.mulf %837, %658 : vector<8x256xf32>
    %839 = arith.addf %834, %838 : vector<8x256xf32>
    %840 = vector.broadcast %121 : f32 to vector<8x256xf32>
    %841 = arith.mulf %840, %658 : vector<8x256xf32>
    %842 = arith.addf %836, %841 : vector<8x256xf32>
    %843 = vector.broadcast %50 : f32 to vector<8x256xf32>
    %844 = arith.mulf %843, %661 : vector<8x256xf32>
    %845 = arith.addf %839, %844 : vector<8x256xf32>
    %846 = vector.broadcast %122 : f32 to vector<8x256xf32>
    %847 = arith.mulf %846, %661 : vector<8x256xf32>
    %848 = arith.addf %842, %847 : vector<8x256xf32>
    %849 = vector.broadcast %51 : f32 to vector<8x256xf32>
    %850 = arith.mulf %849, %645 : vector<8x256xf32>
    %851 = arith.addf %845, %850 : vector<8x256xf32>
    %852 = vector.broadcast %123 : f32 to vector<8x256xf32>
    %853 = arith.mulf %852, %645 : vector<8x256xf32>
    %854 = arith.addf %848, %853 : vector<8x256xf32>
    %855 = vector.broadcast %52 : f32 to vector<8x256xf32>
    %856 = arith.mulf %855, %638 : vector<8x256xf32>
    %857 = arith.addf %851, %856 : vector<8x256xf32>
    %858 = vector.broadcast %124 : f32 to vector<8x256xf32>
    %859 = arith.mulf %858, %638 : vector<8x256xf32>
    %860 = arith.addf %854, %859 : vector<8x256xf32>
    %861 = vector.broadcast %53 : f32 to vector<8x256xf32>
    %862 = arith.mulf %861, %652 : vector<8x256xf32>
    %863 = arith.addf %857, %862 : vector<8x256xf32>
    %864 = vector.broadcast %125 : f32 to vector<8x256xf32>
    %865 = arith.mulf %864, %652 : vector<8x256xf32>
    %866 = arith.addf %860, %865 : vector<8x256xf32>
    %867 = vector.broadcast %54 : f32 to vector<8x256xf32>
    %868 = arith.mulf %867, %664 : vector<8x256xf32>
    %869 = arith.addf %863, %868 : vector<8x256xf32>
    %870 = vector.broadcast %126 : f32 to vector<8x256xf32>
    %871 = arith.mulf %870, %664 : vector<8x256xf32>
    %872 = arith.addf %866, %871 : vector<8x256xf32>
    %873 = vector.broadcast %55 : f32 to vector<8x256xf32>
    %874 = arith.mulf %873, %667 : vector<8x256xf32>
    %875 = arith.addf %869, %874 : vector<8x256xf32>
    %876 = vector.broadcast %127 : f32 to vector<8x256xf32>
    %877 = arith.mulf %876, %667 : vector<8x256xf32>
    %878 = arith.addf %872, %877 : vector<8x256xf32>
    %879 = vector.broadcast %56 : f32 to vector<8x256xf32>
    %880 = arith.mulf %879, %670 : vector<8x256xf32>
    %881 = arith.addf %875, %880 : vector<8x256xf32>
    %882 = vector.broadcast %128 : f32 to vector<8x256xf32>
    %883 = arith.mulf %882, %670 : vector<8x256xf32>
    %884 = arith.addf %878, %883 : vector<8x256xf32>
    %885 = arith.mulf %881, %884 : vector<8x256xf32>
    %886 = arith.addf %421, %885 : vector<8x256xf32>
    %887 = vector.broadcast %57 : f32 to vector<8x256xf32>
    %888 = arith.mulf %887, %655 : vector<8x256xf32>
    %889 = vector.broadcast %129 : f32 to vector<8x256xf32>
    %890 = arith.mulf %889, %655 : vector<8x256xf32>
    %891 = vector.broadcast %58 : f32 to vector<8x256xf32>
    %892 = arith.mulf %891, %658 : vector<8x256xf32>
    %893 = arith.addf %888, %892 : vector<8x256xf32>
    %894 = vector.broadcast %130 : f32 to vector<8x256xf32>
    %895 = arith.mulf %894, %658 : vector<8x256xf32>
    %896 = arith.addf %890, %895 : vector<8x256xf32>
    %897 = vector.broadcast %59 : f32 to vector<8x256xf32>
    %898 = arith.mulf %897, %661 : vector<8x256xf32>
    %899 = arith.addf %893, %898 : vector<8x256xf32>
    %900 = vector.broadcast %131 : f32 to vector<8x256xf32>
    %901 = arith.mulf %900, %661 : vector<8x256xf32>
    %902 = arith.addf %896, %901 : vector<8x256xf32>
    %903 = vector.broadcast %60 : f32 to vector<8x256xf32>
    %904 = arith.mulf %903, %645 : vector<8x256xf32>
    %905 = arith.addf %899, %904 : vector<8x256xf32>
    %906 = vector.broadcast %132 : f32 to vector<8x256xf32>
    %907 = arith.mulf %906, %645 : vector<8x256xf32>
    %908 = arith.addf %902, %907 : vector<8x256xf32>
    %909 = vector.broadcast %61 : f32 to vector<8x256xf32>
    %910 = arith.mulf %909, %638 : vector<8x256xf32>
    %911 = arith.addf %905, %910 : vector<8x256xf32>
    %912 = vector.broadcast %133 : f32 to vector<8x256xf32>
    %913 = arith.mulf %912, %638 : vector<8x256xf32>
    %914 = arith.addf %908, %913 : vector<8x256xf32>
    %915 = vector.broadcast %62 : f32 to vector<8x256xf32>
    %916 = arith.mulf %915, %652 : vector<8x256xf32>
    %917 = arith.addf %911, %916 : vector<8x256xf32>
    %918 = vector.broadcast %134 : f32 to vector<8x256xf32>
    %919 = arith.mulf %918, %652 : vector<8x256xf32>
    %920 = arith.addf %914, %919 : vector<8x256xf32>
    %921 = vector.broadcast %63 : f32 to vector<8x256xf32>
    %922 = arith.mulf %921, %664 : vector<8x256xf32>
    %923 = arith.addf %917, %922 : vector<8x256xf32>
    %924 = vector.broadcast %135 : f32 to vector<8x256xf32>
    %925 = arith.mulf %924, %664 : vector<8x256xf32>
    %926 = arith.addf %920, %925 : vector<8x256xf32>
    %927 = vector.broadcast %64 : f32 to vector<8x256xf32>
    %928 = arith.mulf %927, %667 : vector<8x256xf32>
    %929 = arith.addf %923, %928 : vector<8x256xf32>
    %930 = vector.broadcast %136 : f32 to vector<8x256xf32>
    %931 = arith.mulf %930, %667 : vector<8x256xf32>
    %932 = arith.addf %926, %931 : vector<8x256xf32>
    %933 = vector.broadcast %65 : f32 to vector<8x256xf32>
    %934 = arith.mulf %933, %670 : vector<8x256xf32>
    %935 = arith.addf %929, %934 : vector<8x256xf32>
    %936 = vector.broadcast %137 : f32 to vector<8x256xf32>
    %937 = arith.mulf %936, %670 : vector<8x256xf32>
    %938 = arith.addf %932, %937 : vector<8x256xf32>
    %939 = arith.mulf %935, %938 : vector<8x256xf32>
    %940 = arith.addf %475, %939 : vector<8x256xf32>
    %941 = vector.broadcast %66 : f32 to vector<8x256xf32>
    %942 = arith.mulf %941, %655 : vector<8x256xf32>
    %943 = vector.broadcast %138 : f32 to vector<8x256xf32>
    %944 = arith.mulf %943, %655 : vector<8x256xf32>
    %945 = vector.broadcast %67 : f32 to vector<8x256xf32>
    %946 = arith.mulf %945, %658 : vector<8x256xf32>
    %947 = arith.addf %942, %946 : vector<8x256xf32>
    %948 = vector.broadcast %139 : f32 to vector<8x256xf32>
    %949 = arith.mulf %948, %658 : vector<8x256xf32>
    %950 = arith.addf %944, %949 : vector<8x256xf32>
    %951 = vector.broadcast %68 : f32 to vector<8x256xf32>
    %952 = arith.mulf %951, %661 : vector<8x256xf32>
    %953 = arith.addf %947, %952 : vector<8x256xf32>
    %954 = vector.broadcast %140 : f32 to vector<8x256xf32>
    %955 = arith.mulf %954, %661 : vector<8x256xf32>
    %956 = arith.addf %950, %955 : vector<8x256xf32>
    %957 = vector.broadcast %69 : f32 to vector<8x256xf32>
    %958 = arith.mulf %957, %645 : vector<8x256xf32>
    %959 = arith.addf %953, %958 : vector<8x256xf32>
    %960 = vector.broadcast %141 : f32 to vector<8x256xf32>
    %961 = arith.mulf %960, %645 : vector<8x256xf32>
    %962 = arith.addf %956, %961 : vector<8x256xf32>
    %963 = vector.broadcast %70 : f32 to vector<8x256xf32>
    %964 = arith.mulf %963, %638 : vector<8x256xf32>
    %965 = arith.addf %959, %964 : vector<8x256xf32>
    %966 = vector.broadcast %142 : f32 to vector<8x256xf32>
    %967 = arith.mulf %966, %638 : vector<8x256xf32>
    %968 = arith.addf %962, %967 : vector<8x256xf32>
    %969 = vector.broadcast %71 : f32 to vector<8x256xf32>
    %970 = arith.mulf %969, %652 : vector<8x256xf32>
    %971 = arith.addf %965, %970 : vector<8x256xf32>
    %972 = vector.broadcast %143 : f32 to vector<8x256xf32>
    %973 = arith.mulf %972, %652 : vector<8x256xf32>
    %974 = arith.addf %968, %973 : vector<8x256xf32>
    %975 = vector.broadcast %72 : f32 to vector<8x256xf32>
    %976 = arith.mulf %975, %664 : vector<8x256xf32>
    %977 = arith.addf %971, %976 : vector<8x256xf32>
    %978 = vector.broadcast %144 : f32 to vector<8x256xf32>
    %979 = arith.mulf %978, %664 : vector<8x256xf32>
    %980 = arith.addf %974, %979 : vector<8x256xf32>
    %981 = vector.broadcast %73 : f32 to vector<8x256xf32>
    %982 = arith.mulf %981, %667 : vector<8x256xf32>
    %983 = arith.addf %977, %982 : vector<8x256xf32>
    %984 = vector.broadcast %145 : f32 to vector<8x256xf32>
    %985 = arith.mulf %984, %667 : vector<8x256xf32>
    %986 = arith.addf %980, %985 : vector<8x256xf32>
    %987 = vector.broadcast %74 : f32 to vector<8x256xf32>
    %988 = arith.mulf %987, %670 : vector<8x256xf32>
    %989 = arith.addf %983, %988 : vector<8x256xf32>
    %990 = vector.broadcast %146 : f32 to vector<8x256xf32>
    %991 = arith.mulf %990, %670 : vector<8x256xf32>
    %992 = arith.addf %986, %991 : vector<8x256xf32>
    %993 = arith.mulf %989, %992 : vector<8x256xf32>
    %994 = arith.addf %529, %993 : vector<8x256xf32>
    %995 = vector.broadcast %75 : f32 to vector<8x256xf32>
    %996 = arith.mulf %995, %655 : vector<8x256xf32>
    %997 = vector.broadcast %147 : f32 to vector<8x256xf32>
    %998 = arith.mulf %997, %655 : vector<8x256xf32>
    %999 = vector.broadcast %76 : f32 to vector<8x256xf32>
    %1000 = arith.mulf %999, %658 : vector<8x256xf32>
    %1001 = arith.addf %996, %1000 : vector<8x256xf32>
    %1002 = vector.broadcast %148 : f32 to vector<8x256xf32>
    %1003 = arith.mulf %1002, %658 : vector<8x256xf32>
    %1004 = arith.addf %998, %1003 : vector<8x256xf32>
    %1005 = vector.broadcast %77 : f32 to vector<8x256xf32>
    %1006 = arith.mulf %1005, %661 : vector<8x256xf32>
    %1007 = arith.addf %1001, %1006 : vector<8x256xf32>
    %1008 = vector.broadcast %149 : f32 to vector<8x256xf32>
    %1009 = arith.mulf %1008, %661 : vector<8x256xf32>
    %1010 = arith.addf %1004, %1009 : vector<8x256xf32>
    %1011 = vector.broadcast %78 : f32 to vector<8x256xf32>
    %1012 = arith.mulf %1011, %645 : vector<8x256xf32>
    %1013 = arith.addf %1007, %1012 : vector<8x256xf32>
    %1014 = vector.broadcast %150 : f32 to vector<8x256xf32>
    %1015 = arith.mulf %1014, %645 : vector<8x256xf32>
    %1016 = arith.addf %1010, %1015 : vector<8x256xf32>
    %1017 = vector.broadcast %79 : f32 to vector<8x256xf32>
    %1018 = arith.mulf %1017, %638 : vector<8x256xf32>
    %1019 = arith.addf %1013, %1018 : vector<8x256xf32>
    %1020 = vector.broadcast %151 : f32 to vector<8x256xf32>
    %1021 = arith.mulf %1020, %638 : vector<8x256xf32>
    %1022 = arith.addf %1016, %1021 : vector<8x256xf32>
    %1023 = vector.broadcast %80 : f32 to vector<8x256xf32>
    %1024 = arith.mulf %1023, %652 : vector<8x256xf32>
    %1025 = arith.addf %1019, %1024 : vector<8x256xf32>
    %1026 = vector.broadcast %152 : f32 to vector<8x256xf32>
    %1027 = arith.mulf %1026, %652 : vector<8x256xf32>
    %1028 = arith.addf %1022, %1027 : vector<8x256xf32>
    %1029 = vector.broadcast %81 : f32 to vector<8x256xf32>
    %1030 = arith.mulf %1029, %664 : vector<8x256xf32>
    %1031 = arith.addf %1025, %1030 : vector<8x256xf32>
    %1032 = vector.broadcast %153 : f32 to vector<8x256xf32>
    %1033 = arith.mulf %1032, %664 : vector<8x256xf32>
    %1034 = arith.addf %1028, %1033 : vector<8x256xf32>
    %1035 = vector.broadcast %82 : f32 to vector<8x256xf32>
    %1036 = arith.mulf %1035, %667 : vector<8x256xf32>
    %1037 = arith.addf %1031, %1036 : vector<8x256xf32>
    %1038 = vector.broadcast %154 : f32 to vector<8x256xf32>
    %1039 = arith.mulf %1038, %667 : vector<8x256xf32>
    %1040 = arith.addf %1034, %1039 : vector<8x256xf32>
    %1041 = vector.broadcast %83 : f32 to vector<8x256xf32>
    %1042 = arith.mulf %1041, %670 : vector<8x256xf32>
    %1043 = arith.addf %1037, %1042 : vector<8x256xf32>
    %1044 = vector.broadcast %155 : f32 to vector<8x256xf32>
    %1045 = arith.mulf %1044, %670 : vector<8x256xf32>
    %1046 = arith.addf %1040, %1045 : vector<8x256xf32>
    %1047 = arith.mulf %1043, %1046 : vector<8x256xf32>
    %1048 = arith.addf %583, %1047 : vector<8x256xf32>
    %1049 = vector.broadcast %84 : f32 to vector<8x256xf32>
    %1050 = arith.mulf %1049, %655 : vector<8x256xf32>
    %1051 = vector.broadcast %156 : f32 to vector<8x256xf32>
    %1052 = arith.mulf %1051, %655 : vector<8x256xf32>
    %1053 = vector.broadcast %85 : f32 to vector<8x256xf32>
    %1054 = arith.mulf %1053, %658 : vector<8x256xf32>
    %1055 = arith.addf %1050, %1054 : vector<8x256xf32>
    %1056 = vector.broadcast %157 : f32 to vector<8x256xf32>
    %1057 = arith.mulf %1056, %658 : vector<8x256xf32>
    %1058 = arith.addf %1052, %1057 : vector<8x256xf32>
    %1059 = vector.broadcast %86 : f32 to vector<8x256xf32>
    %1060 = arith.mulf %1059, %661 : vector<8x256xf32>
    %1061 = arith.addf %1055, %1060 : vector<8x256xf32>
    %1062 = vector.broadcast %158 : f32 to vector<8x256xf32>
    %1063 = arith.mulf %1062, %661 : vector<8x256xf32>
    %1064 = arith.addf %1058, %1063 : vector<8x256xf32>
    %1065 = vector.broadcast %87 : f32 to vector<8x256xf32>
    %1066 = arith.mulf %1065, %645 : vector<8x256xf32>
    %1067 = arith.addf %1061, %1066 : vector<8x256xf32>
    %1068 = vector.broadcast %159 : f32 to vector<8x256xf32>
    %1069 = arith.mulf %1068, %645 : vector<8x256xf32>
    %1070 = arith.addf %1064, %1069 : vector<8x256xf32>
    %1071 = vector.broadcast %88 : f32 to vector<8x256xf32>
    %1072 = arith.mulf %1071, %638 : vector<8x256xf32>
    %1073 = arith.addf %1067, %1072 : vector<8x256xf32>
    %1074 = vector.broadcast %160 : f32 to vector<8x256xf32>
    %1075 = arith.mulf %1074, %638 : vector<8x256xf32>
    %1076 = arith.addf %1070, %1075 : vector<8x256xf32>
    %1077 = vector.broadcast %89 : f32 to vector<8x256xf32>
    %1078 = arith.mulf %1077, %652 : vector<8x256xf32>
    %1079 = arith.addf %1073, %1078 : vector<8x256xf32>
    %1080 = vector.broadcast %161 : f32 to vector<8x256xf32>
    %1081 = arith.mulf %1080, %652 : vector<8x256xf32>
    %1082 = arith.addf %1076, %1081 : vector<8x256xf32>
    %1083 = vector.broadcast %90 : f32 to vector<8x256xf32>
    %1084 = arith.mulf %1083, %664 : vector<8x256xf32>
    %1085 = arith.addf %1079, %1084 : vector<8x256xf32>
    %1086 = vector.broadcast %162 : f32 to vector<8x256xf32>
    %1087 = arith.mulf %1086, %664 : vector<8x256xf32>
    %1088 = arith.addf %1082, %1087 : vector<8x256xf32>
    %1089 = vector.broadcast %91 : f32 to vector<8x256xf32>
    %1090 = arith.mulf %1089, %667 : vector<8x256xf32>
    %1091 = arith.addf %1085, %1090 : vector<8x256xf32>
    %1092 = vector.broadcast %163 : f32 to vector<8x256xf32>
    %1093 = arith.mulf %1092, %667 : vector<8x256xf32>
    %1094 = arith.addf %1088, %1093 : vector<8x256xf32>
    %1095 = vector.broadcast %92 : f32 to vector<8x256xf32>
    %1096 = arith.mulf %1095, %670 : vector<8x256xf32>
    %1097 = arith.addf %1091, %1096 : vector<8x256xf32>
    %1098 = vector.broadcast %164 : f32 to vector<8x256xf32>
    %1099 = arith.mulf %1098, %670 : vector<8x256xf32>
    %1100 = arith.addf %1094, %1099 : vector<8x256xf32>
    %1101 = arith.mulf %1097, %1100 : vector<8x256xf32>
    %1102 = arith.addf %637, %1101 : vector<8x256xf32>
    %c0_286 = arith.constant 0 : index
    %c512 = arith.constant 512 : index
    %1103 = vector.load %arg2[%c0_286, %c512] : memref<8x768xf32, #tpu.memory_space<vmem>>, vector<8x256xf32>
    %1104 = vector.extract_strided_slice %1103 {offsets = [0, 255], sizes = [8, 1], strides = [1, 1]} : vector<8x256xf32> to vector<8x1xf32>
    %1105 = vector.extract_strided_slice %1103 {offsets = [0, 0], sizes = [8, 255], strides = [1, 1]} : vector<8x256xf32> to vector<8x255xf32>
    %1106 = tpu.concatenate %1104, %1105 in 1 : vector<8x1xf32>, vector<8x255xf32> -> vector<8x256xf32>
    %1107 = vector.extract_strided_slice %1103 {offsets = [0, 15], sizes = [8, 241], strides = [1, 1]} : vector<8x256xf32> to vector<8x241xf32>
    %1108 = vector.extract_strided_slice %1103 {offsets = [0, 0], sizes = [8, 15], strides = [1, 1]} : vector<8x256xf32> to vector<8x15xf32>
    %1109 = tpu.concatenate %1107, %1108 in 1 : vector<8x241xf32>, vector<8x15xf32> -> vector<8x256xf32>
    %1110 = arith.select %18, %1109, %1106 : vector<8x256xi1>, vector<8x256xf32>
    %1111 = vector.extract_strided_slice %1103 {offsets = [0, 1], sizes = [8, 255], strides = [1, 1]} : vector<8x256xf32> to vector<8x255xf32>
    %1112 = vector.extract_strided_slice %1103 {offsets = [0, 0], sizes = [8, 1], strides = [1, 1]} : vector<8x256xf32> to vector<8x1xf32>
    %1113 = tpu.concatenate %1111, %1112 in 1 : vector<8x255xf32>, vector<8x1xf32> -> vector<8x256xf32>
    %1114 = vector.extract_strided_slice %1103 {offsets = [0, 241], sizes = [8, 15], strides = [1, 1]} : vector<8x256xf32> to vector<8x15xf32>
    %1115 = vector.extract_strided_slice %1103 {offsets = [0, 0], sizes = [8, 241], strides = [1, 1]} : vector<8x256xf32> to vector<8x241xf32>
    %1116 = tpu.concatenate %1114, %1115 in 1 : vector<8x15xf32>, vector<8x241xf32> -> vector<8x256xf32>
    %1117 = arith.select %20, %1116, %1113 : vector<8x256xi1>, vector<8x256xf32>
    %1118 = vector.extract_strided_slice %1110 {offsets = [0, 240], sizes = [8, 16], strides = [1, 1]} : vector<8x256xf32> to vector<8x16xf32>
    %1119 = vector.extract_strided_slice %1110 {offsets = [0, 0], sizes = [8, 240], strides = [1, 1]} : vector<8x256xf32> to vector<8x240xf32>
    %1120 = tpu.concatenate %1118, %1119 in 1 : vector<8x16xf32>, vector<8x240xf32> -> vector<8x256xf32>
    %1121 = vector.extract_strided_slice %1103 {offsets = [0, 240], sizes = [8, 16], strides = [1, 1]} : vector<8x256xf32> to vector<8x16xf32>
    %1122 = vector.extract_strided_slice %1103 {offsets = [0, 0], sizes = [8, 240], strides = [1, 1]} : vector<8x256xf32> to vector<8x240xf32>
    %1123 = tpu.concatenate %1121, %1122 in 1 : vector<8x16xf32>, vector<8x240xf32> -> vector<8x256xf32>
    %1124 = vector.extract_strided_slice %1117 {offsets = [0, 240], sizes = [8, 16], strides = [1, 1]} : vector<8x256xf32> to vector<8x16xf32>
    %1125 = vector.extract_strided_slice %1117 {offsets = [0, 0], sizes = [8, 240], strides = [1, 1]} : vector<8x256xf32> to vector<8x240xf32>
    %1126 = tpu.concatenate %1124, %1125 in 1 : vector<8x16xf32>, vector<8x240xf32> -> vector<8x256xf32>
    %1127 = vector.extract_strided_slice %1110 {offsets = [0, 16], sizes = [8, 240], strides = [1, 1]} : vector<8x256xf32> to vector<8x240xf32>
    %1128 = vector.extract_strided_slice %1110 {offsets = [0, 0], sizes = [8, 16], strides = [1, 1]} : vector<8x256xf32> to vector<8x16xf32>
    %1129 = tpu.concatenate %1127, %1128 in 1 : vector<8x240xf32>, vector<8x16xf32> -> vector<8x256xf32>
    %1130 = vector.extract_strided_slice %1103 {offsets = [0, 16], sizes = [8, 240], strides = [1, 1]} : vector<8x256xf32> to vector<8x240xf32>
    %1131 = vector.extract_strided_slice %1103 {offsets = [0, 0], sizes = [8, 16], strides = [1, 1]} : vector<8x256xf32> to vector<8x16xf32>
    %1132 = tpu.concatenate %1130, %1131 in 1 : vector<8x240xf32>, vector<8x16xf32> -> vector<8x256xf32>
    %1133 = vector.extract_strided_slice %1117 {offsets = [0, 16], sizes = [8, 240], strides = [1, 1]} : vector<8x256xf32> to vector<8x240xf32>
    %1134 = vector.extract_strided_slice %1117 {offsets = [0, 0], sizes = [8, 16], strides = [1, 1]} : vector<8x256xf32> to vector<8x16xf32>
    %1135 = tpu.concatenate %1133, %1134 in 1 : vector<8x240xf32>, vector<8x16xf32> -> vector<8x256xf32>
    %1136 = vector.broadcast %21 : f32 to vector<8x256xf32>
    %1137 = arith.mulf %1136, %1120 : vector<8x256xf32>
    %1138 = vector.broadcast %93 : f32 to vector<8x256xf32>
    %1139 = arith.mulf %1138, %1120 : vector<8x256xf32>
    %1140 = vector.broadcast %22 : f32 to vector<8x256xf32>
    %1141 = arith.mulf %1140, %1123 : vector<8x256xf32>
    %1142 = arith.addf %1137, %1141 : vector<8x256xf32>
    %1143 = vector.broadcast %94 : f32 to vector<8x256xf32>
    %1144 = arith.mulf %1143, %1123 : vector<8x256xf32>
    %1145 = arith.addf %1139, %1144 : vector<8x256xf32>
    %1146 = vector.broadcast %23 : f32 to vector<8x256xf32>
    %1147 = arith.mulf %1146, %1126 : vector<8x256xf32>
    %1148 = arith.addf %1142, %1147 : vector<8x256xf32>
    %1149 = vector.broadcast %95 : f32 to vector<8x256xf32>
    %1150 = arith.mulf %1149, %1126 : vector<8x256xf32>
    %1151 = arith.addf %1145, %1150 : vector<8x256xf32>
    %1152 = vector.broadcast %24 : f32 to vector<8x256xf32>
    %1153 = arith.mulf %1152, %1110 : vector<8x256xf32>
    %1154 = arith.addf %1148, %1153 : vector<8x256xf32>
    %1155 = vector.broadcast %96 : f32 to vector<8x256xf32>
    %1156 = arith.mulf %1155, %1110 : vector<8x256xf32>
    %1157 = arith.addf %1151, %1156 : vector<8x256xf32>
    %1158 = vector.broadcast %25 : f32 to vector<8x256xf32>
    %1159 = arith.mulf %1158, %1103 : vector<8x256xf32>
    %1160 = arith.addf %1154, %1159 : vector<8x256xf32>
    %1161 = vector.broadcast %97 : f32 to vector<8x256xf32>
    %1162 = arith.mulf %1161, %1103 : vector<8x256xf32>
    %1163 = arith.addf %1157, %1162 : vector<8x256xf32>
    %1164 = vector.broadcast %26 : f32 to vector<8x256xf32>
    %1165 = arith.mulf %1164, %1117 : vector<8x256xf32>
    %1166 = arith.addf %1160, %1165 : vector<8x256xf32>
    %1167 = vector.broadcast %98 : f32 to vector<8x256xf32>
    %1168 = arith.mulf %1167, %1117 : vector<8x256xf32>
    %1169 = arith.addf %1163, %1168 : vector<8x256xf32>
    %1170 = vector.broadcast %27 : f32 to vector<8x256xf32>
    %1171 = arith.mulf %1170, %1129 : vector<8x256xf32>
    %1172 = arith.addf %1166, %1171 : vector<8x256xf32>
    %1173 = vector.broadcast %99 : f32 to vector<8x256xf32>
    %1174 = arith.mulf %1173, %1129 : vector<8x256xf32>
    %1175 = arith.addf %1169, %1174 : vector<8x256xf32>
    %1176 = vector.broadcast %28 : f32 to vector<8x256xf32>
    %1177 = arith.mulf %1176, %1132 : vector<8x256xf32>
    %1178 = arith.addf %1172, %1177 : vector<8x256xf32>
    %1179 = vector.broadcast %100 : f32 to vector<8x256xf32>
    %1180 = arith.mulf %1179, %1132 : vector<8x256xf32>
    %1181 = arith.addf %1175, %1180 : vector<8x256xf32>
    %1182 = vector.broadcast %29 : f32 to vector<8x256xf32>
    %1183 = arith.mulf %1182, %1135 : vector<8x256xf32>
    %1184 = arith.addf %1178, %1183 : vector<8x256xf32>
    %1185 = vector.broadcast %101 : f32 to vector<8x256xf32>
    %1186 = arith.mulf %1185, %1135 : vector<8x256xf32>
    %1187 = arith.addf %1181, %1186 : vector<8x256xf32>
    %1188 = arith.mulf %1184, %1187 : vector<8x256xf32>
    %1189 = arith.addf %724, %1188 : vector<8x256xf32>
    %1190 = vector.broadcast %30 : f32 to vector<8x256xf32>
    %1191 = arith.mulf %1190, %1120 : vector<8x256xf32>
    %1192 = vector.broadcast %102 : f32 to vector<8x256xf32>
    %1193 = arith.mulf %1192, %1120 : vector<8x256xf32>
    %1194 = vector.broadcast %31 : f32 to vector<8x256xf32>
    %1195 = arith.mulf %1194, %1123 : vector<8x256xf32>
    %1196 = arith.addf %1191, %1195 : vector<8x256xf32>
    %1197 = vector.broadcast %103 : f32 to vector<8x256xf32>
    %1198 = arith.mulf %1197, %1123 : vector<8x256xf32>
    %1199 = arith.addf %1193, %1198 : vector<8x256xf32>
    %1200 = vector.broadcast %32 : f32 to vector<8x256xf32>
    %1201 = arith.mulf %1200, %1126 : vector<8x256xf32>
    %1202 = arith.addf %1196, %1201 : vector<8x256xf32>
    %1203 = vector.broadcast %104 : f32 to vector<8x256xf32>
    %1204 = arith.mulf %1203, %1126 : vector<8x256xf32>
    %1205 = arith.addf %1199, %1204 : vector<8x256xf32>
    %1206 = vector.broadcast %33 : f32 to vector<8x256xf32>
    %1207 = arith.mulf %1206, %1110 : vector<8x256xf32>
    %1208 = arith.addf %1202, %1207 : vector<8x256xf32>
    %1209 = vector.broadcast %105 : f32 to vector<8x256xf32>
    %1210 = arith.mulf %1209, %1110 : vector<8x256xf32>
    %1211 = arith.addf %1205, %1210 : vector<8x256xf32>
    %1212 = vector.broadcast %34 : f32 to vector<8x256xf32>
    %1213 = arith.mulf %1212, %1103 : vector<8x256xf32>
    %1214 = arith.addf %1208, %1213 : vector<8x256xf32>
    %1215 = vector.broadcast %106 : f32 to vector<8x256xf32>
    %1216 = arith.mulf %1215, %1103 : vector<8x256xf32>
    %1217 = arith.addf %1211, %1216 : vector<8x256xf32>
    %1218 = vector.broadcast %35 : f32 to vector<8x256xf32>
    %1219 = arith.mulf %1218, %1117 : vector<8x256xf32>
    %1220 = arith.addf %1214, %1219 : vector<8x256xf32>
    %1221 = vector.broadcast %107 : f32 to vector<8x256xf32>
    %1222 = arith.mulf %1221, %1117 : vector<8x256xf32>
    %1223 = arith.addf %1217, %1222 : vector<8x256xf32>
    %1224 = vector.broadcast %36 : f32 to vector<8x256xf32>
    %1225 = arith.mulf %1224, %1129 : vector<8x256xf32>
    %1226 = arith.addf %1220, %1225 : vector<8x256xf32>
    %1227 = vector.broadcast %108 : f32 to vector<8x256xf32>
    %1228 = arith.mulf %1227, %1129 : vector<8x256xf32>
    %1229 = arith.addf %1223, %1228 : vector<8x256xf32>
    %1230 = vector.broadcast %37 : f32 to vector<8x256xf32>
    %1231 = arith.mulf %1230, %1132 : vector<8x256xf32>
    %1232 = arith.addf %1226, %1231 : vector<8x256xf32>
    %1233 = vector.broadcast %109 : f32 to vector<8x256xf32>
    %1234 = arith.mulf %1233, %1132 : vector<8x256xf32>
    %1235 = arith.addf %1229, %1234 : vector<8x256xf32>
    %1236 = vector.broadcast %38 : f32 to vector<8x256xf32>
    %1237 = arith.mulf %1236, %1135 : vector<8x256xf32>
    %1238 = arith.addf %1232, %1237 : vector<8x256xf32>
    %1239 = vector.broadcast %110 : f32 to vector<8x256xf32>
    %1240 = arith.mulf %1239, %1135 : vector<8x256xf32>
    %1241 = arith.addf %1235, %1240 : vector<8x256xf32>
    %1242 = arith.mulf %1238, %1241 : vector<8x256xf32>
    %1243 = arith.addf %778, %1242 : vector<8x256xf32>
    %1244 = vector.broadcast %39 : f32 to vector<8x256xf32>
    %1245 = arith.mulf %1244, %1120 : vector<8x256xf32>
    %1246 = vector.broadcast %111 : f32 to vector<8x256xf32>
    %1247 = arith.mulf %1246, %1120 : vector<8x256xf32>
    %1248 = vector.broadcast %40 : f32 to vector<8x256xf32>
    %1249 = arith.mulf %1248, %1123 : vector<8x256xf32>
    %1250 = arith.addf %1245, %1249 : vector<8x256xf32>
    %1251 = vector.broadcast %112 : f32 to vector<8x256xf32>
    %1252 = arith.mulf %1251, %1123 : vector<8x256xf32>
    %1253 = arith.addf %1247, %1252 : vector<8x256xf32>
    %1254 = vector.broadcast %41 : f32 to vector<8x256xf32>
    %1255 = arith.mulf %1254, %1126 : vector<8x256xf32>
    %1256 = arith.addf %1250, %1255 : vector<8x256xf32>
    %1257 = vector.broadcast %113 : f32 to vector<8x256xf32>
    %1258 = arith.mulf %1257, %1126 : vector<8x256xf32>
    %1259 = arith.addf %1253, %1258 : vector<8x256xf32>
    %1260 = vector.broadcast %42 : f32 to vector<8x256xf32>
    %1261 = arith.mulf %1260, %1110 : vector<8x256xf32>
    %1262 = arith.addf %1256, %1261 : vector<8x256xf32>
    %1263 = vector.broadcast %114 : f32 to vector<8x256xf32>
    %1264 = arith.mulf %1263, %1110 : vector<8x256xf32>
    %1265 = arith.addf %1259, %1264 : vector<8x256xf32>
    %1266 = vector.broadcast %43 : f32 to vector<8x256xf32>
    %1267 = arith.mulf %1266, %1103 : vector<8x256xf32>
    %1268 = arith.addf %1262, %1267 : vector<8x256xf32>
    %1269 = vector.broadcast %115 : f32 to vector<8x256xf32>
    %1270 = arith.mulf %1269, %1103 : vector<8x256xf32>
    %1271 = arith.addf %1265, %1270 : vector<8x256xf32>
    %1272 = vector.broadcast %44 : f32 to vector<8x256xf32>
    %1273 = arith.mulf %1272, %1117 : vector<8x256xf32>
    %1274 = arith.addf %1268, %1273 : vector<8x256xf32>
    %1275 = vector.broadcast %116 : f32 to vector<8x256xf32>
    %1276 = arith.mulf %1275, %1117 : vector<8x256xf32>
    %1277 = arith.addf %1271, %1276 : vector<8x256xf32>
    %1278 = vector.broadcast %45 : f32 to vector<8x256xf32>
    %1279 = arith.mulf %1278, %1129 : vector<8x256xf32>
    %1280 = arith.addf %1274, %1279 : vector<8x256xf32>
    %1281 = vector.broadcast %117 : f32 to vector<8x256xf32>
    %1282 = arith.mulf %1281, %1129 : vector<8x256xf32>
    %1283 = arith.addf %1277, %1282 : vector<8x256xf32>
    %1284 = vector.broadcast %46 : f32 to vector<8x256xf32>
    %1285 = arith.mulf %1284, %1132 : vector<8x256xf32>
    %1286 = arith.addf %1280, %1285 : vector<8x256xf32>
    %1287 = vector.broadcast %118 : f32 to vector<8x256xf32>
    %1288 = arith.mulf %1287, %1132 : vector<8x256xf32>
    %1289 = arith.addf %1283, %1288 : vector<8x256xf32>
    %1290 = vector.broadcast %47 : f32 to vector<8x256xf32>
    %1291 = arith.mulf %1290, %1135 : vector<8x256xf32>
    %1292 = arith.addf %1286, %1291 : vector<8x256xf32>
    %1293 = vector.broadcast %119 : f32 to vector<8x256xf32>
    %1294 = arith.mulf %1293, %1135 : vector<8x256xf32>
    %1295 = arith.addf %1289, %1294 : vector<8x256xf32>
    %1296 = arith.mulf %1292, %1295 : vector<8x256xf32>
    %1297 = arith.addf %832, %1296 : vector<8x256xf32>
    %1298 = vector.broadcast %48 : f32 to vector<8x256xf32>
    %1299 = arith.mulf %1298, %1120 : vector<8x256xf32>
    %1300 = vector.broadcast %120 : f32 to vector<8x256xf32>
    %1301 = arith.mulf %1300, %1120 : vector<8x256xf32>
    %1302 = vector.broadcast %49 : f32 to vector<8x256xf32>
    %1303 = arith.mulf %1302, %1123 : vector<8x256xf32>
    %1304 = arith.addf %1299, %1303 : vector<8x256xf32>
    %1305 = vector.broadcast %121 : f32 to vector<8x256xf32>
    %1306 = arith.mulf %1305, %1123 : vector<8x256xf32>
    %1307 = arith.addf %1301, %1306 : vector<8x256xf32>
    %1308 = vector.broadcast %50 : f32 to vector<8x256xf32>
    %1309 = arith.mulf %1308, %1126 : vector<8x256xf32>
    %1310 = arith.addf %1304, %1309 : vector<8x256xf32>
    %1311 = vector.broadcast %122 : f32 to vector<8x256xf32>
    %1312 = arith.mulf %1311, %1126 : vector<8x256xf32>
    %1313 = arith.addf %1307, %1312 : vector<8x256xf32>
    %1314 = vector.broadcast %51 : f32 to vector<8x256xf32>
    %1315 = arith.mulf %1314, %1110 : vector<8x256xf32>
    %1316 = arith.addf %1310, %1315 : vector<8x256xf32>
    %1317 = vector.broadcast %123 : f32 to vector<8x256xf32>
    %1318 = arith.mulf %1317, %1110 : vector<8x256xf32>
    %1319 = arith.addf %1313, %1318 : vector<8x256xf32>
    %1320 = vector.broadcast %52 : f32 to vector<8x256xf32>
    %1321 = arith.mulf %1320, %1103 : vector<8x256xf32>
    %1322 = arith.addf %1316, %1321 : vector<8x256xf32>
    %1323 = vector.broadcast %124 : f32 to vector<8x256xf32>
    %1324 = arith.mulf %1323, %1103 : vector<8x256xf32>
    %1325 = arith.addf %1319, %1324 : vector<8x256xf32>
    %1326 = vector.broadcast %53 : f32 to vector<8x256xf32>
    %1327 = arith.mulf %1326, %1117 : vector<8x256xf32>
    %1328 = arith.addf %1322, %1327 : vector<8x256xf32>
    %1329 = vector.broadcast %125 : f32 to vector<8x256xf32>
    %1330 = arith.mulf %1329, %1117 : vector<8x256xf32>
    %1331 = arith.addf %1325, %1330 : vector<8x256xf32>
    %1332 = vector.broadcast %54 : f32 to vector<8x256xf32>
    %1333 = arith.mulf %1332, %1129 : vector<8x256xf32>
    %1334 = arith.addf %1328, %1333 : vector<8x256xf32>
    %1335 = vector.broadcast %126 : f32 to vector<8x256xf32>
    %1336 = arith.mulf %1335, %1129 : vector<8x256xf32>
    %1337 = arith.addf %1331, %1336 : vector<8x256xf32>
    %1338 = vector.broadcast %55 : f32 to vector<8x256xf32>
    %1339 = arith.mulf %1338, %1132 : vector<8x256xf32>
    %1340 = arith.addf %1334, %1339 : vector<8x256xf32>
    %1341 = vector.broadcast %127 : f32 to vector<8x256xf32>
    %1342 = arith.mulf %1341, %1132 : vector<8x256xf32>
    %1343 = arith.addf %1337, %1342 : vector<8x256xf32>
    %1344 = vector.broadcast %56 : f32 to vector<8x256xf32>
    %1345 = arith.mulf %1344, %1135 : vector<8x256xf32>
    %1346 = arith.addf %1340, %1345 : vector<8x256xf32>
    %1347 = vector.broadcast %128 : f32 to vector<8x256xf32>
    %1348 = arith.mulf %1347, %1135 : vector<8x256xf32>
    %1349 = arith.addf %1343, %1348 : vector<8x256xf32>
    %1350 = arith.mulf %1346, %1349 : vector<8x256xf32>
    %1351 = arith.addf %886, %1350 : vector<8x256xf32>
    %1352 = vector.broadcast %57 : f32 to vector<8x256xf32>
    %1353 = arith.mulf %1352, %1120 : vector<8x256xf32>
    %1354 = vector.broadcast %129 : f32 to vector<8x256xf32>
    %1355 = arith.mulf %1354, %1120 : vector<8x256xf32>
    %1356 = vector.broadcast %58 : f32 to vector<8x256xf32>
    %1357 = arith.mulf %1356, %1123 : vector<8x256xf32>
    %1358 = arith.addf %1353, %1357 : vector<8x256xf32>
    %1359 = vector.broadcast %130 : f32 to vector<8x256xf32>
    %1360 = arith.mulf %1359, %1123 : vector<8x256xf32>
    %1361 = arith.addf %1355, %1360 : vector<8x256xf32>
    %1362 = vector.broadcast %59 : f32 to vector<8x256xf32>
    %1363 = arith.mulf %1362, %1126 : vector<8x256xf32>
    %1364 = arith.addf %1358, %1363 : vector<8x256xf32>
    %1365 = vector.broadcast %131 : f32 to vector<8x256xf32>
    %1366 = arith.mulf %1365, %1126 : vector<8x256xf32>
    %1367 = arith.addf %1361, %1366 : vector<8x256xf32>
    %1368 = vector.broadcast %60 : f32 to vector<8x256xf32>
    %1369 = arith.mulf %1368, %1110 : vector<8x256xf32>
    %1370 = arith.addf %1364, %1369 : vector<8x256xf32>
    %1371 = vector.broadcast %132 : f32 to vector<8x256xf32>
    %1372 = arith.mulf %1371, %1110 : vector<8x256xf32>
    %1373 = arith.addf %1367, %1372 : vector<8x256xf32>
    %1374 = vector.broadcast %61 : f32 to vector<8x256xf32>
    %1375 = arith.mulf %1374, %1103 : vector<8x256xf32>
    %1376 = arith.addf %1370, %1375 : vector<8x256xf32>
    %1377 = vector.broadcast %133 : f32 to vector<8x256xf32>
    %1378 = arith.mulf %1377, %1103 : vector<8x256xf32>
    %1379 = arith.addf %1373, %1378 : vector<8x256xf32>
    %1380 = vector.broadcast %62 : f32 to vector<8x256xf32>
    %1381 = arith.mulf %1380, %1117 : vector<8x256xf32>
    %1382 = arith.addf %1376, %1381 : vector<8x256xf32>
    %1383 = vector.broadcast %134 : f32 to vector<8x256xf32>
    %1384 = arith.mulf %1383, %1117 : vector<8x256xf32>
    %1385 = arith.addf %1379, %1384 : vector<8x256xf32>
    %1386 = vector.broadcast %63 : f32 to vector<8x256xf32>
    %1387 = arith.mulf %1386, %1129 : vector<8x256xf32>
    %1388 = arith.addf %1382, %1387 : vector<8x256xf32>
    %1389 = vector.broadcast %135 : f32 to vector<8x256xf32>
    %1390 = arith.mulf %1389, %1129 : vector<8x256xf32>
    %1391 = arith.addf %1385, %1390 : vector<8x256xf32>
    %1392 = vector.broadcast %64 : f32 to vector<8x256xf32>
    %1393 = arith.mulf %1392, %1132 : vector<8x256xf32>
    %1394 = arith.addf %1388, %1393 : vector<8x256xf32>
    %1395 = vector.broadcast %136 : f32 to vector<8x256xf32>
    %1396 = arith.mulf %1395, %1132 : vector<8x256xf32>
    %1397 = arith.addf %1391, %1396 : vector<8x256xf32>
    %1398 = vector.broadcast %65 : f32 to vector<8x256xf32>
    %1399 = arith.mulf %1398, %1135 : vector<8x256xf32>
    %1400 = arith.addf %1394, %1399 : vector<8x256xf32>
    %1401 = vector.broadcast %137 : f32 to vector<8x256xf32>
    %1402 = arith.mulf %1401, %1135 : vector<8x256xf32>
    %1403 = arith.addf %1397, %1402 : vector<8x256xf32>
    %1404 = arith.mulf %1400, %1403 : vector<8x256xf32>
    %1405 = arith.addf %940, %1404 : vector<8x256xf32>
    %1406 = vector.broadcast %66 : f32 to vector<8x256xf32>
    %1407 = arith.mulf %1406, %1120 : vector<8x256xf32>
    %1408 = vector.broadcast %138 : f32 to vector<8x256xf32>
    %1409 = arith.mulf %1408, %1120 : vector<8x256xf32>
    %1410 = vector.broadcast %67 : f32 to vector<8x256xf32>
    %1411 = arith.mulf %1410, %1123 : vector<8x256xf32>
    %1412 = arith.addf %1407, %1411 : vector<8x256xf32>
    %1413 = vector.broadcast %139 : f32 to vector<8x256xf32>
    %1414 = arith.mulf %1413, %1123 : vector<8x256xf32>
    %1415 = arith.addf %1409, %1414 : vector<8x256xf32>
    %1416 = vector.broadcast %68 : f32 to vector<8x256xf32>
    %1417 = arith.mulf %1416, %1126 : vector<8x256xf32>
    %1418 = arith.addf %1412, %1417 : vector<8x256xf32>
    %1419 = vector.broadcast %140 : f32 to vector<8x256xf32>
    %1420 = arith.mulf %1419, %1126 : vector<8x256xf32>
    %1421 = arith.addf %1415, %1420 : vector<8x256xf32>
    %1422 = vector.broadcast %69 : f32 to vector<8x256xf32>
    %1423 = arith.mulf %1422, %1110 : vector<8x256xf32>
    %1424 = arith.addf %1418, %1423 : vector<8x256xf32>
    %1425 = vector.broadcast %141 : f32 to vector<8x256xf32>
    %1426 = arith.mulf %1425, %1110 : vector<8x256xf32>
    %1427 = arith.addf %1421, %1426 : vector<8x256xf32>
    %1428 = vector.broadcast %70 : f32 to vector<8x256xf32>
    %1429 = arith.mulf %1428, %1103 : vector<8x256xf32>
    %1430 = arith.addf %1424, %1429 : vector<8x256xf32>
    %1431 = vector.broadcast %142 : f32 to vector<8x256xf32>
    %1432 = arith.mulf %1431, %1103 : vector<8x256xf32>
    %1433 = arith.addf %1427, %1432 : vector<8x256xf32>
    %1434 = vector.broadcast %71 : f32 to vector<8x256xf32>
    %1435 = arith.mulf %1434, %1117 : vector<8x256xf32>
    %1436 = arith.addf %1430, %1435 : vector<8x256xf32>
    %1437 = vector.broadcast %143 : f32 to vector<8x256xf32>
    %1438 = arith.mulf %1437, %1117 : vector<8x256xf32>
    %1439 = arith.addf %1433, %1438 : vector<8x256xf32>
    %1440 = vector.broadcast %72 : f32 to vector<8x256xf32>
    %1441 = arith.mulf %1440, %1129 : vector<8x256xf32>
    %1442 = arith.addf %1436, %1441 : vector<8x256xf32>
    %1443 = vector.broadcast %144 : f32 to vector<8x256xf32>
    %1444 = arith.mulf %1443, %1129 : vector<8x256xf32>
    %1445 = arith.addf %1439, %1444 : vector<8x256xf32>
    %1446 = vector.broadcast %73 : f32 to vector<8x256xf32>
    %1447 = arith.mulf %1446, %1132 : vector<8x256xf32>
    %1448 = arith.addf %1442, %1447 : vector<8x256xf32>
    %1449 = vector.broadcast %145 : f32 to vector<8x256xf32>
    %1450 = arith.mulf %1449, %1132 : vector<8x256xf32>
    %1451 = arith.addf %1445, %1450 : vector<8x256xf32>
    %1452 = vector.broadcast %74 : f32 to vector<8x256xf32>
    %1453 = arith.mulf %1452, %1135 : vector<8x256xf32>
    %1454 = arith.addf %1448, %1453 : vector<8x256xf32>
    %1455 = vector.broadcast %146 : f32 to vector<8x256xf32>
    %1456 = arith.mulf %1455, %1135 : vector<8x256xf32>
    %1457 = arith.addf %1451, %1456 : vector<8x256xf32>
    %1458 = arith.mulf %1454, %1457 : vector<8x256xf32>
    %1459 = arith.addf %994, %1458 : vector<8x256xf32>
    %1460 = vector.broadcast %75 : f32 to vector<8x256xf32>
    %1461 = arith.mulf %1460, %1120 : vector<8x256xf32>
    %1462 = vector.broadcast %147 : f32 to vector<8x256xf32>
    %1463 = arith.mulf %1462, %1120 : vector<8x256xf32>
    %1464 = vector.broadcast %76 : f32 to vector<8x256xf32>
    %1465 = arith.mulf %1464, %1123 : vector<8x256xf32>
    %1466 = arith.addf %1461, %1465 : vector<8x256xf32>
    %1467 = vector.broadcast %148 : f32 to vector<8x256xf32>
    %1468 = arith.mulf %1467, %1123 : vector<8x256xf32>
    %1469 = arith.addf %1463, %1468 : vector<8x256xf32>
    %1470 = vector.broadcast %77 : f32 to vector<8x256xf32>
    %1471 = arith.mulf %1470, %1126 : vector<8x256xf32>
    %1472 = arith.addf %1466, %1471 : vector<8x256xf32>
    %1473 = vector.broadcast %149 : f32 to vector<8x256xf32>
    %1474 = arith.mulf %1473, %1126 : vector<8x256xf32>
    %1475 = arith.addf %1469, %1474 : vector<8x256xf32>
    %1476 = vector.broadcast %78 : f32 to vector<8x256xf32>
    %1477 = arith.mulf %1476, %1110 : vector<8x256xf32>
    %1478 = arith.addf %1472, %1477 : vector<8x256xf32>
    %1479 = vector.broadcast %150 : f32 to vector<8x256xf32>
    %1480 = arith.mulf %1479, %1110 : vector<8x256xf32>
    %1481 = arith.addf %1475, %1480 : vector<8x256xf32>
    %1482 = vector.broadcast %79 : f32 to vector<8x256xf32>
    %1483 = arith.mulf %1482, %1103 : vector<8x256xf32>
    %1484 = arith.addf %1478, %1483 : vector<8x256xf32>
    %1485 = vector.broadcast %151 : f32 to vector<8x256xf32>
    %1486 = arith.mulf %1485, %1103 : vector<8x256xf32>
    %1487 = arith.addf %1481, %1486 : vector<8x256xf32>
    %1488 = vector.broadcast %80 : f32 to vector<8x256xf32>
    %1489 = arith.mulf %1488, %1117 : vector<8x256xf32>
    %1490 = arith.addf %1484, %1489 : vector<8x256xf32>
    %1491 = vector.broadcast %152 : f32 to vector<8x256xf32>
    %1492 = arith.mulf %1491, %1117 : vector<8x256xf32>
    %1493 = arith.addf %1487, %1492 : vector<8x256xf32>
    %1494 = vector.broadcast %81 : f32 to vector<8x256xf32>
    %1495 = arith.mulf %1494, %1129 : vector<8x256xf32>
    %1496 = arith.addf %1490, %1495 : vector<8x256xf32>
    %1497 = vector.broadcast %153 : f32 to vector<8x256xf32>
    %1498 = arith.mulf %1497, %1129 : vector<8x256xf32>
    %1499 = arith.addf %1493, %1498 : vector<8x256xf32>
    %1500 = vector.broadcast %82 : f32 to vector<8x256xf32>
    %1501 = arith.mulf %1500, %1132 : vector<8x256xf32>
    %1502 = arith.addf %1496, %1501 : vector<8x256xf32>
    %1503 = vector.broadcast %154 : f32 to vector<8x256xf32>
    %1504 = arith.mulf %1503, %1132 : vector<8x256xf32>
    %1505 = arith.addf %1499, %1504 : vector<8x256xf32>
    %1506 = vector.broadcast %83 : f32 to vector<8x256xf32>
    %1507 = arith.mulf %1506, %1135 : vector<8x256xf32>
    %1508 = arith.addf %1502, %1507 : vector<8x256xf32>
    %1509 = vector.broadcast %155 : f32 to vector<8x256xf32>
    %1510 = arith.mulf %1509, %1135 : vector<8x256xf32>
    %1511 = arith.addf %1505, %1510 : vector<8x256xf32>
    %1512 = arith.mulf %1508, %1511 : vector<8x256xf32>
    %1513 = arith.addf %1048, %1512 : vector<8x256xf32>
    %1514 = vector.broadcast %84 : f32 to vector<8x256xf32>
    %1515 = arith.mulf %1514, %1120 : vector<8x256xf32>
    %1516 = vector.broadcast %156 : f32 to vector<8x256xf32>
    %1517 = arith.mulf %1516, %1120 : vector<8x256xf32>
    %1518 = vector.broadcast %85 : f32 to vector<8x256xf32>
    %1519 = arith.mulf %1518, %1123 : vector<8x256xf32>
    %1520 = arith.addf %1515, %1519 : vector<8x256xf32>
    %1521 = vector.broadcast %157 : f32 to vector<8x256xf32>
    %1522 = arith.mulf %1521, %1123 : vector<8x256xf32>
    %1523 = arith.addf %1517, %1522 : vector<8x256xf32>
    %1524 = vector.broadcast %86 : f32 to vector<8x256xf32>
    %1525 = arith.mulf %1524, %1126 : vector<8x256xf32>
    %1526 = arith.addf %1520, %1525 : vector<8x256xf32>
    %1527 = vector.broadcast %158 : f32 to vector<8x256xf32>
    %1528 = arith.mulf %1527, %1126 : vector<8x256xf32>
    %1529 = arith.addf %1523, %1528 : vector<8x256xf32>
    %1530 = vector.broadcast %87 : f32 to vector<8x256xf32>
    %1531 = arith.mulf %1530, %1110 : vector<8x256xf32>
    %1532 = arith.addf %1526, %1531 : vector<8x256xf32>
    %1533 = vector.broadcast %159 : f32 to vector<8x256xf32>
    %1534 = arith.mulf %1533, %1110 : vector<8x256xf32>
    %1535 = arith.addf %1529, %1534 : vector<8x256xf32>
    %1536 = vector.broadcast %88 : f32 to vector<8x256xf32>
    %1537 = arith.mulf %1536, %1103 : vector<8x256xf32>
    %1538 = arith.addf %1532, %1537 : vector<8x256xf32>
    %1539 = vector.broadcast %160 : f32 to vector<8x256xf32>
    %1540 = arith.mulf %1539, %1103 : vector<8x256xf32>
    %1541 = arith.addf %1535, %1540 : vector<8x256xf32>
    %1542 = vector.broadcast %89 : f32 to vector<8x256xf32>
    %1543 = arith.mulf %1542, %1117 : vector<8x256xf32>
    %1544 = arith.addf %1538, %1543 : vector<8x256xf32>
    %1545 = vector.broadcast %161 : f32 to vector<8x256xf32>
    %1546 = arith.mulf %1545, %1117 : vector<8x256xf32>
    %1547 = arith.addf %1541, %1546 : vector<8x256xf32>
    %1548 = vector.broadcast %90 : f32 to vector<8x256xf32>
    %1549 = arith.mulf %1548, %1129 : vector<8x256xf32>
    %1550 = arith.addf %1544, %1549 : vector<8x256xf32>
    %1551 = vector.broadcast %162 : f32 to vector<8x256xf32>
    %1552 = arith.mulf %1551, %1129 : vector<8x256xf32>
    %1553 = arith.addf %1547, %1552 : vector<8x256xf32>
    %1554 = vector.broadcast %91 : f32 to vector<8x256xf32>
    %1555 = arith.mulf %1554, %1132 : vector<8x256xf32>
    %1556 = arith.addf %1550, %1555 : vector<8x256xf32>
    %1557 = vector.broadcast %163 : f32 to vector<8x256xf32>
    %1558 = arith.mulf %1557, %1132 : vector<8x256xf32>
    %1559 = arith.addf %1553, %1558 : vector<8x256xf32>
    %1560 = vector.broadcast %92 : f32 to vector<8x256xf32>
    %1561 = arith.mulf %1560, %1135 : vector<8x256xf32>
    %1562 = arith.addf %1556, %1561 : vector<8x256xf32>
    %1563 = vector.broadcast %164 : f32 to vector<8x256xf32>
    %1564 = arith.mulf %1563, %1135 : vector<8x256xf32>
    %1565 = arith.addf %1559, %1564 : vector<8x256xf32>
    %1566 = arith.mulf %1562, %1565 : vector<8x256xf32>
    %1567 = arith.addf %1102, %1566 : vector<8x256xf32>
    %c0_287 = arith.constant 0 : index
    %c0_288 = arith.constant 0 : index
    %1568 = vector.load %arg3[%c0_287, %c0_288] : memref<8x2048xf32, #tpu.memory_space<vmem>>, vector<8x256xf32>
    tpu.vector_store %arg3[%c0_287, %c0_288], %1189 {strides = array<i32>} : memref<8x2048xf32, #tpu.memory_space<vmem>>, vector<8x256xf32>,
    %c0_289 = arith.constant 0 : index
    %c256_290 = arith.constant 256 : index
    %1569 = vector.load %arg3[%c0_289, %c256_290] : memref<8x2048xf32, #tpu.memory_space<vmem>>, vector<8x256xf32>
    tpu.vector_store %arg3[%c0_289, %c256_290], %1243 {strides = array<i32>} : memref<8x2048xf32, #tpu.memory_space<vmem>>, vector<8x256xf32>,
    %c0_291 = arith.constant 0 : index
    %c512_292 = arith.constant 512 : index
    %1570 = vector.load %arg3[%c0_291, %c512_292] : memref<8x2048xf32, #tpu.memory_space<vmem>>, vector<8x256xf32>
    tpu.vector_store %arg3[%c0_291, %c512_292], %1297 {strides = array<i32>} : memref<8x2048xf32, #tpu.memory_space<vmem>>, vector<8x256xf32>,
    %c0_293 = arith.constant 0 : index
    %c768 = arith.constant 768 : index
    %1571 = vector.load %arg3[%c0_293, %c768] : memref<8x2048xf32, #tpu.memory_space<vmem>>, vector<8x256xf32>
    tpu.vector_store %arg3[%c0_293, %c768], %1351 {strides = array<i32>} : memref<8x2048xf32, #tpu.memory_space<vmem>>, vector<8x256xf32>,
    %c0_294 = arith.constant 0 : index
    %c1024 = arith.constant 1024 : index
    %1572 = vector.load %arg3[%c0_294, %c1024] : memref<8x2048xf32, #tpu.memory_space<vmem>>, vector<8x256xf32>
    tpu.vector_store %arg3[%c0_294, %c1024], %1405 {strides = array<i32>} : memref<8x2048xf32, #tpu.memory_space<vmem>>, vector<8x256xf32>,
    %c0_295 = arith.constant 0 : index
    %c1280 = arith.constant 1280 : index
    %1573 = vector.load %arg3[%c0_295, %c1280] : memref<8x2048xf32, #tpu.memory_space<vmem>>, vector<8x256xf32>
    tpu.vector_store %arg3[%c0_295, %c1280], %1459 {strides = array<i32>} : memref<8x2048xf32, #tpu.memory_space<vmem>>, vector<8x256xf32>,
    %c0_296 = arith.constant 0 : index
    %c1536 = arith.constant 1536 : index
    %1574 = vector.load %arg3[%c0_296, %c1536] : memref<8x2048xf32, #tpu.memory_space<vmem>>, vector<8x256xf32>
    tpu.vector_store %arg3[%c0_296, %c1536], %1513 {strides = array<i32>} : memref<8x2048xf32, #tpu.memory_space<vmem>>, vector<8x256xf32>,
    %c0_297 = arith.constant 0 : index
    %c1792 = arith.constant 1792 : index
    %1575 = vector.load %arg3[%c0_297, %c1792] : memref<8x2048xf32, #tpu.memory_space<vmem>>, vector<8x256xf32>
    tpu.vector_store %arg3[%c0_297, %c1792], %1567 {strides = array<i32>} : memref<8x2048xf32, #tpu.memory_space<vmem>>, vector<8x256xf32>,
    return
  }
  func.func @transform_0(%arg0: i32, %arg1: memref<16x9xf32, #tpu.memory_space<smem>>) -> (i32, i32) {
    %c0_i32 = arith.constant 0 : i32
    %c0_i32_0 = arith.constant 0 : i32
    return %arg0, %c0_i32 : i32, i32
  }
  func.func @transform_1(%arg0: i32, %arg1: memref<16x9xf32, #tpu.memory_space<smem>>) -> (i32, i32) {
    %c0_i32 = arith.constant 0 : i32
    %c0_i32_0 = arith.constant 0 : i32
    return %arg0, %c0_i32 : i32, i32
  }
}

</mosaic_0001>

<llo_original>
// kernel: tpu_custom_call.1
$region0: #{tpu_custom_call.1}
  #allocation0 [shape = 'u32[]', space=smem, size = 0x4, offset = 0x4, fixed_abs, tag = 'smem constant byte address 0x4 - core index']
  #allocation1 [shape = 'u32[144,128]{1,0:T(1,128)}', space=vmem, size = 0x12000, scoped, tag = 'internal scratch']
  #allocation2 [shape = 's32[1]{0}', space=sflag, size = 0x4, scoped, tag = 'scoped memory for tpu_custom_call.1']
  #allocation3 [shape = 'u8[8192]{0}', space=smem, size = 0x2000, scoped, tag = 'prefetched SMEM operand 0']
  %s0 = inlined_call_operand.hbm [shape: f32[16,9], index: 0, kind: input, shape index: {}]
  %s1 = inlined_call_operand.hbm [shape: f32[8,768], index: 1, kind: input, shape index: {}]
  %s2 = inlined_call_operand.hbm [shape: f32[8,2048], index: 2, kind: output, shape index: {}]
  %s3 = sld [smem:[#allocation0]]
  $region18: #{tpu_custom_call.1} parent=0
    _
  %s5 = ssub.s32 1, %s3
  %s6 = scalar_select 0, %s5, %s3
  %8 = dma.hbm_to_smem %s0, 256, [#allocation3], [#allocation2]
  %9 = dma.done [#allocation2], 256
  %10 = sfence
  $region1: #{tpu_custom_call.1} parent=0
    #allocation4 [shape = 'u8[24576]{0}', space=vmem, size = 0x6000, scoped, tag = 'input window, operand 1, single buffered']
    #allocation5 [shape = 's32[1]{0}', space=sflag, size = 0x4, scoped, tag = 'scoped memory for tpu_custom_call.1']
    #allocation6 [shape = 's32[1]{0}', space=sflag, size = 0x4, scoped, tag = 'scoped memory for tpu_custom_call.1']
    #allocation7 [shape = 'u8[65536]{0}', space=vmem, size = 0x10000, scoped, tag = 'output window, operand 0, single buffered']
    %11 = vsyncpa [#allocation5], 0
    %12 = vsyncpa [#allocation6], 0
    // Predicated region
    $region2: #{tpu_custom_call.1} parent=1 // pred_check
      _
    $region3: #{tpu_custom_call.1} parent=1 // pred_check_branch
      %14 = sbr.rel (0) target = $region5
    $region4: #{tpu_custom_call.1} parent=1 // pred_region
      %s16 = ssub.s32 768, 768
      %17 = vsyncadd [#allocation5], %s16
      %s19 = sshll.u32 [#allocation4], 4
      %s20 = int_to_ptr.vmem [resolvable:$true] %s19
      %22 = dma.hbm_to_vmem [thread:$0]  %s1, 768, %s20, [#allocation5]
    $region5: #{tpu_custom_call.1} parent=1 // pred_fallthru
      _
    // Predicated region
    $region6: #{tpu_custom_call.1} parent=1 // pred_check
      _
    $region7: #{tpu_custom_call.1} parent=1 // pred_check_branch
      %24 = sbr.rel (0) target = $region9
    $region8: #{tpu_custom_call.1} parent=1 // pred_region
      %25 = dma.done [#allocation5], 768
    $region9: #{tpu_custom_call.1} parent=1 // pred_fallthru
      _
    %v26 = vlaneseq
    %v27 = vand.u32 %v26, 127
    %v28 = vadd.s32 %v27, 128
    %vm29 = vcmp.lt.s32.totalorder %v27, 0
    %v30 = vsub.s32 0, %v27
    %v31 = vsel %vm29, %v30, %v27
    %v32 = vshrl.u32 %v31, 4
    %v33 = vand.u32 %v31, 15
    %v34 = vsub.s32 0, %v33
    %v35 = vsel %vm29, %v34, %v33
    %vm36 = vcmp.lt.s32.totalorder %v28, 0
    %v37 = vsub.s32 0, %v28
    %v38 = vsel %vm36, %v37, %v28
    %v39 = vshrl.u32 %v38, 4
    %v40 = vand.u32 %v38, 15
    %v41 = vsub.s32 0, %v40
    %v42 = vsel %vm36, %v41, %v40
    %vm43 = vcmp.ne.s32.totalorder %v35, 0
    %vm44 = vcmp.ne.s32.totalorder %v42, 0
    %vm45 = vcmp.lt.s32.totalorder %v35, 0
    %vm46 = vcmp.lt.s32.totalorder %v42, 0
    %vm47 = vmand %vm45, %vm43
    %vm48 = vmand %vm46, %vm44
    %v49 = vadd.s32 %v35, 16
    %v50 = vadd.s32 %v42, 16
    %v51 = vsel %vm47, %v49, %v35
    %v52 = vsel %vm48, %v50, %v42
    %vm53 = vcmp.lt.s32.totalorder %v51, 1
    %vm54 = vcmp.lt.s32.totalorder %v52, 1
    %vm55 = vcmp.ge.s32.totalorder %v51, 15
    %vm56 = vcmp.ge.s32.totalorder %v52, 15
    %s57 = sld [smem:[#allocation3]]
    %s58 = sld [smem:[#allocation3 + $0x1]]
    %s59 = sld [smem:[#allocation3 + $0x2]]
    %s60 = sld [smem:[#allocation3 + $0x3]]
    %s61 = sld [smem:[#allocation3 + $0x4]]
    %s62 = sld [smem:[#allocation3 + $0x5]]
    %s63 = sld [smem:[#allocation3 + $0x6]]
    %s64 = sld [smem:[#allocation3 + $0x7]]
    %s65 = sld [smem:[#allocation3 + $0x8]]
    %s66 = sld [smem:[#allocation3 + $0x80]]
    %s67 = sld [smem:[#allocation3 + $0x81]]
    %s68 = sld [smem:[#allocation3 + $0x82]]
    %s69 = sld [smem:[#allocation3 + $0x83]]
    %s70 = sld [smem:[#allocation3 + $0x84]]
    %s71 = sld [smem:[#allocation3 + $0x85]]
    %s72 = sld [smem:[#allocation3 + $0x86]]
    %s73 = sld [smem:[#allocation3 + $0x87]]
    %s74 = sld [smem:[#allocation3 + $0x88]]
    %s75 = sld [smem:[#allocation3 + $0x100]]
    %s76 = sld [smem:[#allocation3 + $0x101]]
    %s77 = sld [smem:[#allocation3 + $0x102]]
    %s78 = sld [smem:[#allocation3 + $0x103]]
    %s79 = sld [smem:[#allocation3 + $0x104]]
    %s80 = sld [smem:[#allocation3 + $0x105]]
    %s81 = sld [smem:[#allocation3 + $0x106]]
    %s82 = sld [smem:[#allocation3 + $0x107]]
    %s83 = sld [smem:[#allocation3 + $0x108]]
    %s84 = sld [smem:[#allocation3 + $0x180]]
    %s85 = sld [smem:[#allocation3 + $0x181]]
    %s86 = sld [smem:[#allocation3 + $0x182]]
    %s87 = sld [smem:[#allocation3 + $0x183]]
    %s88 = sld [smem:[#allocation3 + $0x184]]
    %s89 = sld [smem:[#allocation3 + $0x185]]
    %s90 = sld [smem:[#allocation3 + $0x186]]
    %s91 = sld [smem:[#allocation3 + $0x187]]
    %s92 = sld [smem:[#allocation3 + $0x188]]
    %s93 = sld [smem:[#allocation3 + $0x200]]
    %s94 = sld [smem:[#allocation3 + $0x201]]
    %s95 = sld [smem:[#allocation3 + $0x202]]
    %s96 = sld [smem:[#allocation3 + $0x203]]
    %s97 = sld [smem:[#allocation3 + $0x204]]
    %s98 = sld [smem:[#allocation3 + $0x205]]
    %s99 = sld [smem:[#allocation3 + $0x206]]
    %s100 = sld [smem:[#allocation3 + $0x207]]
    %s101 = sld [smem:[#allocation3 + $0x208]]
    %s102 = sld [smem:[#allocation3 + $0x280]]
    %s103 = sld [smem:[#allocation3 + $0x281]]
    %s104 = sld [smem:[#allocation3 + $0x282]]
    %s105 = sld [smem:[#allocation3 + $0x283]]
    %s106 = sld [smem:[#allocation3 + $0x284]]
    %s107 = sld [smem:[#allocation3 + $0x285]]
    %s108 = sld [smem:[#allocation3 + $0x286]]
    %s109 = sld [smem:[#allocation3 + $0x287]]
    %s110 = sld [smem:[#allocation3 + $0x288]]
    %s111 = sld [smem:[#allocation3 + $0x300]]
    %s112 = sld [smem:[#allocation3 + $0x301]]
    %s113 = sld [smem:[#allocation3 + $0x302]]
    %s114 = sld [smem:[#allocation3 + $0x303]]
    %s115 = sld [smem:[#allocation3 + $0x304]]
    %s116 = sld [smem:[#allocation3 + $0x305]]
    %s117 = sld [smem:[#allocation3 + $0x306]]
    %s118 = sld [smem:[#allocation3 + $0x307]]
    %s119 = sld [smem:[#allocation3 + $0x308]]
    %s120 = sld [smem:[#allocation3 + $0x380]]
    %s121 = sld [smem:[#allocation3 + $0x381]]
    %s122 = sld [smem:[#allocation3 + $0x382]]
    %s123 = sld [smem:[#allocation3 + $0x383]]
    %s124 = sld [smem:[#allocation3 + $0x384]]
    %s125 = sld [smem:[#allocation3 + $0x385]]
    %s126 = sld [smem:[#allocation3 + $0x386]]
    %s127 = sld [smem:[#allocation3 + $0x387]]
    %s128 = sld [smem:[#allocation3 + $0x388]]
    %s129 = sld [smem:[#allocation3 + $0x400]]
    %s130 = sld [smem:[#allocation3 + $0x401]]
    %s131 = sld [smem:[#allocation3 + $0x402]]
    %s132 = sld [smem:[#allocation3 + $0x403]]
    %s133 = sld [smem:[#allocation3 + $0x404]]
    %s134 = sld [smem:[#allocation3 + $0x405]]
    %s135 = sld [smem:[#allocation3 + $0x406]]
    %s136 = sld [smem:[#allocation3 + $0x407]]
    %s137 = sld [smem:[#allocation3 + $0x408]]
    %s138 = sld [smem:[#allocation3 + $0x480]]
    %s139 = sld [smem:[#allocation3 + $0x481]]
    %s140 = sld [smem:[#allocation3 + $0x482]]
    %s141 = sld [smem:[#allocation3 + $0x483]]
    %s142 = sld [smem:[#allocation3 + $0x484]]
    %s143 = sld [smem:[#allocation3 + $0x485]]
    %s144 = sld [smem:[#allocation3 + $0x486]]
    %s145 = sld [smem:[#allocation3 + $0x487]]
    %s146 = sld [smem:[#allocation3 + $0x488]]
    %s147 = sld [smem:[#allocation3 + $0x500]]
    %s148 = sld [smem:[#allocation3 + $0x501]]
    %s149 = sld [smem:[#allocation3 + $0x502]]
    %s150 = sld [smem:[#allocation3 + $0x503]]
    %s151 = sld [smem:[#allocation3 + $0x504]]
    %s152 = sld [smem:[#allocation3 + $0x505]]
    %s153 = sld [smem:[#allocation3 + $0x506]]
    %s154 = sld [smem:[#allocation3 + $0x507]]
    %s155 = sld [smem:[#allocation3 + $0x508]]
    %s156 = sld [smem:[#allocation3 + $0x580]]
    %s157 = sld [smem:[#allocation3 + $0x581]]
    %s158 = sld [smem:[#allocation3 + $0x582]]
    %s159 = sld [smem:[#allocation3 + $0x583]]
    %s160 = sld [smem:[#allocation3 + $0x584]]
    %s161 = sld [smem:[#allocation3 + $0x585]]
    %s162 = sld [smem:[#allocation3 + $0x586]]
    %s163 = sld [smem:[#allocation3 + $0x587]]
    %s164 = sld [smem:[#allocation3 + $0x588]]
    %s165 = sld [smem:[#allocation3 + $0x600]]
    %s166 = sld [smem:[#allocation3 + $0x601]]
    %s167 = sld [smem:[#allocation3 + $0x602]]
    %s168 = sld [smem:[#allocation3 + $0x603]]
    %s169 = sld [smem:[#allocation3 + $0x604]]
    %s170 = sld [smem:[#allocation3 + $0x605]]
    %s171 = sld [smem:[#allocation3 + $0x606]]
    %s172 = sld [smem:[#allocation3 + $0x607]]
    %s173 = sld [smem:[#allocation3 + $0x608]]
    %s174 = sld [smem:[#allocation3 + $0x680]]
    %s175 = sld [smem:[#allocation3 + $0x681]]
    %s176 = sld [smem:[#allocation3 + $0x682]]
    %s177 = sld [smem:[#allocation3 + $0x683]]
    %s178 = sld [smem:[#allocation3 + $0x684]]
    %s179 = sld [smem:[#allocation3 + $0x685]]
    %s180 = sld [smem:[#allocation3 + $0x686]]
    %s181 = sld [smem:[#allocation3 + $0x687]]
    %s182 = sld [smem:[#allocation3 + $0x688]]
    %s183 = sld [smem:[#allocation3 + $0x700]]
    %s184 = sld [smem:[#allocation3 + $0x701]]
    %s185 = sld [smem:[#allocation3 + $0x702]]
    %s186 = sld [smem:[#allocation3 + $0x703]]
    %s187 = sld [smem:[#allocation3 + $0x704]]
    %s188 = sld [smem:[#allocation3 + $0x705]]
    %s189 = sld [smem:[#allocation3 + $0x706]]
    %s190 = sld [smem:[#allocation3 + $0x707]]
    %s191 = sld [smem:[#allocation3 + $0x708]]
    %s192 = sld [smem:[#allocation3 + $0x780]]
    %s193 = sld [smem:[#allocation3 + $0x781]]
    %s194 = sld [smem:[#allocation3 + $0x782]]
    %s195 = sld [smem:[#allocation3 + $0x783]]
    %s196 = sld [smem:[#allocation3 + $0x784]]
    %s197 = sld [smem:[#allocation3 + $0x785]]
    %s198 = sld [smem:[#allocation3 + $0x786]]
    %s199 = sld [smem:[#allocation3 + $0x787]]
    %s200 = sld [smem:[#allocation3 + $0x788]]
    %v201 = vld [vmem:[#allocation4] sm:$0xff]
    %v202 = vld [vmem:[#allocation4 + $0x8] sm:$0xff]
    %204 = vrot.lane.b32.xlu0 %v202, 1
    %v205 = vpop.permute.xlu0 %204
    %208 = vrot.lane.b32.xlu0 %v201, 1
    %v209 = vpop.permute.xlu0 %208
    %vm210 = vcmask 7168
    %v211 = vsel %vm210, %v209, %v205
    %v214 = vsel %vm210, %v205, %v209
    %215 = vrot.lane.b32.xlu0 %v201, 113
    %v216 = vpop.permute.xlu0 %215
    %217 = vrot.lane.b32.xlu0 %v202, 113
    %v218 = vpop.permute.xlu0 %217
    %vm219 = vcmask 924672
    %v220 = vsel %vm219, %v216, %v218
    %v224 = vsel %vm219, %v218, %v216
    %v225 = vsel %vm53, %v220, %v214
    %v226 = vsel %vm54, %v224, %v211
    %227 = vrot.lane.b32.xlu0 %v201, 127
    %v228 = vpop.permute.xlu0 %227
    %229 = vrot.lane.b32.xlu0 %v202, 127
    %v230 = vpop.permute.xlu0 %229
    %vm231 = vcmask 1039360
    %v232 = vsel %vm231, %v228, %v230
    %v236 = vsel %vm231, %v230, %v228
    %237 = vrot.lane.b32.xlu0 %v202, 15
    %v238 = vpop.permute.xlu0 %237
    %240 = vrot.lane.b32.xlu0 %v201, 15
    %v241 = vpop.permute.xlu0 %240
    %vm242 = vcmask 121856
    %v243 = vsel %vm242, %v241, %v238
    %v246 = vsel %vm242, %v238, %v241
    %v247 = vsel %vm55, %v246, %v232
    %v248 = vsel %vm56, %v243, %v236
    %250 = vrot.lane.b32.xlu0 %v226, 16
    %v251 = vpop.permute.xlu0 %250
    %254 = vrot.lane.b32.xlu0 %v225, 16
    %v255 = vpop.permute.xlu0 %254
    %vm256 = vcmask 130048
    %v257 = vsel %vm256, %v255, %v251
    %v260 = vsel %vm256, %v251, %v255
    %261 = vrot.lane.b32.xlu0 %v202, 16
    %v262 = vpop.permute.xlu0 %261
    %264 = vrot.lane.b32.xlu0 %v201, 16
    %v265 = vpop.permute.xlu0 %264
    %v266 = vsel %vm256, %v265, %v262
    %v269 = vsel %vm256, %v262, %v265
    %271 = vrot.lane.b32.xlu0 %v248, 16
    %v272 = vpop.permute.xlu0 %271
    %275 = vrot.lane.b32.xlu0 %v247, 16
    %v276 = vpop.permute.xlu0 %275
    %v277 = vsel %vm256, %v276, %v272
    %v280 = vsel %vm256, %v272, %v276
    %281 = vrot.lane.b32.xlu0 %v225, 112
    %v282 = vpop.permute.xlu0 %281
    %283 = vrot.lane.b32.xlu0 %v226, 112
    %v284 = vpop.permute.xlu0 %283
    %vm285 = vcmask 916480
    %v286 = vsel %vm285, %v282, %v284
    %v290 = vsel %vm285, %v284, %v282
    %291 = vrot.lane.b32.xlu0 %v201, 112
    %v292 = vpop.permute.xlu0 %291
    %293 = vrot.lane.b32.xlu0 %v202, 112
    %v294 = vpop.permute.xlu0 %293
    %v295 = vsel %vm285, %v292, %v294
    %v299 = vsel %vm285, %v294, %v292
    %300 = vrot.lane.b32.xlu0 %v247, 112
    %v301 = vpop.permute.xlu0 %300
    %302 = vrot.lane.b32.xlu0 %v248, 112
    %v303 = vpop.permute.xlu0 %302
    %v304 = vsel %vm285, %v301, %v303
    %v308 = vsel %vm285, %v303, %v301
    %v309 = vstv %s57
    %v310 = vmul.f32 %v309, %v260
    %v311 = vmul.f32 %v309, %v257
    %v312 = vstv %s129
    %v313 = vmul.f32 %v312, %v260
    %v314 = vmul.f32 %v312, %v257
    %v315 = vstv %s58
    %v316 = vmul.f32 %v315, %v269
    %v317 = vmul.f32 %v315, %v266
    %v318 = vadd.f32 %v310, %v316
    %v319 = vadd.f32 %v311, %v317
    %v320 = vstv %s130
    %v321 = vmul.f32 %v320, %v269
    %v322 = vmul.f32 %v320, %v266
    %v323 = vadd.f32 %v313, %v321
    %v324 = vadd.f32 %v314, %v322
    %v325 = vstv %s59
    %v326 = vmul.f32 %v325, %v280
    %v327 = vmul.f32 %v325, %v277
    %v328 = vadd.f32 %v318, %v326
    %v329 = vadd.f32 %v319, %v327
    %v330 = vstv %s131
    %v331 = vmul.f32 %v330, %v280
    %v332 = vmul.f32 %v330, %v277
    %v333 = vadd.f32 %v323, %v331
    %v334 = vadd.f32 %v324, %v332
    %v335 = vstv %s60
    %v336 = vmul.f32 %v335, %v225
    %v337 = vmul.f32 %v335, %v226
    %v338 = vadd.f32 %v328, %v336
    %v339 = vadd.f32 %v329, %v337
    %v340 = vstv %s132
    %v341 = vmul.f32 %v340, %v225
    %v342 = vmul.f32 %v340, %v226
    %v343 = vadd.f32 %v333, %v341
    %v344 = vadd.f32 %v334, %v342
    %v345 = vstv %s61
    %v346 = vmul.f32 %v345, %v201
    %v347 = vmul.f32 %v345, %v202
    %v348 = vadd.f32 %v338, %v346
    %v349 = vadd.f32 %v339, %v347
    %v350 = vstv %s133
    %v351 = vmul.f32 %v350, %v201
    %v352 = vmul.f32 %v350, %v202
    %v353 = vadd.f32 %v343, %v351
    %v354 = vadd.f32 %v344, %v352
    %v355 = vstv %s62
    %v356 = vmul.f32 %v355, %v247
    %v357 = vmul.f32 %v355, %v248
    %v358 = vadd.f32 %v348, %v356
    %v359 = vadd.f32 %v349, %v357
    %v360 = vstv %s134
    %v361 = vmul.f32 %v360, %v247
    %v362 = vmul.f32 %v360, %v248
    %v363 = vadd.f32 %v353, %v361
    %v364 = vadd.f32 %v354, %v362
    %v365 = vstv %s63
    %v366 = vmul.f32 %v365, %v286
    %v367 = vmul.f32 %v365, %v290
    %v368 = vadd.f32 %v358, %v366
    %v369 = vadd.f32 %v359, %v367
    %v370 = vstv %s135
    %v371 = vmul.f32 %v370, %v286
    %v372 = vmul.f32 %v370, %v290
    %v373 = vadd.f32 %v363, %v371
    %v374 = vadd.f32 %v364, %v372
    %v375 = vstv %s64
    %v376 = vmul.f32 %v375, %v295
    %v377 = vmul.f32 %v375, %v299
    %v378 = vadd.f32 %v368, %v376
    %v379 = vadd.f32 %v369, %v377
    %v380 = vstv %s136
    %v381 = vmul.f32 %v380, %v295
    %v382 = vmul.f32 %v380, %v299
    %v383 = vadd.f32 %v373, %v381
    %v384 = vadd.f32 %v374, %v382
    %v385 = vstv %s65
    %v386 = vmul.f32 %v385, %v304
    %v387 = vmul.f32 %v385, %v308
    %v388 = vadd.f32 %v378, %v386
    %v389 = vadd.f32 %v379, %v387
    %v390 = vstv %s137
    %v391 = vmul.f32 %v390, %v304
    %v392 = vmul.f32 %v390, %v308
    %v393 = vadd.f32 %v383, %v391
    %v394 = vadd.f32 %v384, %v392
    %v395 = vmul.f32 %v388, %v393
    %v396 = vmul.f32 %v389, %v394
    %v397 = vadd.f32 %v395, 0.0
    %v398 = vadd.f32 %v396, 0.0
    %v399 = vstv %s66
    %v400 = vmul.f32 %v399, %v260
    %v401 = vmul.f32 %v399, %v257
    %v402 = vstv %s138
    %v403 = vmul.f32 %v402, %v260
    %v404 = vmul.f32 %v402, %v257
    %v405 = vstv %s67
    %v406 = vmul.f32 %v405, %v269
    %v407 = vmul.f32 %v405, %v266
    %v408 = vadd.f32 %v400, %v406
    %v409 = vadd.f32 %v401, %v407
    %v410 = vstv %s139
    %v411 = vmul.f32 %v410, %v269
    %v412 = vmul.f32 %v410, %v266
    %v413 = vadd.f32 %v403, %v411
    %v414 = vadd.f32 %v404, %v412
    %v415 = vstv %s68
    %v416 = vmul.f32 %v415, %v280
    %v417 = vmul.f32 %v415, %v277
    %v418 = vadd.f32 %v408, %v416
    %v419 = vadd.f32 %v409, %v417
    %v420 = vstv %s140
    %v421 = vmul.f32 %v420, %v280
    %v422 = vmul.f32 %v420, %v277
    %v423 = vadd.f32 %v413, %v421
    %v424 = vadd.f32 %v414, %v422
    %v425 = vstv %s69
    %v426 = vmul.f32 %v425, %v225
    %v427 = vmul.f32 %v425, %v226
    %v428 = vadd.f32 %v418, %v426
    %v429 = vadd.f32 %v419, %v427
    %v430 = vstv %s141
    %v431 = vmul.f32 %v430, %v225
    %v432 = vmul.f32 %v430, %v226
    %v433 = vadd.f32 %v423, %v431
    %v434 = vadd.f32 %v424, %v432
    %v435 = vstv %s70
    %v436 = vmul.f32 %v435, %v201
    %v437 = vmul.f32 %v435, %v202
    %v438 = vadd.f32 %v428, %v436
    %v439 = vadd.f32 %v429, %v437
    %v440 = vstv %s142
    %v441 = vmul.f32 %v440, %v201
    %v442 = vmul.f32 %v440, %v202
    %v443 = vadd.f32 %v433, %v441
    %v444 = vadd.f32 %v434, %v442
    %v445 = vstv %s71
    %v446 = vmul.f32 %v445, %v247
    %v447 = vmul.f32 %v445, %v248
    %v448 = vadd.f32 %v438, %v446
    %v449 = vadd.f32 %v439, %v447
    %v450 = vstv %s143
    %v451 = vmul.f32 %v450, %v247
    %v452 = vmul.f32 %v450, %v248
    %v453 = vadd.f32 %v443, %v451
    %v454 = vadd.f32 %v444, %v452
    %v455 = vstv %s72
    %v456 = vmul.f32 %v455, %v286
    %v457 = vmul.f32 %v455, %v290
    %v458 = vadd.f32 %v448, %v456
    %v459 = vadd.f32 %v449, %v457
    %v460 = vstv %s144
    %v461 = vmul.f32 %v460, %v286
    %v462 = vmul.f32 %v460, %v290
    %v463 = vadd.f32 %v453, %v461
    %v464 = vadd.f32 %v454, %v462
    %v465 = vstv %s73
    %v466 = vmul.f32 %v465, %v295
    %v467 = vmul.f32 %v465, %v299
    %v468 = vadd.f32 %v458, %v466
    %v469 = vadd.f32 %v459, %v467
    %v470 = vstv %s145
    %v471 = vmul.f32 %v470, %v295
    %v472 = vmul.f32 %v470, %v299
    %v473 = vadd.f32 %v463, %v471
    %v474 = vadd.f32 %v464, %v472
    %v475 = vstv %s74
    %v476 = vmul.f32 %v475, %v304
    %v477 = vmul.f32 %v475, %v308
    %v478 = vadd.f32 %v468, %v476
    %v479 = vadd.f32 %v469, %v477
    %v480 = vstv %s146
    %v481 = vmul.f32 %v480, %v304
    %v482 = vmul.f32 %v480, %v308
    %v483 = vadd.f32 %v473, %v481
    %v484 = vadd.f32 %v474, %v482
    %v485 = vmul.f32 %v478, %v483
    %v486 = vmul.f32 %v479, %v484
    %v487 = vadd.f32 %v485, 0.0
    %v488 = vadd.f32 %v486, 0.0
    %v489 = vstv %s75
    %v490 = vmul.f32 %v489, %v260
    %v491 = vmul.f32 %v489, %v257
    %v492 = vstv %s147
    %v493 = vmul.f32 %v492, %v260
    %v494 = vmul.f32 %v492, %v257
    %v495 = vstv %s76
    %v496 = vmul.f32 %v495, %v269
    %v497 = vmul.f32 %v495, %v266
    %v498 = vadd.f32 %v490, %v496
    %v499 = vadd.f32 %v491, %v497
    %v500 = vstv %s148
    %v501 = vmul.f32 %v500, %v269
    %v502 = vmul.f32 %v500, %v266
    %v503 = vadd.f32 %v493, %v501
    %v504 = vadd.f32 %v494, %v502
    %v505 = vstv %s77
    %v506 = vmul.f32 %v505, %v280
    %v507 = vmul.f32 %v505, %v277
    %v508 = vadd.f32 %v498, %v506
    %v509 = vadd.f32 %v499, %v507
    %v510 = vstv %s149
    %v511 = vmul.f32 %v510, %v280
    %v512 = vmul.f32 %v510, %v277
    %v513 = vadd.f32 %v503, %v511
    %v514 = vadd.f32 %v504, %v512
    %v515 = vstv %s78
    %v516 = vmul.f32 %v515, %v225
    %v517 = vmul.f32 %v515, %v226
    %v518 = vadd.f32 %v508, %v516
    %v519 = vadd.f32 %v509, %v517
    %v520 = vstv %s150
    %v521 = vmul.f32 %v520, %v225
    %v522 = vmul.f32 %v520, %v226
    %v523 = vadd.f32 %v513, %v521
    %v524 = vadd.f32 %v514, %v522
    %v525 = vstv %s79
    %v526 = vmul.f32 %v525, %v201
    %v527 = vmul.f32 %v525, %v202
    %v528 = vadd.f32 %v518, %v526
    %v529 = vadd.f32 %v519, %v527
    %v530 = vstv %s151
    %v531 = vmul.f32 %v530, %v201
    %v532 = vmul.f32 %v530, %v202
    %v533 = vadd.f32 %v523, %v531
    %v534 = vadd.f32 %v524, %v532
    %v535 = vstv %s80
    %v536 = vmul.f32 %v535, %v247
    %v537 = vmul.f32 %v535, %v248
    %v538 = vadd.f32 %v528, %v536
    %v539 = vadd.f32 %v529, %v537
    %v540 = vstv %s152
    %v541 = vmul.f32 %v540, %v247
    %v542 = vmul.f32 %v540, %v248
    %v543 = vadd.f32 %v533, %v541
    %v544 = vadd.f32 %v534, %v542
    %v545 = vstv %s81
    %v546 = vmul.f32 %v545, %v286
    %v547 = vmul.f32 %v545, %v290
    %v548 = vadd.f32 %v538, %v546
    %v549 = vadd.f32 %v539, %v547
    %v550 = vstv %s153
    %v551 = vmul.f32 %v550, %v286
    %v552 = vmul.f32 %v550, %v290
    %v553 = vadd.f32 %v543, %v551
    %v554 = vadd.f32 %v544, %v552
    %v555 = vstv %s82
    %v556 = vmul.f32 %v555, %v295
    %v557 = vmul.f32 %v555, %v299
    %v558 = vadd.f32 %v548, %v556
    %v559 = vadd.f32 %v549, %v557
    %v560 = vstv %s154
    %v561 = vmul.f32 %v560, %v295
    %v562 = vmul.f32 %v560, %v299
    %v563 = vadd.f32 %v553, %v561
    %v564 = vadd.f32 %v554, %v562
    %v565 = vstv %s83
    %v566 = vmul.f32 %v565, %v304
    %v567 = vmul.f32 %v565, %v308
    %v568 = vadd.f32 %v558, %v566
    %v569 = vadd.f32 %v559, %v567
    %v570 = vstv %s155
    %v571 = vmul.f32 %v570, %v304
    %v572 = vmul.f32 %v570, %v308
    %v573 = vadd.f32 %v563, %v571
    %v574 = vadd.f32 %v564, %v572
    %v575 = vmul.f32 %v568, %v573
    %v576 = vmul.f32 %v569, %v574
    %v577 = vadd.f32 %v575, 0.0
    %v578 = vadd.f32 %v576, 0.0
    %v579 = vstv %s84
    %v580 = vmul.f32 %v579, %v260
    %v581 = vmul.f32 %v579, %v257
    %v582 = vstv %s156
    %v583 = vmul.f32 %v582, %v260
    %v584 = vmul.f32 %v582, %v257
    %v585 = vstv %s85
    %v586 = vmul.f32 %v585, %v269
    %v587 = vmul.f32 %v585, %v266
    %v588 = vadd.f32 %v580, %v586
    %v589 = vadd.f32 %v581, %v587
    %v590 = vstv %s157
    %v591 = vmul.f32 %v590, %v269
    %v592 = vmul.f32 %v590, %v266
    %v593 = vadd.f32 %v583, %v591
    %v594 = vadd.f32 %v584, %v592
    %v595 = vstv %s86
    %v596 = vmul.f32 %v595, %v280
    %v597 = vmul.f32 %v595, %v277
    %v598 = vadd.f32 %v588, %v596
    %v599 = vadd.f32 %v589, %v597
    %v600 = vstv %s158
    %v601 = vmul.f32 %v600, %v280
    %v602 = vmul.f32 %v600, %v277
    %v603 = vadd.f32 %v593, %v601
    %v604 = vadd.f32 %v594, %v602
    %v605 = vstv %s87
    %v606 = vmul.f32 %v605, %v225
    %v607 = vmul.f32 %v605, %v226
    %v608 = vadd.f32 %v598, %v606
    %v609 = vadd.f32 %v599, %v607
    %v610 = vstv %s159
    %v611 = vmul.f32 %v610, %v225
    %v612 = vmul.f32 %v610, %v226
    %v613 = vadd.f32 %v603, %v611
    %v614 = vadd.f32 %v604, %v612
    %v615 = vstv %s88
    %v616 = vmul.f32 %v615, %v201
    %v617 = vmul.f32 %v615, %v202
    %v618 = vadd.f32 %v608, %v616
    %v619 = vadd.f32 %v609, %v617
    %v620 = vstv %s160
    %v621 = vmul.f32 %v620, %v201
    %v622 = vmul.f32 %v620, %v202
    %v623 = vadd.f32 %v613, %v621
    %v624 = vadd.f32 %v614, %v622
    %v625 = vstv %s89
    %v626 = vmul.f32 %v625, %v247
    %v627 = vmul.f32 %v625, %v248
    %v628 = vadd.f32 %v618, %v626
    %v629 = vadd.f32 %v619, %v627
    %v630 = vstv %s161
    %v631 = vmul.f32 %v630, %v247
    %v632 = vmul.f32 %v630, %v248
    %v633 = vadd.f32 %v623, %v631
    %v634 = vadd.f32 %v624, %v632
    %v635 = vstv %s90
    %v636 = vmul.f32 %v635, %v286
    %v637 = vmul.f32 %v635, %v290
    %v638 = vadd.f32 %v628, %v636
    %v639 = vadd.f32 %v629, %v637
    %v640 = vstv %s162
    %v641 = vmul.f32 %v640, %v286
    %v642 = vmul.f32 %v640, %v290
    %v643 = vadd.f32 %v633, %v641
    %v644 = vadd.f32 %v634, %v642
    %v645 = vstv %s91
    %v646 = vmul.f32 %v645, %v295
    %v647 = vmul.f32 %v645, %v299
    %v648 = vadd.f32 %v638, %v646
    %v649 = vadd.f32 %v639, %v647
    %v650 = vstv %s163
    %v651 = vmul.f32 %v650, %v295
    %v652 = vmul.f32 %v650, %v299
    %v653 = vadd.f32 %v643, %v651
    %v654 = vadd.f32 %v644, %v652
    %v655 = vstv %s92
    %v656 = vmul.f32 %v655, %v304
    %v657 = vmul.f32 %v655, %v308
    %v658 = vadd.f32 %v648, %v656
    %v659 = vadd.f32 %v649, %v657
    %v660 = vstv %s164
    %v661 = vmul.f32 %v660, %v304
    %v662 = vmul.f32 %v660, %v308
    %v663 = vadd.f32 %v653, %v661
    %v664 = vadd.f32 %v654, %v662
    %v665 = vmul.f32 %v658, %v663
    %v666 = vmul.f32 %v659, %v664
    %v667 = vadd.f32 %v665, 0.0
    %v668 = vadd.f32 %v666, 0.0
    %v669 = vstv %s93
    %v670 = vmul.f32 %v669, %v260
    %v671 = vmul.f32 %v669, %v257
    %v672 = vstv %s165
    %v673 = vmul.f32 %v672, %v260
    %v674 = vmul.f32 %v672, %v257
    %v675 = vstv %s94
    %v676 = vmul.f32 %v675, %v269
    %v677 = vmul.f32 %v675, %v266
    %v678 = vadd.f32 %v670, %v676
    %v679 = vadd.f32 %v671, %v677
    %v680 = vstv %s166
    %v681 = vmul.f32 %v680, %v269
    %v682 = vmul.f32 %v680, %v266
    %v683 = vadd.f32 %v673, %v681
    %v684 = vadd.f32 %v674, %v682
    %v685 = vstv %s95
    %v686 = vmul.f32 %v685, %v280
    %v687 = vmul.f32 %v685, %v277
    %v688 = vadd.f32 %v678, %v686
    %v689 = vadd.f32 %v679, %v687
    %v690 = vstv %s167
    %v691 = vmul.f32 %v690, %v280
    %v692 = vmul.f32 %v690, %v277
    %v693 = vadd.f32 %v683, %v691
    %v694 = vadd.f32 %v684, %v692
    %v695 = vstv %s96
    %v696 = vmul.f32 %v695, %v225
    %v697 = vmul.f32 %v695, %v226
    %v698 = vadd.f32 %v688, %v696
    %v699 = vadd.f32 %v689, %v697
    %v700 = vstv %s168
    %v701 = vmul.f32 %v700, %v225
    %v702 = vmul.f32 %v700, %v226
    %v703 = vadd.f32 %v693, %v701
    %v704 = vadd.f32 %v694, %v702
    %v705 = vstv %s97
    %v706 = vmul.f32 %v705, %v201
    %v707 = vmul.f32 %v705, %v202
    %v708 = vadd.f32 %v698, %v706
    %v709 = vadd.f32 %v699, %v707
    %v710 = vstv %s169
    %v711 = vmul.f32 %v710, %v201
    %v712 = vmul.f32 %v710, %v202
    %v713 = vadd.f32 %v703, %v711
    %v714 = vadd.f32 %v704, %v712
    %v715 = vstv %s98
    %v716 = vmul.f32 %v715, %v247
    %v717 = vmul.f32 %v715, %v248
    %v718 = vadd.f32 %v708, %v716
    %v719 = vadd.f32 %v709, %v717
    %v720 = vstv %s170
    %v721 = vmul.f32 %v720, %v247
    %v722 = vmul.f32 %v720, %v248
    %v723 = vadd.f32 %v713, %v721
    %v724 = vadd.f32 %v714, %v722
    %v725 = vstv %s99
    %v726 = vmul.f32 %v725, %v286
    %v727 = vmul.f32 %v725, %v290
    %v728 = vadd.f32 %v718, %v726
    %v729 = vadd.f32 %v719, %v727
    %v730 = vstv %s171
    %v731 = vmul.f32 %v730, %v286
    %v732 = vmul.f32 %v730, %v290
    %v733 = vadd.f32 %v723, %v731
    %v734 = vadd.f32 %v724, %v732
    %v735 = vstv %s100
    %v736 = vmul.f32 %v735, %v295
    %v737 = vmul.f32 %v735, %v299
    %v738 = vadd.f32 %v728, %v736
    %v739 = vadd.f32 %v729, %v737
    %v740 = vstv %s172
    %v741 = vmul.f32 %v740, %v295
    %v742 = vmul.f32 %v740, %v299
    %v743 = vadd.f32 %v733, %v741
    %v744 = vadd.f32 %v734, %v742
    %v745 = vstv %s101
    %v746 = vmul.f32 %v745, %v304
    %v747 = vmul.f32 %v745, %v308
    %v748 = vadd.f32 %v738, %v746
    %v749 = vadd.f32 %v739, %v747
    %v750 = vstv %s173
    %v751 = vmul.f32 %v750, %v304
    %v752 = vmul.f32 %v750, %v308
    %v753 = vadd.f32 %v743, %v751
    %v754 = vadd.f32 %v744, %v752
    %v755 = vmul.f32 %v748, %v753
    %v756 = vmul.f32 %v749, %v754
    %v757 = vadd.f32 %v755, 0.0
    %v758 = vadd.f32 %v756, 0.0
    %v759 = vstv %s102
    %v760 = vmul.f32 %v759, %v260
    %v761 = vmul.f32 %v759, %v257
    %v762 = vstv %s174
    %v763 = vmul.f32 %v762, %v260
    %v764 = vmul.f32 %v762, %v257
    %v765 = vstv %s103
    %v766 = vmul.f32 %v765, %v269
    %v767 = vmul.f32 %v765, %v266
    %v768 = vadd.f32 %v760, %v766
    %v769 = vadd.f32 %v761, %v767
    %v770 = vstv %s175
    %v771 = vmul.f32 %v770, %v269
    %v772 = vmul.f32 %v770, %v266
    %v773 = vadd.f32 %v763, %v771
    %v774 = vadd.f32 %v764, %v772
    %v775 = vstv %s104
    %v776 = vmul.f32 %v775, %v280
    %v777 = vmul.f32 %v775, %v277
    %v778 = vadd.f32 %v768, %v776
    %v779 = vadd.f32 %v769, %v777
    %v780 = vstv %s176
    %v781 = vmul.f32 %v780, %v280
    %v782 = vmul.f32 %v780, %v277
    %v783 = vadd.f32 %v773, %v781
    %v784 = vadd.f32 %v774, %v782
    %v785 = vstv %s105
    %v786 = vmul.f32 %v785, %v225
    %v787 = vmul.f32 %v785, %v226
    %v788 = vadd.f32 %v778, %v786
    %v789 = vadd.f32 %v779, %v787
    %v790 = vstv %s177
    %v791 = vmul.f32 %v790, %v225
    %v792 = vmul.f32 %v790, %v226
    %v793 = vadd.f32 %v783, %v791
    %v794 = vadd.f32 %v784, %v792
    %v795 = vstv %s106
    %v796 = vmul.f32 %v795, %v201
    %v797 = vmul.f32 %v795, %v202
    %v798 = vadd.f32 %v788, %v796
    %v799 = vadd.f32 %v789, %v797
    %v800 = vstv %s178
    %v801 = vmul.f32 %v800, %v201
    %v802 = vmul.f32 %v800, %v202
    %v803 = vadd.f32 %v793, %v801
    %v804 = vadd.f32 %v794, %v802
    %v805 = vstv %s107
    %v806 = vmul.f32 %v805, %v247
    %v807 = vmul.f32 %v805, %v248
    %v808 = vadd.f32 %v798, %v806
    %v809 = vadd.f32 %v799, %v807
    %v810 = vstv %s179
    %v811 = vmul.f32 %v810, %v247
    %v812 = vmul.f32 %v810, %v248
    %v813 = vadd.f32 %v803, %v811
    %v814 = vadd.f32 %v804, %v812
    %v815 = vstv %s108
    %v816 = vmul.f32 %v815, %v286
    %v817 = vmul.f32 %v815, %v290
    %v818 = vadd.f32 %v808, %v816
    %v819 = vadd.f32 %v809, %v817
    %v820 = vstv %s180
    %v821 = vmul.f32 %v820, %v286
    %v822 = vmul.f32 %v820, %v290
    %v823 = vadd.f32 %v813, %v821
    %v824 = vadd.f32 %v814, %v822
    %v825 = vstv %s109
    %v826 = vmul.f32 %v825, %v295
    %v827 = vmul.f32 %v825, %v299
    %v828 = vadd.f32 %v818, %v826
    %v829 = vadd.f32 %v819, %v827
    %v830 = vstv %s181
    %v831 = vmul.f32 %v830, %v295
    %v832 = vmul.f32 %v830, %v299
    %v833 = vadd.f32 %v823, %v831
    %v834 = vadd.f32 %v824, %v832
    %v835 = vstv %s110
    %v836 = vmul.f32 %v835, %v304
    %v837 = vmul.f32 %v835, %v308
    %v838 = vadd.f32 %v828, %v836
    %v839 = vadd.f32 %v829, %v837
    %v840 = vstv %s182
    %v841 = vmul.f32 %v840, %v304
    %v842 = vmul.f32 %v840, %v308
    %v843 = vadd.f32 %v833, %v841
    %v844 = vadd.f32 %v834, %v842
    %v845 = vmul.f32 %v838, %v843
    %v846 = vmul.f32 %v839, %v844
    %v847 = vadd.f32 %v845, 0.0
    %v848 = vadd.f32 %v846, 0.0
    %v849 = vstv %s111
    %v850 = vmul.f32 %v849, %v260
    %v851 = vmul.f32 %v849, %v257
    %v852 = vstv %s183
    %v853 = vmul.f32 %v852, %v260
    %v854 = vmul.f32 %v852, %v257
    %v855 = vstv %s112
    %v856 = vmul.f32 %v855, %v269
    %v857 = vmul.f32 %v855, %v266
    %v858 = vadd.f32 %v850, %v856
    %v859 = vadd.f32 %v851, %v857
    %v860 = vstv %s184
    %v861 = vmul.f32 %v860, %v269
    %v862 = vmul.f32 %v860, %v266
    %v863 = vadd.f32 %v853, %v861
    %v864 = vadd.f32 %v854, %v862
    %v865 = vstv %s113
    %v866 = vmul.f32 %v865, %v280
    %v867 = vmul.f32 %v865, %v277
    %v868 = vadd.f32 %v858, %v866
    %v869 = vadd.f32 %v859, %v867
    %v870 = vstv %s185
    %v871 = vmul.f32 %v870, %v280
    %v872 = vmul.f32 %v870, %v277
    %v873 = vadd.f32 %v863, %v871
    %v874 = vadd.f32 %v864, %v872
    %v875 = vstv %s114
    %v876 = vmul.f32 %v875, %v225
    %v877 = vmul.f32 %v875, %v226
    %v878 = vadd.f32 %v868, %v876
    %v879 = vadd.f32 %v869, %v877
    %v880 = vstv %s186
    %v881 = vmul.f32 %v880, %v225
    %v882 = vmul.f32 %v880, %v226
    %v883 = vadd.f32 %v873, %v881
    %v884 = vadd.f32 %v874, %v882
    %v885 = vstv %s115
    %v886 = vmul.f32 %v885, %v201
    %v887 = vmul.f32 %v885, %v202
    %v888 = vadd.f32 %v878, %v886
    %v889 = vadd.f32 %v879, %v887
    %v890 = vstv %s187
    %v891 = vmul.f32 %v890, %v201
    %v892 = vmul.f32 %v890, %v202
    %v893 = vadd.f32 %v883, %v891
    %v894 = vadd.f32 %v884, %v892
    %v895 = vstv %s116
    %v896 = vmul.f32 %v895, %v247
    %v897 = vmul.f32 %v895, %v248
    %v898 = vadd.f32 %v888, %v896
    %v899 = vadd.f32 %v889, %v897
    %v900 = vstv %s188
    %v901 = vmul.f32 %v900, %v247
    %v902 = vmul.f32 %v900, %v248
    %v903 = vadd.f32 %v893, %v901
    %v904 = vadd.f32 %v894, %v902
    %v905 = vstv %s117
    %v906 = vmul.f32 %v905, %v286
    %v907 = vmul.f32 %v905, %v290
    %v908 = vadd.f32 %v898, %v906
    %v909 = vadd.f32 %v899, %v907
    %v910 = vstv %s189
    %v911 = vmul.f32 %v910, %v286
    %v912 = vmul.f32 %v910, %v290
    %v913 = vadd.f32 %v903, %v911
    %v914 = vadd.f32 %v904, %v912
    %v915 = vstv %s118
    %v916 = vmul.f32 %v915, %v295
    %v917 = vmul.f32 %v915, %v299
    %v918 = vadd.f32 %v908, %v916
    %v919 = vadd.f32 %v909, %v917
    %v920 = vstv %s190
    %v921 = vmul.f32 %v920, %v295
    %v922 = vmul.f32 %v920, %v299
    %v923 = vadd.f32 %v913, %v921
    %v924 = vadd.f32 %v914, %v922
    %v925 = vstv %s119
    %v926 = vmul.f32 %v925, %v304
    %v927 = vmul.f32 %v925, %v308
    %v928 = vadd.f32 %v918, %v926
    %v929 = vadd.f32 %v919, %v927
    %v930 = vstv %s191
    %v931 = vmul.f32 %v930, %v304
    %v932 = vmul.f32 %v930, %v308
    %v933 = vadd.f32 %v923, %v931
    %v934 = vadd.f32 %v924, %v932
    %v935 = vmul.f32 %v928, %v933
    %v936 = vmul.f32 %v929, %v934
    %v937 = vadd.f32 %v935, 0.0
    %v938 = vadd.f32 %v936, 0.0
    %v939 = vstv %s120
    %v940 = vmul.f32 %v939, %v260
    %v941 = vmul.f32 %v939, %v257
    %v942 = vstv %s192
    %v943 = vmul.f32 %v942, %v260
    %v944 = vmul.f32 %v942, %v257
    %v945 = vstv %s121
    %v946 = vmul.f32 %v945, %v269
    %v947 = vmul.f32 %v945, %v266
    %v948 = vadd.f32 %v940, %v946
    %v949 = vadd.f32 %v941, %v947
    %v950 = vstv %s193
    %v951 = vmul.f32 %v950, %v269
    %v952 = vmul.f32 %v950, %v266
    %v953 = vadd.f32 %v943, %v951
    %v954 = vadd.f32 %v944, %v952
    %v955 = vstv %s122
    %v956 = vmul.f32 %v955, %v280
    %v957 = vmul.f32 %v955, %v277
    %v958 = vadd.f32 %v948, %v956
    %v959 = vadd.f32 %v949, %v957
    %v960 = vstv %s194
    %v961 = vmul.f32 %v960, %v280
    %v962 = vmul.f32 %v960, %v277
    %v963 = vadd.f32 %v953, %v961
    %v964 = vadd.f32 %v954, %v962
    %v965 = vstv %s123
    %v966 = vmul.f32 %v965, %v225
    %v967 = vmul.f32 %v965, %v226
    %v968 = vadd.f32 %v958, %v966
    %v969 = vadd.f32 %v959, %v967
    %v970 = vstv %s195
    %v971 = vmul.f32 %v970, %v225
    %v972 = vmul.f32 %v970, %v226
    %v973 = vadd.f32 %v963, %v971
    %v974 = vadd.f32 %v964, %v972
    %v975 = vstv %s124
    %v976 = vmul.f32 %v975, %v201
    %v977 = vmul.f32 %v975, %v202
    %v978 = vadd.f32 %v968, %v976
    %v979 = vadd.f32 %v969, %v977
    %v980 = vstv %s196
    %v981 = vmul.f32 %v980, %v201
    %v982 = vmul.f32 %v980, %v202
    %v983 = vadd.f32 %v973, %v981
    %v984 = vadd.f32 %v974, %v982
    %v985 = vstv %s125
    %v986 = vmul.f32 %v985, %v247
    %v987 = vmul.f32 %v985, %v248
    %v988 = vadd.f32 %v978, %v986
    %v989 = vadd.f32 %v979, %v987
    %v990 = vstv %s197
    %v991 = vmul.f32 %v990, %v247
    %v992 = vmul.f32 %v990, %v248
    %v993 = vadd.f32 %v983, %v991
    %v994 = vadd.f32 %v984, %v992
    %v995 = vstv %s126
    %v996 = vmul.f32 %v995, %v286
    %v997 = vmul.f32 %v995, %v290
    %v998 = vadd.f32 %v988, %v996
    %v999 = vadd.f32 %v989, %v997
    %v1000 = vstv %s198
    %v1001 = vmul.f32 %v1000, %v286
    %v1002 = vmul.f32 %v1000, %v290
    %v1003 = vadd.f32 %v993, %v1001
    %v1004 = vadd.f32 %v994, %v1002
    %v1005 = vstv %s127
    %v1006 = vmul.f32 %v1005, %v295
    %v1007 = vmul.f32 %v1005, %v299
    %v1008 = vadd.f32 %v998, %v1006
    %v1009 = vadd.f32 %v999, %v1007
    %v1010 = vstv %s199
    %v1011 = vmul.f32 %v1010, %v295
    %v1012 = vmul.f32 %v1010, %v299
    %v1013 = vadd.f32 %v1003, %v1011
    %v1014 = vadd.f32 %v1004, %v1012
    %v1015 = vstv %s128
    %v1016 = vmul.f32 %v1015, %v304
    %v1017 = vmul.f32 %v1015, %v308
    %v1018 = vadd.f32 %v1008, %v1016
    %v1019 = vadd.f32 %v1009, %v1017
    %v1020 = vstv %s200
    %v1021 = vmul.f32 %v1020, %v304
    %v1022 = vmul.f32 %v1020, %v308
    %v1023 = vadd.f32 %v1013, %v1021
    %v1024 = vadd.f32 %v1014, %v1022
    %v1025 = vmul.f32 %v1018, %v1023
    %v1026 = vmul.f32 %v1019, %v1024
    %v1027 = vadd.f32 %v1025, 0.0
    %v1028 = vadd.f32 %v1026, 0.0
    %v1029 = vld [vmem:[#allocation4 + $0x10] sm:$0xff]
    %v1030 = vld [vmem:[#allocation4 + $0x18] sm:$0xff]
    %1032 = vrot.lane.b32.xlu0 %v1030, 1
    %v1033 = vpop.permute.xlu0 %1032
    %1036 = vrot.lane.b32.xlu0 %v1029, 1
    %v1037 = vpop.permute.xlu0 %1036
    %v1038 = vsel %vm210, %v1037, %v1033
    %v1041 = vsel %vm210, %v1033, %v1037
    %1042 = vrot.lane.b32.xlu0 %v1029, 113
    %v1043 = vpop.permute.xlu0 %1042
    %1044 = vrot.lane.b32.xlu0 %v1030, 113
    %v1045 = vpop.permute.xlu0 %1044
    %v1046 = vsel %vm219, %v1043, %v1045
    %v1050 = vsel %vm219, %v1045, %v1043
    %v1051 = vsel %vm53, %v1046, %v1041
    %v1052 = vsel %vm54, %v1050, %v1038
    %1053 = vrot.lane.b32.xlu0 %v1029, 127
    %v1054 = vpop.permute.xlu0 %1053
    %1055 = vrot.lane.b32.xlu0 %v1030, 127
    %v1056 = vpop.permute.xlu0 %1055
    %v1057 = vsel %vm231, %v1054, %v1056
    %v1061 = vsel %vm231, %v1056, %v1054
    %1062 = vrot.lane.b32.xlu0 %v1030, 15
    %v1063 = vpop.permute.xlu0 %1062
    %1065 = vrot.lane.b32.xlu0 %v1029, 15
    %v1066 = vpop.permute.xlu0 %1065
    %v1067 = vsel %vm242, %v1066, %v1063
    %v1070 = vsel %vm242, %v1063, %v1066
    %v1071 = vsel %vm55, %v1070, %v1057
    %v1072 = vsel %vm56, %v1067, %v1061
    %1074 = vrot.lane.b32.xlu0 %v1052, 16
    %v1075 = vpop.permute.xlu0 %1074
    %1078 = vrot.lane.b32.xlu0 %v1051, 16
    %v1079 = vpop.permute.xlu0 %1078
    %v1080 = vsel %vm256, %v1079, %v1075
    %v1083 = vsel %vm256, %v1075, %v1079
    %1084 = vrot.lane.b32.xlu0 %v1030, 16
    %v1085 = vpop.permute.xlu0 %1084
    %1087 = vrot.lane.b32.xlu0 %v1029, 16
    %v1088 = vpop.permute.xlu0 %1087
    %v1089 = vsel %vm256, %v1088, %v1085
    %v1092 = vsel %vm256, %v1085, %v1088
    %1094 = vrot.lane.b32.xlu0 %v1072, 16
    %v1095 = vpop.permute.xlu0 %1094
    %1098 = vrot.lane.b32.xlu0 %v1071, 16
    %v1099 = vpop.permute.xlu0 %1098
    %v1100 = vsel %vm256, %v1099, %v1095
    %v1103 = vsel %vm256, %v1095, %v1099
    %1104 = vrot.lane.b32.xlu0 %v1051, 112
    %v1105 = vpop.permute.xlu0 %1104
    %1106 = vrot.lane.b32.xlu0 %v1052, 112
    %v1107 = vpop.permute.xlu0 %1106
    %v1108 = vsel %vm285, %v1105, %v1107
    %v1112 = vsel %vm285, %v1107, %v1105
    %1113 = vrot.lane.b32.xlu0 %v1029, 112
    %v1114 = vpop.permute.xlu0 %1113
    %1115 = vrot.lane.b32.xlu0 %v1030, 112
    %v1116 = vpop.permute.xlu0 %1115
    %v1117 = vsel %vm285, %v1114, %v1116
    %v1121 = vsel %vm285, %v1116, %v1114
    %1122 = vrot.lane.b32.xlu0 %v1071, 112
    %v1123 = vpop.permute.xlu0 %1122
    %1124 = vrot.lane.b32.xlu0 %v1072, 112
    %v1125 = vpop.permute.xlu0 %1124
    %v1126 = vsel %vm285, %v1123, %v1125
    %v1130 = vsel %vm285, %v1125, %v1123
    %v1131 = vmul.f32 %v309, %v1083
    %v1132 = vmul.f32 %v309, %v1080
    %v1133 = vmul.f32 %v312, %v1083
    %v1134 = vmul.f32 %v312, %v1080
    %v1135 = vmul.f32 %v315, %v1092
    %v1136 = vmul.f32 %v315, %v1089
    %v1137 = vadd.f32 %v1131, %v1135
    %v1138 = vadd.f32 %v1132, %v1136
    %v1139 = vmul.f32 %v320, %v1092
    %v1140 = vmul.f32 %v320, %v1089
    %v1141 = vadd.f32 %v1133, %v1139
    %v1142 = vadd.f32 %v1134, %v1140
    %v1143 = vmul.f32 %v325, %v1103
    %v1144 = vmul.f32 %v325, %v1100
    %v1145 = vadd.f32 %v1137, %v1143
    %v1146 = vadd.f32 %v1138, %v1144
    %v1147 = vmul.f32 %v330, %v1103
    %v1148 = vmul.f32 %v330, %v1100
    %v1149 = vadd.f32 %v1141, %v1147
    %v1150 = vadd.f32 %v1142, %v1148
    %v1151 = vmul.f32 %v335, %v1051
    %v1152 = vmul.f32 %v335, %v1052
    %v1153 = vadd.f32 %v1145, %v1151
    %v1154 = vadd.f32 %v1146, %v1152
    %v1155 = vmul.f32 %v340, %v1051
    %v1156 = vmul.f32 %v340, %v1052
    %v1157 = vadd.f32 %v1149, %v1155
    %v1158 = vadd.f32 %v1150, %v1156
    %v1159 = vmul.f32 %v345, %v1029
    %v1160 = vmul.f32 %v345, %v1030
    %v1161 = vadd.f32 %v1153, %v1159
    %v1162 = vadd.f32 %v1154, %v1160
    %v1163 = vmul.f32 %v350, %v1029
    %v1164 = vmul.f32 %v350, %v1030
    %v1165 = vadd.f32 %v1157, %v1163
    %v1166 = vadd.f32 %v1158, %v1164
    %v1167 = vmul.f32 %v355, %v1071
    %v1168 = vmul.f32 %v355, %v1072
    %v1169 = vadd.f32 %v1161, %v1167
    %v1170 = vadd.f32 %v1162, %v1168
    %v1171 = vmul.f32 %v360, %v1071
    %v1172 = vmul.f32 %v360, %v1072
    %v1173 = vadd.f32 %v1165, %v1171
    %v1174 = vadd.f32 %v1166, %v1172
    %v1175 = vmul.f32 %v365, %v1108
    %v1176 = vmul.f32 %v365, %v1112
    %v1177 = vadd.f32 %v1169, %v1175
    %v1178 = vadd.f32 %v1170, %v1176
    %v1179 = vmul.f32 %v370, %v1108
    %v1180 = vmul.f32 %v370, %v1112
    %v1181 = vadd.f32 %v1173, %v1179
    %v1182 = vadd.f32 %v1174, %v1180
    %v1183 = vmul.f32 %v375, %v1117
    %v1184 = vmul.f32 %v375, %v1121
    %v1185 = vadd.f32 %v1177, %v1183
    %v1186 = vadd.f32 %v1178, %v1184
    %v1187 = vmul.f32 %v380, %v1117
    %v1188 = vmul.f32 %v380, %v1121
    %v1189 = vadd.f32 %v1181, %v1187
    %v1190 = vadd.f32 %v1182, %v1188
    %v1191 = vmul.f32 %v385, %v1126
    %v1192 = vmul.f32 %v385, %v1130
    %v1193 = vadd.f32 %v1185, %v1191
    %v1194 = vadd.f32 %v1186, %v1192
    %v1195 = vmul.f32 %v390, %v1126
    %v1196 = vmul.f32 %v390, %v1130
    %v1197 = vadd.f32 %v1189, %v1195
    %v1198 = vadd.f32 %v1190, %v1196
    %v1199 = vmul.f32 %v1193, %v1197
    %v1200 = vmul.f32 %v1194, %v1198
    %v1201 = vadd.f32 %v397, %v1199
    %v1202 = vadd.f32 %v398, %v1200
    %v1203 = vmul.f32 %v399, %v1083
    %v1204 = vmul.f32 %v399, %v1080
    %v1205 = vmul.f32 %v402, %v1083
    %v1206 = vmul.f32 %v402, %v1080
    %v1207 = vmul.f32 %v405, %v1092
    %v1208 = vmul.f32 %v405, %v1089
    %v1209 = vadd.f32 %v1203, %v1207
    %v1210 = vadd.f32 %v1204, %v1208
    %v1211 = vmul.f32 %v410, %v1092
    %v1212 = vmul.f32 %v410, %v1089
    %v1213 = vadd.f32 %v1205, %v1211
    %v1214 = vadd.f32 %v1206, %v1212
    %v1215 = vmul.f32 %v415, %v1103
    %v1216 = vmul.f32 %v415, %v1100
    %v1217 = vadd.f32 %v1209, %v1215
    %v1218 = vadd.f32 %v1210, %v1216
    %v1219 = vmul.f32 %v420, %v1103
    %v1220 = vmul.f32 %v420, %v1100
    %v1221 = vadd.f32 %v1213, %v1219
    %v1222 = vadd.f32 %v1214, %v1220
    %v1223 = vmul.f32 %v425, %v1051
    %v1224 = vmul.f32 %v425, %v1052
    %v1225 = vadd.f32 %v1217, %v1223
    %v1226 = vadd.f32 %v1218, %v1224
    %v1227 = vmul.f32 %v430, %v1051
    %v1228 = vmul.f32 %v430, %v1052
    %v1229 = vadd.f32 %v1221, %v1227
    %v1230 = vadd.f32 %v1222, %v1228
    %v1231 = vmul.f32 %v435, %v1029
    %v1232 = vmul.f32 %v435, %v1030
    %v1233 = vadd.f32 %v1225, %v1231
    %v1234 = vadd.f32 %v1226, %v1232
    %v1235 = vmul.f32 %v440, %v1029
    %v1236 = vmul.f32 %v440, %v1030
    %v1237 = vadd.f32 %v1229, %v1235
    %v1238 = vadd.f32 %v1230, %v1236
    %v1239 = vmul.f32 %v445, %v1071
    %v1240 = vmul.f32 %v445, %v1072
    %v1241 = vadd.f32 %v1233, %v1239
    %v1242 = vadd.f32 %v1234, %v1240
    %v1243 = vmul.f32 %v450, %v1071
    %v1244 = vmul.f32 %v450, %v1072
    %v1245 = vadd.f32 %v1237, %v1243
    %v1246 = vadd.f32 %v1238, %v1244
    %v1247 = vmul.f32 %v455, %v1108
    %v1248 = vmul.f32 %v455, %v1112
    %v1249 = vadd.f32 %v1241, %v1247
    %v1250 = vadd.f32 %v1242, %v1248
    %v1251 = vmul.f32 %v460, %v1108
    %v1252 = vmul.f32 %v460, %v1112
    %v1253 = vadd.f32 %v1245, %v1251
    %v1254 = vadd.f32 %v1246, %v1252
    %v1255 = vmul.f32 %v465, %v1117
    %v1256 = vmul.f32 %v465, %v1121
    %v1257 = vadd.f32 %v1249, %v1255
    %v1258 = vadd.f32 %v1250, %v1256
    %v1259 = vmul.f32 %v470, %v1117
    %v1260 = vmul.f32 %v470, %v1121
    %v1261 = vadd.f32 %v1253, %v1259
    %v1262 = vadd.f32 %v1254, %v1260
    %v1263 = vmul.f32 %v475, %v1126
    %v1264 = vmul.f32 %v475, %v1130
    %v1265 = vadd.f32 %v1257, %v1263
    %v1266 = vadd.f32 %v1258, %v1264
    %v1267 = vmul.f32 %v480, %v1126
    %v1268 = vmul.f32 %v480, %v1130
    %v1269 = vadd.f32 %v1261, %v1267
    %v1270 = vadd.f32 %v1262, %v1268
    %v1271 = vmul.f32 %v1265, %v1269
    %v1272 = vmul.f32 %v1266, %v1270
    %v1273 = vadd.f32 %v487, %v1271
    %v1274 = vadd.f32 %v488, %v1272
    %v1275 = vmul.f32 %v489, %v1083
    %v1276 = vmul.f32 %v489, %v1080
    %v1277 = vmul.f32 %v492, %v1083
    %v1278 = vmul.f32 %v492, %v1080
    %v1279 = vmul.f32 %v495, %v1092
    %v1280 = vmul.f32 %v495, %v1089
    %v1281 = vadd.f32 %v1275, %v1279
    %v1282 = vadd.f32 %v1276, %v1280
    %v1283 = vmul.f32 %v500, %v1092
    %v1284 = vmul.f32 %v500, %v1089
    %v1285 = vadd.f32 %v1277, %v1283
    %v1286 = vadd.f32 %v1278, %v1284
    %v1287 = vmul.f32 %v505, %v1103
    %v1288 = vmul.f32 %v505, %v1100
    %v1289 = vadd.f32 %v1281, %v1287
    %v1290 = vadd.f32 %v1282, %v1288
    %v1291 = vmul.f32 %v510, %v1103
    %v1292 = vmul.f32 %v510, %v1100
    %v1293 = vadd.f32 %v1285, %v1291
    %v1294 = vadd.f32 %v1286, %v1292
    %v1295 = vmul.f32 %v515, %v1051
    %v1296 = vmul.f32 %v515, %v1052
    %v1297 = vadd.f32 %v1289, %v1295
    %v1298 = vadd.f32 %v1290, %v1296
    %v1299 = vmul.f32 %v520, %v1051
    %v1300 = vmul.f32 %v520, %v1052
    %v1301 = vadd.f32 %v1293, %v1299
    %v1302 = vadd.f32 %v1294, %v1300
    %v1303 = vmul.f32 %v525, %v1029
    %v1304 = vmul.f32 %v525, %v1030
    %v1305 = vadd.f32 %v1297, %v1303
    %v1306 = vadd.f32 %v1298, %v1304
    %v1307 = vmul.f32 %v530, %v1029
    %v1308 = vmul.f32 %v530, %v1030
    %v1309 = vadd.f32 %v1301, %v1307
    %v1310 = vadd.f32 %v1302, %v1308
    %v1311 = vmul.f32 %v535, %v1071
    %v1312 = vmul.f32 %v535, %v1072
    %v1313 = vadd.f32 %v1305, %v1311
    %v1314 = vadd.f32 %v1306, %v1312
    %v1315 = vmul.f32 %v540, %v1071
    %v1316 = vmul.f32 %v540, %v1072
    %v1317 = vadd.f32 %v1309, %v1315
    %v1318 = vadd.f32 %v1310, %v1316
    %v1319 = vmul.f32 %v545, %v1108
    %v1320 = vmul.f32 %v545, %v1112
    %v1321 = vadd.f32 %v1313, %v1319
    %v1322 = vadd.f32 %v1314, %v1320
    %v1323 = vmul.f32 %v550, %v1108
    %v1324 = vmul.f32 %v550, %v1112
    %v1325 = vadd.f32 %v1317, %v1323
    %v1326 = vadd.f32 %v1318, %v1324
    %v1327 = vmul.f32 %v555, %v1117
    %v1328 = vmul.f32 %v555, %v1121
    %v1329 = vadd.f32 %v1321, %v1327
    %v1330 = vadd.f32 %v1322, %v1328
    %v1331 = vmul.f32 %v560, %v1117
    %v1332 = vmul.f32 %v560, %v1121
    %v1333 = vadd.f32 %v1325, %v1331
    %v1334 = vadd.f32 %v1326, %v1332
    %v1335 = vmul.f32 %v565, %v1126
    %v1336 = vmul.f32 %v565, %v1130
    %v1337 = vadd.f32 %v1329, %v1335
    %v1338 = vadd.f32 %v1330, %v1336
    %v1339 = vmul.f32 %v570, %v1126
    %v1340 = vmul.f32 %v570, %v1130
    %v1341 = vadd.f32 %v1333, %v1339
    %v1342 = vadd.f32 %v1334, %v1340
    %v1343 = vmul.f32 %v1337, %v1341
    %v1344 = vmul.f32 %v1338, %v1342
    %v1345 = vadd.f32 %v577, %v1343
    %v1346 = vadd.f32 %v578, %v1344
    %v1347 = vmul.f32 %v579, %v1083
    %v1348 = vmul.f32 %v579, %v1080
    %v1349 = vmul.f32 %v582, %v1083
    %v1350 = vmul.f32 %v582, %v1080
    %v1351 = vmul.f32 %v585, %v1092
    %v1352 = vmul.f32 %v585, %v1089
    %v1353 = vadd.f32 %v1347, %v1351
    %v1354 = vadd.f32 %v1348, %v1352
    %v1355 = vmul.f32 %v590, %v1092
    %v1356 = vmul.f32 %v590, %v1089
    %v1357 = vadd.f32 %v1349, %v1355
    %v1358 = vadd.f32 %v1350, %v1356
    %v1359 = vmul.f32 %v595, %v1103
    %v1360 = vmul.f32 %v595, %v1100
    %v1361 = vadd.f32 %v1353, %v1359
    %v1362 = vadd.f32 %v1354, %v1360
    %v1363 = vmul.f32 %v600, %v1103
    %v1364 = vmul.f32 %v600, %v1100
    %v1365 = vadd.f32 %v1357, %v1363
    %v1366 = vadd.f32 %v1358, %v1364
    %v1367 = vmul.f32 %v605, %v1051
    %v1368 = vmul.f32 %v605, %v1052
    %v1369 = vadd.f32 %v1361, %v1367
    %v1370 = vadd.f32 %v1362, %v1368
    %v1371 = vmul.f32 %v610, %v1051
    %v1372 = vmul.f32 %v610, %v1052
    %v1373 = vadd.f32 %v1365, %v1371
    %v1374 = vadd.f32 %v1366, %v1372
    %v1375 = vmul.f32 %v615, %v1029
    %v1376 = vmul.f32 %v615, %v1030
    %v1377 = vadd.f32 %v1369, %v1375
    %v1378 = vadd.f32 %v1370, %v1376
    %v1379 = vmul.f32 %v620, %v1029
    %v1380 = vmul.f32 %v620, %v1030
    %v1381 = vadd.f32 %v1373, %v1379
    %v1382 = vadd.f32 %v1374, %v1380
    %v1383 = vmul.f32 %v625, %v1071
    %v1384 = vmul.f32 %v625, %v1072
    %v1385 = vadd.f32 %v1377, %v1383
    %v1386 = vadd.f32 %v1378, %v1384
    %v1387 = vmul.f32 %v630, %v1071
    %v1388 = vmul.f32 %v630, %v1072
    %v1389 = vadd.f32 %v1381, %v1387
    %v1390 = vadd.f32 %v1382, %v1388
    %v1391 = vmul.f32 %v635, %v1108
    %v1392 = vmul.f32 %v635, %v1112
    %v1393 = vadd.f32 %v1385, %v1391
    %v1394 = vadd.f32 %v1386, %v1392
    %v1395 = vmul.f32 %v640, %v1108
    %v1396 = vmul.f32 %v640, %v1112
    %v1397 = vadd.f32 %v1389, %v1395
    %v1398 = vadd.f32 %v1390, %v1396
    %v1399 = vmul.f32 %v645, %v1117
    %v1400 = vmul.f32 %v645, %v1121
    %v1401 = vadd.f32 %v1393, %v1399
    %v1402 = vadd.f32 %v1394, %v1400
    %v1403 = vmul.f32 %v650, %v1117
    %v1404 = vmul.f32 %v650, %v1121
    %v1405 = vadd.f32 %v1397, %v1403
    %v1406 = vadd.f32 %v1398, %v1404
    %v1407 = vmul.f32 %v655, %v1126
    %v1408 = vmul.f32 %v655, %v1130
    %v1409 = vadd.f32 %v1401, %v1407
    %v1410 = vadd.f32 %v1402, %v1408
    %v1411 = vmul.f32 %v660, %v1126
    %v1412 = vmul.f32 %v660, %v1130
    %v1413 = vadd.f32 %v1405, %v1411
    %v1414 = vadd.f32 %v1406, %v1412
    %v1415 = vmul.f32 %v1409, %v1413
    %v1416 = vmul.f32 %v1410, %v1414
    %v1417 = vadd.f32 %v667, %v1415
    %v1418 = vadd.f32 %v668, %v1416
    %v1419 = vmul.f32 %v669, %v1083
    %v1420 = vmul.f32 %v669, %v1080
    %v1421 = vmul.f32 %v672, %v1083
    %v1422 = vmul.f32 %v672, %v1080
    %v1423 = vmul.f32 %v675, %v1092
    %v1424 = vmul.f32 %v675, %v1089
    %v1425 = vadd.f32 %v1419, %v1423
    %v1426 = vadd.f32 %v1420, %v1424
    %v1427 = vmul.f32 %v680, %v1092
    %v1428 = vmul.f32 %v680, %v1089
    %v1429 = vadd.f32 %v1421, %v1427
    %v1430 = vadd.f32 %v1422, %v1428
    %v1431 = vmul.f32 %v685, %v1103
    %v1432 = vmul.f32 %v685, %v1100
    %v1433 = vadd.f32 %v1425, %v1431
    %v1434 = vadd.f32 %v1426, %v1432
    %v1435 = vmul.f32 %v690, %v1103
    %v1436 = vmul.f32 %v690, %v1100
    %v1437 = vadd.f32 %v1429, %v1435
    %v1438 = vadd.f32 %v1430, %v1436
    %v1439 = vmul.f32 %v695, %v1051
    %v1440 = vmul.f32 %v695, %v1052
    %v1441 = vadd.f32 %v1433, %v1439
    %v1442 = vadd.f32 %v1434, %v1440
    %v1443 = vmul.f32 %v700, %v1051
    %v1444 = vmul.f32 %v700, %v1052
    %v1445 = vadd.f32 %v1437, %v1443
    %v1446 = vadd.f32 %v1438, %v1444
    %v1447 = vmul.f32 %v705, %v1029
    %v1448 = vmul.f32 %v705, %v1030
    %v1449 = vadd.f32 %v1441, %v1447
    %v1450 = vadd.f32 %v1442, %v1448
    %v1451 = vmul.f32 %v710, %v1029
    %v1452 = vmul.f32 %v710, %v1030
    %v1453 = vadd.f32 %v1445, %v1451
    %v1454 = vadd.f32 %v1446, %v1452
    %v1455 = vmul.f32 %v715, %v1071
    %v1456 = vmul.f32 %v715, %v1072
    %v1457 = vadd.f32 %v1449, %v1455
    %v1458 = vadd.f32 %v1450, %v1456
    %v1459 = vmul.f32 %v720, %v1071
    %v1460 = vmul.f32 %v720, %v1072
    %v1461 = vadd.f32 %v1453, %v1459
    %v1462 = vadd.f32 %v1454, %v1460
    %v1463 = vmul.f32 %v725, %v1108
    %v1464 = vmul.f32 %v725, %v1112
    %v1465 = vadd.f32 %v1457, %v1463
    %v1466 = vadd.f32 %v1458, %v1464
    %v1467 = vmul.f32 %v730, %v1108
    %v1468 = vmul.f32 %v730, %v1112
    %v1469 = vadd.f32 %v1461, %v1467
    %v1470 = vadd.f32 %v1462, %v1468
    %v1471 = vmul.f32 %v735, %v1117
    %v1472 = vmul.f32 %v735, %v1121
    %v1473 = vadd.f32 %v1465, %v1471
    %v1474 = vadd.f32 %v1466, %v1472
    %v1475 = vmul.f32 %v740, %v1117
    %v1476 = vmul.f32 %v740, %v1121
    %v1477 = vadd.f32 %v1469, %v1475
    %v1478 = vadd.f32 %v1470, %v1476
    %v1479 = vmul.f32 %v745, %v1126
    %v1480 = vmul.f32 %v745, %v1130
    %v1481 = vadd.f32 %v1473, %v1479
    %v1482 = vadd.f32 %v1474, %v1480
    %v1483 = vmul.f32 %v750, %v1126
    %v1484 = vmul.f32 %v750, %v1130
    %v1485 = vadd.f32 %v1477, %v1483
    %v1486 = vadd.f32 %v1478, %v1484
    %v1487 = vmul.f32 %v1481, %v1485
    %v1488 = vmul.f32 %v1482, %v1486
    %v1489 = vadd.f32 %v757, %v1487
    %v1490 = vadd.f32 %v758, %v1488
    %v1491 = vmul.f32 %v759, %v1083
    %v1492 = vmul.f32 %v759, %v1080
    %v1493 = vmul.f32 %v762, %v1083
    %v1494 = vmul.f32 %v762, %v1080
    %v1495 = vmul.f32 %v765, %v1092
    %v1496 = vmul.f32 %v765, %v1089
    %v1497 = vadd.f32 %v1491, %v1495
    %v1498 = vadd.f32 %v1492, %v1496
    %v1499 = vmul.f32 %v770, %v1092
    %v1500 = vmul.f32 %v770, %v1089
    %v1501 = vadd.f32 %v1493, %v1499
    %v1502 = vadd.f32 %v1494, %v1500
    %v1503 = vmul.f32 %v775, %v1103
    %v1504 = vmul.f32 %v775, %v1100
    %v1505 = vadd.f32 %v1497, %v1503
    %v1506 = vadd.f32 %v1498, %v1504
    %v1507 = vmul.f32 %v780, %v1103
    %v1508 = vmul.f32 %v780, %v1100
    %v1509 = vadd.f32 %v1501, %v1507
    %v1510 = vadd.f32 %v1502, %v1508
    %v1511 = vmul.f32 %v785, %v1051
    %v1512 = vmul.f32 %v785, %v1052
    %v1513 = vadd.f32 %v1505, %v1511
    %v1514 = vadd.f32 %v1506, %v1512
    %v1515 = vmul.f32 %v790, %v1051
    %v1516 = vmul.f32 %v790, %v1052
    %v1517 = vadd.f32 %v1509, %v1515
    %v1518 = vadd.f32 %v1510, %v1516
    %v1519 = vmul.f32 %v795, %v1029
    %v1520 = vmul.f32 %v795, %v1030
    %v1521 = vadd.f32 %v1513, %v1519
    %v1522 = vadd.f32 %v1514, %v1520
    %v1523 = vmul.f32 %v800, %v1029
    %v1524 = vmul.f32 %v800, %v1030
    %v1525 = vadd.f32 %v1517, %v1523
    %v1526 = vadd.f32 %v1518, %v1524
    %v1527 = vmul.f32 %v805, %v1071
    %v1528 = vmul.f32 %v805, %v1072
    %v1529 = vadd.f32 %v1521, %v1527
    %v1530 = vadd.f32 %v1522, %v1528
    %v1531 = vmul.f32 %v810, %v1071
    %v1532 = vmul.f32 %v810, %v1072
    %v1533 = vadd.f32 %v1525, %v1531
    %v1534 = vadd.f32 %v1526, %v1532
    %v1535 = vmul.f32 %v815, %v1108
    %v1536 = vmul.f32 %v815, %v1112
    %v1537 = vadd.f32 %v1529, %v1535
    %v1538 = vadd.f32 %v1530, %v1536
    %v1539 = vmul.f32 %v820, %v1108
    %v1540 = vmul.f32 %v820, %v1112
    %v1541 = vadd.f32 %v1533, %v1539
    %v1542 = vadd.f32 %v1534, %v1540
    %v1543 = vmul.f32 %v825, %v1117
    %v1544 = vmul.f32 %v825, %v1121
    %v1545 = vadd.f32 %v1537, %v1543
    %v1546 = vadd.f32 %v1538, %v1544
    %v1547 = vmul.f32 %v830, %v1117
    %v1548 = vmul.f32 %v830, %v1121
    %v1549 = vadd.f32 %v1541, %v1547
    %v1550 = vadd.f32 %v1542, %v1548
    %v1551 = vmul.f32 %v835, %v1126
    %v1552 = vmul.f32 %v835, %v1130
    %v1553 = vadd.f32 %v1545, %v1551
    %v1554 = vadd.f32 %v1546, %v1552
    %v1555 = vmul.f32 %v840, %v1126
    %v1556 = vmul.f32 %v840, %v1130
    %v1557 = vadd.f32 %v1549, %v1555
    %v1558 = vadd.f32 %v1550, %v1556
    %v1559 = vmul.f32 %v1553, %v1557
    %v1560 = vmul.f32 %v1554, %v1558
    %v1561 = vadd.f32 %v847, %v1559
    %v1562 = vadd.f32 %v848, %v1560
    %v1563 = vmul.f32 %v849, %v1083
    %v1564 = vmul.f32 %v849, %v1080
    %v1565 = vmul.f32 %v852, %v1083
    %v1566 = vmul.f32 %v852, %v1080
    %v1567 = vmul.f32 %v855, %v1092
    %v1568 = vmul.f32 %v855, %v1089
    %v1569 = vadd.f32 %v1563, %v1567
    %v1570 = vadd.f32 %v1564, %v1568
    %v1571 = vmul.f32 %v860, %v1092
    %v1572 = vmul.f32 %v860, %v1089
    %v1573 = vadd.f32 %v1565, %v1571
    %v1574 = vadd.f32 %v1566, %v1572
    %v1575 = vmul.f32 %v865, %v1103
    %v1576 = vmul.f32 %v865, %v1100
    %v1577 = vadd.f32 %v1569, %v1575
    %v1578 = vadd.f32 %v1570, %v1576
    %v1579 = vmul.f32 %v870, %v1103
    %v1580 = vmul.f32 %v870, %v1100
    %v1581 = vadd.f32 %v1573, %v1579
    %v1582 = vadd.f32 %v1574, %v1580
    %v1583 = vmul.f32 %v875, %v1051
    %v1584 = vmul.f32 %v875, %v1052
    %v1585 = vadd.f32 %v1577, %v1583
    %v1586 = vadd.f32 %v1578, %v1584
    %v1587 = vmul.f32 %v880, %v1051
    %v1588 = vmul.f32 %v880, %v1052
    %v1589 = vadd.f32 %v1581, %v1587
    %v1590 = vadd.f32 %v1582, %v1588
    %v1591 = vmul.f32 %v885, %v1029
    %v1592 = vmul.f32 %v885, %v1030
    %v1593 = vadd.f32 %v1585, %v1591
    %v1594 = vadd.f32 %v1586, %v1592
    %v1595 = vmul.f32 %v890, %v1029
    %v1596 = vmul.f32 %v890, %v1030
    %v1597 = vadd.f32 %v1589, %v1595
    %v1598 = vadd.f32 %v1590, %v1596
    %v1599 = vmul.f32 %v895, %v1071
    %v1600 = vmul.f32 %v895, %v1072
    %v1601 = vadd.f32 %v1593, %v1599
    %v1602 = vadd.f32 %v1594, %v1600
    %v1603 = vmul.f32 %v900, %v1071
    %v1604 = vmul.f32 %v900, %v1072
    %v1605 = vadd.f32 %v1597, %v1603
    %v1606 = vadd.f32 %v1598, %v1604
    %v1607 = vmul.f32 %v905, %v1108
    %v1608 = vmul.f32 %v905, %v1112
    %v1609 = vadd.f32 %v1601, %v1607
    %v1610 = vadd.f32 %v1602, %v1608
    %v1611 = vmul.f32 %v910, %v1108
    %v1612 = vmul.f32 %v910, %v1112
    %v1613 = vadd.f32 %v1605, %v1611
    %v1614 = vadd.f32 %v1606, %v1612
    %v1615 = vmul.f32 %v915, %v1117
    %v1616 = vmul.f32 %v915, %v1121
    %v1617 = vadd.f32 %v1609, %v1615
    %v1618 = vadd.f32 %v1610, %v1616
    %v1619 = vmul.f32 %v920, %v1117
    %v1620 = vmul.f32 %v920, %v1121
    %v1621 = vadd.f32 %v1613, %v1619
    %v1622 = vadd.f32 %v1614, %v1620
    %v1623 = vmul.f32 %v925, %v1126
    %v1624 = vmul.f32 %v925, %v1130
    %v1625 = vadd.f32 %v1617, %v1623
    %v1626 = vadd.f32 %v1618, %v1624
    %v1627 = vmul.f32 %v930, %v1126
    %v1628 = vmul.f32 %v930, %v1130
    %v1629 = vadd.f32 %v1621, %v1627
    %v1630 = vadd.f32 %v1622, %v1628
    %v1631 = vmul.f32 %v1625, %v1629
    %v1632 = vmul.f32 %v1626, %v1630
    %v1633 = vadd.f32 %v937, %v1631
    %v1634 = vadd.f32 %v938, %v1632
    %v1635 = vmul.f32 %v939, %v1083
    %v1636 = vmul.f32 %v939, %v1080
    %v1637 = vmul.f32 %v942, %v1083
    %v1638 = vmul.f32 %v942, %v1080
    %v1639 = vmul.f32 %v945, %v1092
    %v1640 = vmul.f32 %v945, %v1089
    %v1641 = vadd.f32 %v1635, %v1639
    %v1642 = vadd.f32 %v1636, %v1640
    %v1643 = vmul.f32 %v950, %v1092
    %v1644 = vmul.f32 %v950, %v1089
    %v1645 = vadd.f32 %v1637, %v1643
    %v1646 = vadd.f32 %v1638, %v1644
    %v1647 = vmul.f32 %v955, %v1103
    %v1648 = vmul.f32 %v955, %v1100
    %v1649 = vadd.f32 %v1641, %v1647
    %v1650 = vadd.f32 %v1642, %v1648
    %v1651 = vmul.f32 %v960, %v1103
    %v1652 = vmul.f32 %v960, %v1100
    %v1653 = vadd.f32 %v1645, %v1651
    %v1654 = vadd.f32 %v1646, %v1652
    %v1655 = vmul.f32 %v965, %v1051
    %v1656 = vmul.f32 %v965, %v1052
    %v1657 = vadd.f32 %v1649, %v1655
    %v1658 = vadd.f32 %v1650, %v1656
    %v1659 = vmul.f32 %v970, %v1051
    %v1660 = vmul.f32 %v970, %v1052
    %v1661 = vadd.f32 %v1653, %v1659
    %v1662 = vadd.f32 %v1654, %v1660
    %v1663 = vmul.f32 %v975, %v1029
    %v1664 = vmul.f32 %v975, %v1030
    %v1665 = vadd.f32 %v1657, %v1663
    %v1666 = vadd.f32 %v1658, %v1664
    %v1667 = vmul.f32 %v980, %v1029
    %v1668 = vmul.f32 %v980, %v1030
    %v1669 = vadd.f32 %v1661, %v1667
    %v1670 = vadd.f32 %v1662, %v1668
    %v1671 = vmul.f32 %v985, %v1071
    %v1672 = vmul.f32 %v985, %v1072
    %v1673 = vadd.f32 %v1665, %v1671
    %v1674 = vadd.f32 %v1666, %v1672
    %v1675 = vmul.f32 %v990, %v1071
    %v1676 = vmul.f32 %v990, %v1072
    %v1677 = vadd.f32 %v1669, %v1675
    %v1678 = vadd.f32 %v1670, %v1676
    %v1679 = vmul.f32 %v995, %v1108
    %v1680 = vmul.f32 %v995, %v1112
    %v1681 = vadd.f32 %v1673, %v1679
    %v1682 = vadd.f32 %v1674, %v1680
    %v1683 = vmul.f32 %v1000, %v1108
    %v1684 = vmul.f32 %v1000, %v1112
    %v1685 = vadd.f32 %v1677, %v1683
    %v1686 = vadd.f32 %v1678, %v1684
    %v1687 = vmul.f32 %v1005, %v1117
    %v1688 = vmul.f32 %v1005, %v1121
    %v1689 = vadd.f32 %v1681, %v1687
    %v1690 = vadd.f32 %v1682, %v1688
    %v1691 = vmul.f32 %v1010, %v1117
    %v1692 = vmul.f32 %v1010, %v1121
    %v1693 = vadd.f32 %v1685, %v1691
    %v1694 = vadd.f32 %v1686, %v1692
    %v1695 = vmul.f32 %v1015, %v1126
    %v1696 = vmul.f32 %v1015, %v1130
    %v1697 = vadd.f32 %v1689, %v1695
    %v1698 = vadd.f32 %v1690, %v1696
    %v1699 = vmul.f32 %v1020, %v1126
    %v1700 = vmul.f32 %v1020, %v1130
    %v1701 = vadd.f32 %v1693, %v1699
    %v1702 = vadd.f32 %v1694, %v1700
    %v1703 = vmul.f32 %v1697, %v1701
    %v1704 = vmul.f32 %v1698, %v1702
    %v1705 = vadd.f32 %v1027, %v1703
    %v1706 = vadd.f32 %v1028, %v1704
    %v1707 = vld [vmem:[#allocation4 + $0x20] sm:$0xff]
    %v1708 = vld [vmem:[#allocation4 + $0x28] sm:$0xff]
    %1710 = vrot.lane.b32.xlu0 %v1708, 1
    %v1711 = vpop.permute.xlu0 %1710
    %1714 = vrot.lane.b32.xlu0 %v1707, 1
    %v1715 = vpop.permute.xlu0 %1714
    %v1716 = vsel %vm210, %v1715, %v1711
    %v1719 = vsel %vm210, %v1711, %v1715
    %1720 = vrot.lane.b32.xlu0 %v1707, 113
    %v1721 = vpop.permute.xlu0 %1720
    %1722 = vrot.lane.b32.xlu0 %v1708, 113
    %v1723 = vpop.permute.xlu0 %1722
    %v1724 = vsel %vm219, %v1721, %v1723
    %v1728 = vsel %vm219, %v1723, %v1721
    %v1729 = vsel %vm53, %v1724, %v1719
    %v1730 = vsel %vm54, %v1728, %v1716
    %1731 = vrot.lane.b32.xlu0 %v1707, 127
    %v1732 = vpop.permute.xlu0 %1731
    %1733 = vrot.lane.b32.xlu0 %v1708, 127
    %v1734 = vpop.permute.xlu0 %1733
    %v1735 = vsel %vm231, %v1732, %v1734
    %v1739 = vsel %vm231, %v1734, %v1732
    %1740 = vrot.lane.b32.xlu0 %v1708, 15
    %v1741 = vpop.permute.xlu0 %1740
    %1743 = vrot.lane.b32.xlu0 %v1707, 15
    %v1744 = vpop.permute.xlu0 %1743
    %v1745 = vsel %vm242, %v1744, %v1741
    %v1748 = vsel %vm242, %v1741, %v1744
    %v1749 = vsel %vm55, %v1748, %v1735
    %v1750 = vsel %vm56, %v1745, %v1739
    %1752 = vrot.lane.b32.xlu0 %v1730, 16
    %v1753 = vpop.permute.xlu0 %1752
    %1756 = vrot.lane.b32.xlu0 %v1729, 16
    %v1757 = vpop.permute.xlu0 %1756
    %v1758 = vsel %vm256, %v1757, %v1753
    %v1761 = vsel %vm256, %v1753, %v1757
    %1762 = vrot.lane.b32.xlu0 %v1708, 16
    %v1763 = vpop.permute.xlu0 %1762
    %1765 = vrot.lane.b32.xlu0 %v1707, 16
    %v1766 = vpop.permute.xlu0 %1765
    %v1767 = vsel %vm256, %v1766, %v1763
    %v1770 = vsel %vm256, %v1763, %v1766
    %1772 = vrot.lane.b32.xlu0 %v1750, 16
    %v1773 = vpop.permute.xlu0 %1772
    %1776 = vrot.lane.b32.xlu0 %v1749, 16
    %v1777 = vpop.permute.xlu0 %1776
    %v1778 = vsel %vm256, %v1777, %v1773
    %v1781 = vsel %vm256, %v1773, %v1777
    %1782 = vrot.lane.b32.xlu0 %v1729, 112
    %v1783 = vpop.permute.xlu0 %1782
    %1784 = vrot.lane.b32.xlu0 %v1730, 112
    %v1785 = vpop.permute.xlu0 %1784
    %v1786 = vsel %vm285, %v1783, %v1785
    %v1790 = vsel %vm285, %v1785, %v1783
    %1791 = vrot.lane.b32.xlu0 %v1707, 112
    %v1792 = vpop.permute.xlu0 %1791
    %1793 = vrot.lane.b32.xlu0 %v1708, 112
    %v1794 = vpop.permute.xlu0 %1793
    %v1795 = vsel %vm285, %v1792, %v1794
    %v1799 = vsel %vm285, %v1794, %v1792
    %1800 = vrot.lane.b32.xlu0 %v1749, 112
    %v1801 = vpop.permute.xlu0 %1800
    %1802 = vrot.lane.b32.xlu0 %v1750, 112
    %v1803 = vpop.permute.xlu0 %1802
    %v1804 = vsel %vm285, %v1801, %v1803
    %v1808 = vsel %vm285, %v1803, %v1801
    %v1809 = vmul.f32 %v309, %v1761
    %v1810 = vmul.f32 %v309, %v1758
    %v1811 = vmul.f32 %v312, %v1761
    %v1812 = vmul.f32 %v312, %v1758
    %v1813 = vmul.f32 %v315, %v1770
    %v1814 = vmul.f32 %v315, %v1767
    %v1815 = vadd.f32 %v1809, %v1813
    %v1816 = vadd.f32 %v1810, %v1814
    %v1817 = vmul.f32 %v320, %v1770
    %v1818 = vmul.f32 %v320, %v1767
    %v1819 = vadd.f32 %v1811, %v1817
    %v1820 = vadd.f32 %v1812, %v1818
    %v1821 = vmul.f32 %v325, %v1781
    %v1822 = vmul.f32 %v325, %v1778
    %v1823 = vadd.f32 %v1815, %v1821
    %v1824 = vadd.f32 %v1816, %v1822
    %v1825 = vmul.f32 %v330, %v1781
    %v1826 = vmul.f32 %v330, %v1778
    %v1827 = vadd.f32 %v1819, %v1825
    %v1828 = vadd.f32 %v1820, %v1826
    %v1829 = vmul.f32 %v335, %v1729
    %v1830 = vmul.f32 %v335, %v1730
    %v1831 = vadd.f32 %v1823, %v1829
    %v1832 = vadd.f32 %v1824, %v1830
    %v1833 = vmul.f32 %v340, %v1729
    %v1834 = vmul.f32 %v340, %v1730
    %v1835 = vadd.f32 %v1827, %v1833
    %v1836 = vadd.f32 %v1828, %v1834
    %v1837 = vmul.f32 %v345, %v1707
    %v1838 = vmul.f32 %v345, %v1708
    %v1839 = vadd.f32 %v1831, %v1837
    %v1840 = vadd.f32 %v1832, %v1838
    %v1841 = vmul.f32 %v350, %v1707
    %v1842 = vmul.f32 %v350, %v1708
    %v1843 = vadd.f32 %v1835, %v1841
    %v1844 = vadd.f32 %v1836, %v1842
    %v1845 = vmul.f32 %v355, %v1749
    %v1846 = vmul.f32 %v355, %v1750
    %v1847 = vadd.f32 %v1839, %v1845
    %v1848 = vadd.f32 %v1840, %v1846
    %v1849 = vmul.f32 %v360, %v1749
    %v1850 = vmul.f32 %v360, %v1750
    %v1851 = vadd.f32 %v1843, %v1849
    %v1852 = vadd.f32 %v1844, %v1850
    %v1853 = vmul.f32 %v365, %v1786
    %v1854 = vmul.f32 %v365, %v1790
    %v1855 = vadd.f32 %v1847, %v1853
    %v1856 = vadd.f32 %v1848, %v1854
    %v1857 = vmul.f32 %v370, %v1786
    %v1858 = vmul.f32 %v370, %v1790
    %v1859 = vadd.f32 %v1851, %v1857
    %v1860 = vadd.f32 %v1852, %v1858
    %v1861 = vmul.f32 %v375, %v1795
    %v1862 = vmul.f32 %v375, %v1799
    %v1863 = vadd.f32 %v1855, %v1861
    %v1864 = vadd.f32 %v1856, %v1862
    %v1865 = vmul.f32 %v380, %v1795
    %v1866 = vmul.f32 %v380, %v1799
    %v1867 = vadd.f32 %v1859, %v1865
    %v1868 = vadd.f32 %v1860, %v1866
    %v1869 = vmul.f32 %v385, %v1804
    %v1870 = vmul.f32 %v385, %v1808
    %v1871 = vadd.f32 %v1863, %v1869
    %v1872 = vadd.f32 %v1864, %v1870
    %v1873 = vmul.f32 %v390, %v1804
    %v1874 = vmul.f32 %v390, %v1808
    %v1875 = vadd.f32 %v1867, %v1873
    %v1876 = vadd.f32 %v1868, %v1874
    %v1877 = vmul.f32 %v1871, %v1875
    %v1878 = vmul.f32 %v1872, %v1876
    %v1879 = vadd.f32 %v1201, %v1877
    %v1880 = vadd.f32 %v1202, %v1878
    %v1881 = vmul.f32 %v399, %v1761
    %v1882 = vmul.f32 %v399, %v1758
    %v1883 = vmul.f32 %v402, %v1761
    %v1884 = vmul.f32 %v402, %v1758
    %v1885 = vmul.f32 %v405, %v1770
    %v1886 = vmul.f32 %v405, %v1767
    %v1887 = vadd.f32 %v1881, %v1885
    %v1888 = vadd.f32 %v1882, %v1886
    %v1889 = vmul.f32 %v410, %v1770
    %v1890 = vmul.f32 %v410, %v1767
    %v1891 = vadd.f32 %v1883, %v1889
    %v1892 = vadd.f32 %v1884, %v1890
    %v1893 = vmul.f32 %v415, %v1781
    %v1894 = vmul.f32 %v415, %v1778
    %v1895 = vadd.f32 %v1887, %v1893
    %v1896 = vadd.f32 %v1888, %v1894
    %v1897 = vmul.f32 %v420, %v1781
    %v1898 = vmul.f32 %v420, %v1778
    %v1899 = vadd.f32 %v1891, %v1897
    %v1900 = vadd.f32 %v1892, %v1898
    %v1901 = vmul.f32 %v425, %v1729
    %v1902 = vmul.f32 %v425, %v1730
    %v1903 = vadd.f32 %v1895, %v1901
    %v1904 = vadd.f32 %v1896, %v1902
    %v1905 = vmul.f32 %v430, %v1729
    %v1906 = vmul.f32 %v430, %v1730
    %v1907 = vadd.f32 %v1899, %v1905
    %v1908 = vadd.f32 %v1900, %v1906
    %v1909 = vmul.f32 %v435, %v1707
    %v1910 = vmul.f32 %v435, %v1708
    %v1911 = vadd.f32 %v1903, %v1909
    %v1912 = vadd.f32 %v1904, %v1910
    %v1913 = vmul.f32 %v440, %v1707
    %v1914 = vmul.f32 %v440, %v1708
    %v1915 = vadd.f32 %v1907, %v1913
    %v1916 = vadd.f32 %v1908, %v1914
    %v1917 = vmul.f32 %v445, %v1749
    %v1918 = vmul.f32 %v445, %v1750
    %v1919 = vadd.f32 %v1911, %v1917
    %v1920 = vadd.f32 %v1912, %v1918
    %v1921 = vmul.f32 %v450, %v1749
    %v1922 = vmul.f32 %v450, %v1750
    %v1923 = vadd.f32 %v1915, %v1921
    %v1924 = vadd.f32 %v1916, %v1922
    %v1925 = vmul.f32 %v455, %v1786
    %v1926 = vmul.f32 %v455, %v1790
    %v1927 = vadd.f32 %v1919, %v1925
    %v1928 = vadd.f32 %v1920, %v1926
    %v1929 = vmul.f32 %v460, %v1786
    %v1930 = vmul.f32 %v460, %v1790
    %v1931 = vadd.f32 %v1923, %v1929
    %v1932 = vadd.f32 %v1924, %v1930
    %v1933 = vmul.f32 %v465, %v1795
    %v1934 = vmul.f32 %v465, %v1799
    %v1935 = vadd.f32 %v1927, %v1933
    %v1936 = vadd.f32 %v1928, %v1934
    %v1937 = vmul.f32 %v470, %v1795
    %v1938 = vmul.f32 %v470, %v1799
    %v1939 = vadd.f32 %v1931, %v1937
    %v1940 = vadd.f32 %v1932, %v1938
    %v1941 = vmul.f32 %v475, %v1804
    %v1942 = vmul.f32 %v475, %v1808
    %v1943 = vadd.f32 %v1935, %v1941
    %v1944 = vadd.f32 %v1936, %v1942
    %v1945 = vmul.f32 %v480, %v1804
    %v1946 = vmul.f32 %v480, %v1808
    %v1947 = vadd.f32 %v1939, %v1945
    %v1948 = vadd.f32 %v1940, %v1946
    %v1949 = vmul.f32 %v1943, %v1947
    %v1950 = vmul.f32 %v1944, %v1948
    %v1951 = vadd.f32 %v1273, %v1949
    %v1952 = vadd.f32 %v1274, %v1950
    %v1953 = vmul.f32 %v489, %v1761
    %v1954 = vmul.f32 %v489, %v1758
    %v1955 = vmul.f32 %v492, %v1761
    %v1956 = vmul.f32 %v492, %v1758
    %v1957 = vmul.f32 %v495, %v1770
    %v1958 = vmul.f32 %v495, %v1767
    %v1959 = vadd.f32 %v1953, %v1957
    %v1960 = vadd.f32 %v1954, %v1958
    %v1961 = vmul.f32 %v500, %v1770
    %v1962 = vmul.f32 %v500, %v1767
    %v1963 = vadd.f32 %v1955, %v1961
    %v1964 = vadd.f32 %v1956, %v1962
    %v1965 = vmul.f32 %v505, %v1781
    %v1966 = vmul.f32 %v505, %v1778
    %v1967 = vadd.f32 %v1959, %v1965
    %v1968 = vadd.f32 %v1960, %v1966
    %v1969 = vmul.f32 %v510, %v1781
    %v1970 = vmul.f32 %v510, %v1778
    %v1971 = vadd.f32 %v1963, %v1969
    %v1972 = vadd.f32 %v1964, %v1970
    %v1973 = vmul.f32 %v515, %v1729
    %v1974 = vmul.f32 %v515, %v1730
    %v1975 = vadd.f32 %v1967, %v1973
    %v1976 = vadd.f32 %v1968, %v1974
    %v1977 = vmul.f32 %v520, %v1729
    %v1978 = vmul.f32 %v520, %v1730
    %v1979 = vadd.f32 %v1971, %v1977
    %v1980 = vadd.f32 %v1972, %v1978
    %v1981 = vmul.f32 %v525, %v1707
    %v1982 = vmul.f32 %v525, %v1708
    %v1983 = vadd.f32 %v1975, %v1981
    %v1984 = vadd.f32 %v1976, %v1982
    %v1985 = vmul.f32 %v530, %v1707
    %v1986 = vmul.f32 %v530, %v1708
    %v1987 = vadd.f32 %v1979, %v1985
    %v1988 = vadd.f32 %v1980, %v1986
    %v1989 = vmul.f32 %v535, %v1749
    %v1990 = vmul.f32 %v535, %v1750
    %v1991 = vadd.f32 %v1983, %v1989
    %v1992 = vadd.f32 %v1984, %v1990
    %v1993 = vmul.f32 %v540, %v1749
    %v1994 = vmul.f32 %v540, %v1750
    %v1995 = vadd.f32 %v1987, %v1993
    %v1996 = vadd.f32 %v1988, %v1994
    %v1997 = vmul.f32 %v545, %v1786
    %v1998 = vmul.f32 %v545, %v1790
    %v1999 = vadd.f32 %v1991, %v1997
    %v2000 = vadd.f32 %v1992, %v1998
    %v2001 = vmul.f32 %v550, %v1786
    %v2002 = vmul.f32 %v550, %v1790
    %v2003 = vadd.f32 %v1995, %v2001
    %v2004 = vadd.f32 %v1996, %v2002
    %v2005 = vmul.f32 %v555, %v1795
    %v2006 = vmul.f32 %v555, %v1799
    %v2007 = vadd.f32 %v1999, %v2005
    %v2008 = vadd.f32 %v2000, %v2006
    %v2009 = vmul.f32 %v560, %v1795
    %v2010 = vmul.f32 %v560, %v1799
    %v2011 = vadd.f32 %v2003, %v2009
    %v2012 = vadd.f32 %v2004, %v2010
    %v2013 = vmul.f32 %v565, %v1804
    %v2014 = vmul.f32 %v565, %v1808
    %v2015 = vadd.f32 %v2007, %v2013
    %v2016 = vadd.f32 %v2008, %v2014
    %v2017 = vmul.f32 %v570, %v1804
    %v2018 = vmul.f32 %v570, %v1808
    %v2019 = vadd.f32 %v2011, %v2017
    %v2020 = vadd.f32 %v2012, %v2018
    %v2021 = vmul.f32 %v2015, %v2019
    %v2022 = vmul.f32 %v2016, %v2020
    %v2023 = vadd.f32 %v1345, %v2021
    %v2024 = vadd.f32 %v1346, %v2022
    %v2025 = vmul.f32 %v579, %v1761
    %v2026 = vmul.f32 %v579, %v1758
    %v2027 = vmul.f32 %v582, %v1761
    %v2028 = vmul.f32 %v582, %v1758
    %v2029 = vmul.f32 %v585, %v1770
    %v2030 = vmul.f32 %v585, %v1767
    %v2031 = vadd.f32 %v2025, %v2029
    %v2032 = vadd.f32 %v2026, %v2030
    %v2033 = vmul.f32 %v590, %v1770
    %v2034 = vmul.f32 %v590, %v1767
    %v2035 = vadd.f32 %v2027, %v2033
    %v2036 = vadd.f32 %v2028, %v2034
    %v2037 = vmul.f32 %v595, %v1781
    %v2038 = vmul.f32 %v595, %v1778
    %v2039 = vadd.f32 %v2031, %v2037
    %v2040 = vadd.f32 %v2032, %v2038
    %v2041 = vmul.f32 %v600, %v1781
    %v2042 = vmul.f32 %v600, %v1778
    %v2043 = vadd.f32 %v2035, %v2041
    %v2044 = vadd.f32 %v2036, %v2042
    %v2045 = vmul.f32 %v605, %v1729
    %v2046 = vmul.f32 %v605, %v1730
    %v2047 = vadd.f32 %v2039, %v2045
    %v2048 = vadd.f32 %v2040, %v2046
    %v2049 = vmul.f32 %v610, %v1729
    %v2050 = vmul.f32 %v610, %v1730
    %v2051 = vadd.f32 %v2043, %v2049
    %v2052 = vadd.f32 %v2044, %v2050
    %v2053 = vmul.f32 %v615, %v1707
    %v2054 = vmul.f32 %v615, %v1708
    %v2055 = vadd.f32 %v2047, %v2053
    %v2056 = vadd.f32 %v2048, %v2054
    %v2057 = vmul.f32 %v620, %v1707
    %v2058 = vmul.f32 %v620, %v1708
    %v2059 = vadd.f32 %v2051, %v2057
    %v2060 = vadd.f32 %v2052, %v2058
    %v2061 = vmul.f32 %v625, %v1749
    %v2062 = vmul.f32 %v625, %v1750
    %v2063 = vadd.f32 %v2055, %v2061
    %v2064 = vadd.f32 %v2056, %v2062
    %v2065 = vmul.f32 %v630, %v1749
    %v2066 = vmul.f32 %v630, %v1750
    %v2067 = vadd.f32 %v2059, %v2065
    %v2068 = vadd.f32 %v2060, %v2066
    %v2069 = vmul.f32 %v635, %v1786
    %v2070 = vmul.f32 %v635, %v1790
    %v2071 = vadd.f32 %v2063, %v2069
    %v2072 = vadd.f32 %v2064, %v2070
    %v2073 = vmul.f32 %v640, %v1786
    %v2074 = vmul.f32 %v640, %v1790
    %v2075 = vadd.f32 %v2067, %v2073
    %v2076 = vadd.f32 %v2068, %v2074
    %v2077 = vmul.f32 %v645, %v1795
    %v2078 = vmul.f32 %v645, %v1799
    %v2079 = vadd.f32 %v2071, %v2077
    %v2080 = vadd.f32 %v2072, %v2078
    %v2081 = vmul.f32 %v650, %v1795
    %v2082 = vmul.f32 %v650, %v1799
    %v2083 = vadd.f32 %v2075, %v2081
    %v2084 = vadd.f32 %v2076, %v2082
    %v2085 = vmul.f32 %v655, %v1804
    %v2086 = vmul.f32 %v655, %v1808
    %v2087 = vadd.f32 %v2079, %v2085
    %v2088 = vadd.f32 %v2080, %v2086
    %v2089 = vmul.f32 %v660, %v1804
    %v2090 = vmul.f32 %v660, %v1808
    %v2091 = vadd.f32 %v2083, %v2089
    %v2092 = vadd.f32 %v2084, %v2090
    %v2093 = vmul.f32 %v2087, %v2091
    %v2094 = vmul.f32 %v2088, %v2092
    %v2095 = vadd.f32 %v1417, %v2093
    %v2096 = vadd.f32 %v1418, %v2094
    %v2097 = vmul.f32 %v669, %v1761
    %v2098 = vmul.f32 %v669, %v1758
    %v2099 = vmul.f32 %v672, %v1761
    %v2100 = vmul.f32 %v672, %v1758
    %v2101 = vmul.f32 %v675, %v1770
    %v2102 = vmul.f32 %v675, %v1767
    %v2103 = vadd.f32 %v2097, %v2101
    %v2104 = vadd.f32 %v2098, %v2102
    %v2105 = vmul.f32 %v680, %v1770
    %v2106 = vmul.f32 %v680, %v1767
    %v2107 = vadd.f32 %v2099, %v2105
    %v2108 = vadd.f32 %v2100, %v2106
    %v2109 = vmul.f32 %v685, %v1781
    %v2110 = vmul.f32 %v685, %v1778
    %v2111 = vadd.f32 %v2103, %v2109
    %v2112 = vadd.f32 %v2104, %v2110
    %v2113 = vmul.f32 %v690, %v1781
    %v2114 = vmul.f32 %v690, %v1778
    %v2115 = vadd.f32 %v2107, %v2113
    %v2116 = vadd.f32 %v2108, %v2114
    %v2117 = vmul.f32 %v695, %v1729
    %v2118 = vmul.f32 %v695, %v1730
    %v2119 = vadd.f32 %v2111, %v2117
    %v2120 = vadd.f32 %v2112, %v2118
    %v2121 = vmul.f32 %v700, %v1729
    %v2122 = vmul.f32 %v700, %v1730
    %v2123 = vadd.f32 %v2115, %v2121
    %v2124 = vadd.f32 %v2116, %v2122
    %v2125 = vmul.f32 %v705, %v1707
    %v2126 = vmul.f32 %v705, %v1708
    %v2127 = vadd.f32 %v2119, %v2125
    %v2128 = vadd.f32 %v2120, %v2126
    %v2129 = vmul.f32 %v710, %v1707
    %v2130 = vmul.f32 %v710, %v1708
    %v2131 = vadd.f32 %v2123, %v2129
    %v2132 = vadd.f32 %v2124, %v2130
    %v2133 = vmul.f32 %v715, %v1749
    %v2134 = vmul.f32 %v715, %v1750
    %v2135 = vadd.f32 %v2127, %v2133
    %v2136 = vadd.f32 %v2128, %v2134
    %v2137 = vmul.f32 %v720, %v1749
    %v2138 = vmul.f32 %v720, %v1750
    %v2139 = vadd.f32 %v2131, %v2137
    %v2140 = vadd.f32 %v2132, %v2138
    %v2141 = vmul.f32 %v725, %v1786
    %v2142 = vmul.f32 %v725, %v1790
    %v2143 = vadd.f32 %v2135, %v2141
    %v2144 = vadd.f32 %v2136, %v2142
    %v2145 = vmul.f32 %v730, %v1786
    %v2146 = vmul.f32 %v730, %v1790
    %v2147 = vadd.f32 %v2139, %v2145
    %v2148 = vadd.f32 %v2140, %v2146
    %v2149 = vmul.f32 %v735, %v1795
    %v2150 = vmul.f32 %v735, %v1799
    %v2151 = vadd.f32 %v2143, %v2149
    %v2152 = vadd.f32 %v2144, %v2150
    %v2153 = vmul.f32 %v740, %v1795
    %v2154 = vmul.f32 %v740, %v1799
    %v2155 = vadd.f32 %v2147, %v2153
    %v2156 = vadd.f32 %v2148, %v2154
    %v2157 = vmul.f32 %v745, %v1804
    %v2158 = vmul.f32 %v745, %v1808
    %v2159 = vadd.f32 %v2151, %v2157
    %v2160 = vadd.f32 %v2152, %v2158
    %v2161 = vmul.f32 %v750, %v1804
    %v2162 = vmul.f32 %v750, %v1808
    %v2163 = vadd.f32 %v2155, %v2161
    %v2164 = vadd.f32 %v2156, %v2162
    %v2165 = vmul.f32 %v2159, %v2163
    %v2166 = vmul.f32 %v2160, %v2164
    %v2167 = vadd.f32 %v1489, %v2165
    %v2168 = vadd.f32 %v1490, %v2166
    %v2169 = vmul.f32 %v759, %v1761
    %v2170 = vmul.f32 %v759, %v1758
    %v2171 = vmul.f32 %v762, %v1761
    %v2172 = vmul.f32 %v762, %v1758
    %v2173 = vmul.f32 %v765, %v1770
    %v2174 = vmul.f32 %v765, %v1767
    %v2175 = vadd.f32 %v2169, %v2173
    %v2176 = vadd.f32 %v2170, %v2174
    %v2177 = vmul.f32 %v770, %v1770
    %v2178 = vmul.f32 %v770, %v1767
    %v2179 = vadd.f32 %v2171, %v2177
    %v2180 = vadd.f32 %v2172, %v2178
    %v2181 = vmul.f32 %v775, %v1781
    %v2182 = vmul.f32 %v775, %v1778
    %v2183 = vadd.f32 %v2175, %v2181
    %v2184 = vadd.f32 %v2176, %v2182
    %v2185 = vmul.f32 %v780, %v1781
    %v2186 = vmul.f32 %v780, %v1778
    %v2187 = vadd.f32 %v2179, %v2185
    %v2188 = vadd.f32 %v2180, %v2186
    %v2189 = vmul.f32 %v785, %v1729
    %v2190 = vmul.f32 %v785, %v1730
    %v2191 = vadd.f32 %v2183, %v2189
    %v2192 = vadd.f32 %v2184, %v2190
    %v2193 = vmul.f32 %v790, %v1729
    %v2194 = vmul.f32 %v790, %v1730
    %v2195 = vadd.f32 %v2187, %v2193
    %v2196 = vadd.f32 %v2188, %v2194
    %v2197 = vmul.f32 %v795, %v1707
    %v2198 = vmul.f32 %v795, %v1708
    %v2199 = vadd.f32 %v2191, %v2197
    %v2200 = vadd.f32 %v2192, %v2198
    %v2201 = vmul.f32 %v800, %v1707
    %v2202 = vmul.f32 %v800, %v1708
    %v2203 = vadd.f32 %v2195, %v2201
    %v2204 = vadd.f32 %v2196, %v2202
    %v2205 = vmul.f32 %v805, %v1749
    %v2206 = vmul.f32 %v805, %v1750
    %v2207 = vadd.f32 %v2199, %v2205
    %v2208 = vadd.f32 %v2200, %v2206
    %v2209 = vmul.f32 %v810, %v1749
    %v2210 = vmul.f32 %v810, %v1750
    %v2211 = vadd.f32 %v2203, %v2209
    %v2212 = vadd.f32 %v2204, %v2210
    %v2213 = vmul.f32 %v815, %v1786
    %v2214 = vmul.f32 %v815, %v1790
    %v2215 = vadd.f32 %v2207, %v2213
    %v2216 = vadd.f32 %v2208, %v2214
    %v2217 = vmul.f32 %v820, %v1786
    %v2218 = vmul.f32 %v820, %v1790
    %v2219 = vadd.f32 %v2211, %v2217
    %v2220 = vadd.f32 %v2212, %v2218
    %v2221 = vmul.f32 %v825, %v1795
    %v2222 = vmul.f32 %v825, %v1799
    %v2223 = vadd.f32 %v2215, %v2221
    %v2224 = vadd.f32 %v2216, %v2222
    %v2225 = vmul.f32 %v830, %v1795
    %v2226 = vmul.f32 %v830, %v1799
    %v2227 = vadd.f32 %v2219, %v2225
    %v2228 = vadd.f32 %v2220, %v2226
    %v2229 = vmul.f32 %v835, %v1804
    %v2230 = vmul.f32 %v835, %v1808
    %v2231 = vadd.f32 %v2223, %v2229
    %v2232 = vadd.f32 %v2224, %v2230
    %v2233 = vmul.f32 %v840, %v1804
    %v2234 = vmul.f32 %v840, %v1808
    %v2235 = vadd.f32 %v2227, %v2233
    %v2236 = vadd.f32 %v2228, %v2234
    %v2237 = vmul.f32 %v2231, %v2235
    %v2238 = vmul.f32 %v2232, %v2236
    %v2239 = vadd.f32 %v1561, %v2237
    %v2240 = vadd.f32 %v1562, %v2238
    %v2241 = vmul.f32 %v849, %v1761
    %v2242 = vmul.f32 %v849, %v1758
    %v2243 = vmul.f32 %v852, %v1761
    %v2244 = vmul.f32 %v852, %v1758
    %v2245 = vmul.f32 %v855, %v1770
    %v2246 = vmul.f32 %v855, %v1767
    %v2247 = vadd.f32 %v2241, %v2245
    %v2248 = vadd.f32 %v2242, %v2246
    %v2249 = vmul.f32 %v860, %v1770
    %v2250 = vmul.f32 %v860, %v1767
    %v2251 = vadd.f32 %v2243, %v2249
    %v2252 = vadd.f32 %v2244, %v2250
    %v2253 = vmul.f32 %v865, %v1781
    %v2254 = vmul.f32 %v865, %v1778
    %v2255 = vadd.f32 %v2247, %v2253
    %v2256 = vadd.f32 %v2248, %v2254
    %v2257 = vmul.f32 %v870, %v1781
    %v2258 = vmul.f32 %v870, %v1778
    %v2259 = vadd.f32 %v2251, %v2257
    %v2260 = vadd.f32 %v2252, %v2258
    %v2261 = vmul.f32 %v875, %v1729
    %v2262 = vmul.f32 %v875, %v1730
    %v2263 = vadd.f32 %v2255, %v2261
    %v2264 = vadd.f32 %v2256, %v2262
    %v2265 = vmul.f32 %v880, %v1729
    %v2266 = vmul.f32 %v880, %v1730
    %v2267 = vadd.f32 %v2259, %v2265
    %v2268 = vadd.f32 %v2260, %v2266
    %v2269 = vmul.f32 %v885, %v1707
    %v2270 = vmul.f32 %v885, %v1708
    %v2271 = vadd.f32 %v2263, %v2269
    %v2272 = vadd.f32 %v2264, %v2270
    %v2273 = vmul.f32 %v890, %v1707
    %v2274 = vmul.f32 %v890, %v1708
    %v2275 = vadd.f32 %v2267, %v2273
    %v2276 = vadd.f32 %v2268, %v2274
    %v2277 = vmul.f32 %v895, %v1749
    %v2278 = vmul.f32 %v895, %v1750
    %v2279 = vadd.f32 %v2271, %v2277
    %v2280 = vadd.f32 %v2272, %v2278
    %v2281 = vmul.f32 %v900, %v1749
    %v2282 = vmul.f32 %v900, %v1750
    %v2283 = vadd.f32 %v2275, %v2281
    %v2284 = vadd.f32 %v2276, %v2282
    %v2285 = vmul.f32 %v905, %v1786
    %v2286 = vmul.f32 %v905, %v1790
    %v2287 = vadd.f32 %v2279, %v2285
    %v2288 = vadd.f32 %v2280, %v2286
    %v2289 = vmul.f32 %v910, %v1786
    %v2290 = vmul.f32 %v910, %v1790
    %v2291 = vadd.f32 %v2283, %v2289
    %v2292 = vadd.f32 %v2284, %v2290
    %v2293 = vmul.f32 %v915, %v1795
    %v2294 = vmul.f32 %v915, %v1799
    %v2295 = vadd.f32 %v2287, %v2293
    %v2296 = vadd.f32 %v2288, %v2294
    %v2297 = vmul.f32 %v920, %v1795
    %v2298 = vmul.f32 %v920, %v1799
    %v2299 = vadd.f32 %v2291, %v2297
    %v2300 = vadd.f32 %v2292, %v2298
    %v2301 = vmul.f32 %v925, %v1804
    %v2302 = vmul.f32 %v925, %v1808
    %v2303 = vadd.f32 %v2295, %v2301
    %v2304 = vadd.f32 %v2296, %v2302
    %v2305 = vmul.f32 %v930, %v1804
    %v2306 = vmul.f32 %v930, %v1808
    %v2307 = vadd.f32 %v2299, %v2305
    %v2308 = vadd.f32 %v2300, %v2306
    %v2309 = vmul.f32 %v2303, %v2307
    %v2310 = vmul.f32 %v2304, %v2308
    %v2311 = vadd.f32 %v1633, %v2309
    %v2312 = vadd.f32 %v1634, %v2310
    %v2313 = vmul.f32 %v939, %v1761
    %v2314 = vmul.f32 %v939, %v1758
    %v2315 = vmul.f32 %v942, %v1761
    %v2316 = vmul.f32 %v942, %v1758
    %v2317 = vmul.f32 %v945, %v1770
    %v2318 = vmul.f32 %v945, %v1767
    %v2319 = vadd.f32 %v2313, %v2317
    %v2320 = vadd.f32 %v2314, %v2318
    %v2321 = vmul.f32 %v950, %v1770
    %v2322 = vmul.f32 %v950, %v1767
    %v2323 = vadd.f32 %v2315, %v2321
    %v2324 = vadd.f32 %v2316, %v2322
    %v2325 = vmul.f32 %v955, %v1781
    %v2326 = vmul.f32 %v955, %v1778
    %v2327 = vadd.f32 %v2319, %v2325
    %v2328 = vadd.f32 %v2320, %v2326
    %v2329 = vmul.f32 %v960, %v1781
    %v2330 = vmul.f32 %v960, %v1778
    %v2331 = vadd.f32 %v2323, %v2329
    %v2332 = vadd.f32 %v2324, %v2330
    %v2333 = vmul.f32 %v965, %v1729
    %v2334 = vmul.f32 %v965, %v1730
    %v2335 = vadd.f32 %v2327, %v2333
    %v2336 = vadd.f32 %v2328, %v2334
    %v2337 = vmul.f32 %v970, %v1729
    %v2338 = vmul.f32 %v970, %v1730
    %v2339 = vadd.f32 %v2331, %v2337
    %v2340 = vadd.f32 %v2332, %v2338
    %v2341 = vmul.f32 %v975, %v1707
    %v2342 = vmul.f32 %v975, %v1708
    %v2343 = vadd.f32 %v2335, %v2341
    %v2344 = vadd.f32 %v2336, %v2342
    %v2345 = vmul.f32 %v980, %v1707
    %v2346 = vmul.f32 %v980, %v1708
    %v2347 = vadd.f32 %v2339, %v2345
    %v2348 = vadd.f32 %v2340, %v2346
    %v2349 = vmul.f32 %v985, %v1749
    %v2350 = vmul.f32 %v985, %v1750
    %v2351 = vadd.f32 %v2343, %v2349
    %v2352 = vadd.f32 %v2344, %v2350
    %v2353 = vmul.f32 %v990, %v1749
    %v2354 = vmul.f32 %v990, %v1750
    %v2355 = vadd.f32 %v2347, %v2353
    %v2356 = vadd.f32 %v2348, %v2354
    %v2357 = vmul.f32 %v995, %v1786
    %v2358 = vmul.f32 %v995, %v1790
    %v2359 = vadd.f32 %v2351, %v2357
    %v2360 = vadd.f32 %v2352, %v2358
    %v2361 = vmul.f32 %v1000, %v1786
    %v2362 = vmul.f32 %v1000, %v1790
    %v2363 = vadd.f32 %v2355, %v2361
    %v2364 = vadd.f32 %v2356, %v2362
    %v2365 = vmul.f32 %v1005, %v1795
    %v2366 = vmul.f32 %v1005, %v1799
    %v2367 = vadd.f32 %v2359, %v2365
    %v2368 = vadd.f32 %v2360, %v2366
    %v2369 = vmul.f32 %v1010, %v1795
    %v2370 = vmul.f32 %v1010, %v1799
    %v2371 = vadd.f32 %v2363, %v2369
    %v2372 = vadd.f32 %v2364, %v2370
    %v2373 = vmul.f32 %v1015, %v1804
    %v2374 = vmul.f32 %v1015, %v1808
    %v2375 = vadd.f32 %v2367, %v2373
    %v2376 = vadd.f32 %v2368, %v2374
    %v2377 = vmul.f32 %v1020, %v1804
    %v2378 = vmul.f32 %v1020, %v1808
    %v2379 = vadd.f32 %v2371, %v2377
    %v2380 = vadd.f32 %v2372, %v2378
    %v2381 = vmul.f32 %v2375, %v2379
    %v2382 = vmul.f32 %v2376, %v2380
    %v2383 = vadd.f32 %v1705, %v2381
    %v2384 = vadd.f32 %v1706, %v2382
    %2385 = vst [vmem:[#allocation7] sm:$0xff] %v1879
    %2386 = vst [vmem:[#allocation7 + $0x8] sm:$0xff] %v1880
    %2387 = vst [vmem:[#allocation7 + $0x10] sm:$0xff] %v1951
    %2388 = vst [vmem:[#allocation7 + $0x18] sm:$0xff] %v1952
    %2389 = vst [vmem:[#allocation7 + $0x20] sm:$0xff] %v2023
    %2390 = vst [vmem:[#allocation7 + $0x28] sm:$0xff] %v2024
    %2391 = vst [vmem:[#allocation7 + $0x30] sm:$0xff] %v2095
    %2392 = vst [vmem:[#allocation7 + $0x38] sm:$0xff] %v2096
    %2393 = vst [vmem:[#allocation7 + $0x40] sm:$0xff] %v2167
    %2394 = vst [vmem:[#allocation7 + $0x48] sm:$0xff] %v2168
    %2395 = vst [vmem:[#allocation7 + $0x50] sm:$0xff] %v2239
    %2396 = vst [vmem:[#allocation7 + $0x58] sm:$0xff] %v2240
    %2397 = vst [vmem:[#allocation7 + $0x60] sm:$0xff] %v2311
    %2398 = vst [vmem:[#allocation7 + $0x68] sm:$0xff] %v2312
    %2399 = vst [vmem:[#allocation7 + $0x70] sm:$0xff] %v2383
    %2400 = vst [vmem:[#allocation7 + $0x78] sm:$0xff] %v2384
    // Predicated region
    $region10: #{tpu_custom_call.1} parent=1 // pred_check
      _
    $region11: #{tpu_custom_call.1} parent=1 // pred_check_branch
      %2402 = sbr.rel (0) target = $region13
    $region12: #{tpu_custom_call.1} parent=1 // pred_region
      %s2404 = ssub.s32 2048, 2048
      %2405 = vsyncadd [#allocation6], %s2404
      %s2407 = sshll.u32 [#allocation7], 4
      %s2408 = int_to_ptr.vmem [resolvable:$true] %s2407
      %2410 = dma.vmem_to_hbm [thread:$0]  %s2408, 2048, %s2, [#allocation6]
    $region13: #{tpu_custom_call.1} parent=1 // pred_fallthru
      _
    // Predicated region
    $region14: #{tpu_custom_call.1} parent=1 // pred_check
      _
    $region15: #{tpu_custom_call.1} parent=1 // pred_check_branch
      %2412 = sbr.rel (0) target = $region17
    $region16: #{tpu_custom_call.1} parent=1 // pred_region
      %2413 = dma.done [#allocation6], 2048
    $region17: #{tpu_custom_call.1} parent=1 // pred_fallthru
      _
    %2414 = vsyncpa [#allocation5], 1
    %2415 = vsyncpa [#allocation6], 1

</llo_original>
